<compile_context>
chip_gen: v5e
topology: v5e:2x2
jax: 0.10.0
libtpu: 0.0.40
codegen_flags: <defaults>
</compile_context>

<pallas_src>
import jax
import jax.numpy as jnp
from jax.experimental import pallas as pl
from jax.experimental.pallas import tpu as pltpu

OUT_CHANNELS = 1024
KERNEL_HEIGHTS = (1, 2, 3, 4)


def cnn_question_kernel(x_ref, w1_ref, w2_ref, w3_ref, w4_ref, b_ref, out_ref):
    # x_ref  : (block_b, S, in_dim)           VMEM
    # wk_ref : (k*in_dim, OUT_CHANNELS)       VMEM (resident: constant block index)
    # b_ref  : (4, OUT_CHANNELS)              VMEM
    # out_ref: (block_b, 4, OUT_CHANNELS)     VMEM
    block_b, seq_len, in_dim = x_ref.shape
    x = x_ref[...]
    w_refs = (w1_ref, w2_ref, w3_ref, w4_ref)

    for idx, k in enumerate(KERNEL_HEIGHTS):
        n_pos = seq_len - k + 1
        w_ref = w_refs[idx]
        bias = b_ref[idx, :]  # (OUT_CHANNELS,)
        for b in range(block_b):
            # Conv as sum over window offsets j of 2-D MXU matmuls (all slices static).
            acc = jnp.dot(
                x[b, 0:n_pos, :],
                w_ref[0:in_dim, :],
                preferred_element_type=jnp.float32,
            )
            for j in range(1, k):
                acc = acc + jnp.dot(
                    x[b, j:j + n_pos, :],
                    w_ref[j * in_dim:(j + 1) * in_dim, :],
                    preferred_element_type=jnp.float32,
                )
            act = jnp.tanh(acc + bias)                       # (n_pos, OUT_CHANNELS)
            pooled = jnp.max(act, axis=0, keepdims=True)     # (1, OUT_CHANNELS)
            out_ref[b, idx:idx + 1, :] = pooled.astype(out_ref.dtype)


def cnn_question_embedding_forward(x, weights, biases, *, block_b=None):
    """Pallas implementation of cnnQuestionEmbedding.forward.

    x:       (B, S, in_dim) float32 word-embedded question, S >= 4.
    weights: tuple of 4 arrays; weights[i] has shape (KERNEL_HEIGHTS[i]*in_dim, 1024)
             == PyTorch conv{i+1}.weight (1024, 1, k, in_dim) reshaped to (1024, k*in_dim)
             and transposed.
    biases:  tuple of 4 arrays of shape (1024,).
    returns  (B, 4096) float32, channel order [conv1 | conv2 | conv3 | conv4].
    """
    B, S, in_dim = x.shape
    assert S >= max(KERNEL_HEIGHTS), "sequence must be at least 4 tokens"

    if block_b is None:
        block_b = 1
        for cand in (8, 4, 2, 1):
            if B % cand == 0:
                block_b = cand
                break
    assert B % block_b == 0, "block_b must divide batch"
    grid = (B // block_b,)

    b_all = jnp.stack([b.astype(jnp.float32) for b in biases], axis=0)  # (4, 1024)

    full_2d = lambda i: (0, 0)

    out = pl.pallas_call(
        cnn_question_kernel,
        out_shape=jax.ShapeDtypeStruct((B, len(KERNEL_HEIGHTS), OUT_CHANNELS),
                                       jnp.float32),
        grid_spec=pltpu.PrefetchScalarGridSpec(
            num_scalar_prefetch=0,
            grid=grid,
            in_specs=[
                pl.BlockSpec((block_b, S, in_dim), lambda i: (i, 0, 0)),
                pl.BlockSpec(weights[0].shape, full_2d),
                pl.BlockSpec(weights[1].shape, full_2d),
                pl.BlockSpec(weights[2].shape, full_2d),
                pl.BlockSpec(weights[3].shape, full_2d),
                pl.BlockSpec(b_all.shape, full_2d),
            ],
            out_specs=pl.BlockSpec((block_b, len(KERNEL_HEIGHTS), OUT_CHANNELS),
                                   lambda i: (i, 0, 0)),
        ),
        compiler_params=pltpu.CompilerParams(
            dimension_semantics=("parallel",)),
    )(x, weights[0], weights[1], weights[2], weights[3], b_all)

    # Matches torch.cat((pool1, pool2, pool3, pool4), dim=1).squeeze(2).
    return out.reshape(B, len(KERNEL_HEIGHTS) * OUT_CHANNELS)


def init_params(key, in_dim, dtype=jnp.float32):
    """Deterministic stand-in for the 4 Conv2d(1, 1024, (k, in_dim)) layers."""
    keys = jax.random.split(key, 2 * len(KERNEL_HEIGHTS))
    weights, biases = [], []
    for i, k in enumerate(KERNEL_HEIGHTS):
        fan_in = k * in_dim
        bound = 1.0 / (fan_in ** 0.5)
        w = jax.random.uniform(keys[2 * i], (fan_in, OUT_CHANNELS), dtype,
                               minval=-bound, maxval=bound)
        b = jax.random.uniform(keys[2 * i + 1], (OUT_CHANNELS,), dtype,
                               minval=-bound, maxval=bound)
        weights.append(w)
        biases.append(b)
    return tuple(weights), tuple(biases)


if __name__ == "__main__":
    key = jax.random.PRNGKey(0)
    k_x, k_p = jax.random.split(key)

    B, S, in_dim = 2, 8, 32  # small demo shapes; out_channels stays 1024 per the module
    x = jax.random.normal(k_x, (B, S, in_dim), dtype=jnp.float32)
    weights, biases = init_params(k_p, in_dim)

    out = cnn_question_embedding_forward(x, weights, biases)
    out = jax.block_until_ready(out)
    assert out.shape == (B, len(KERNEL_HEIGHTS) * OUT_CHANNELS)

    # Pure-JAX reference: sliding-window matmul == Conv2d(1, C, (k, in_dim)) -> tanh -> max.
    ref_parts = []
    for idx, k in enumerate(KERNEL_HEIGHTS):
        n_pos = S - k + 1
        win = jnp.concatenate([x[:, j:j + n_pos, :] for j in range(k)], axis=-1)
        scores = jnp.einsum("btk,kc->btc", win, weights[idx],
                            precision=jax.lax.Precision.HIGHEST) + biases[idx]
        ref_parts.append(jnp.max(jnp.tanh(scores), axis=1))
    ref = jnp.concatenate(ref_parts, axis=-1)

    max_err = float(jnp.max(jnp.abs(out - ref)))
    assert jnp.allclose(out, ref, atol=1e-3, rtol=1e-3), f"max_err={max_err}"

    print("KERNEL_OK")
</pallas_src>

<mosaic_0001>
module attributes {stable_mosaic.version = 11 : i64} {
  func.func @cnn_question_kernel(%arg0: i32, %arg1: memref<2x8x32xf32, #tpu.memory_space<vmem>>, %arg2: memref<32x1024xf32, #tpu.memory_space<vmem>>, %arg3: memref<64x1024xf32, #tpu.memory_space<vmem>>, %arg4: memref<96x1024xf32, #tpu.memory_space<vmem>>, %arg5: memref<128x1024xf32, #tpu.memory_space<vmem>>, %arg6: memref<4x1024xf32, #tpu.memory_space<vmem>>, %arg7: memref<2x4x1024xf32, #tpu.memory_space<vmem>>) attributes {dimension_semantics = [#tpu.dimension_semantics<parallel>], iteration_bounds = array<i64: 1>, scalar_prefetch = 0 : i64, scratch_operands = 0 : i64, tpu.core_type = #tpu.core_type<tc>, window_params = [{transform_indices = @transform_0, window_bounds = array<i64: 2, 8, 32>}, {pipeline_mode = #tpu.pipeline_mode<synchronous>, transform_indices = @transform_1, window_bounds = array<i64: 32, 1024>}, {pipeline_mode = #tpu.pipeline_mode<synchronous>, transform_indices = @transform_2, window_bounds = array<i64: 64, 1024>}, {pipeline_mode = #tpu.pipeline_mode<synchronous>, transform_indices = @transform_3, window_bounds = array<i64: 96, 1024>}, {pipeline_mode = #tpu.pipeline_mode<synchronous>, transform_indices = @transform_4, window_bounds = array<i64: 128, 1024>}, {pipeline_mode = #tpu.pipeline_mode<synchronous>, transform_indices = @transform_5, window_bounds = array<i64: 4, 1024>}, {transform_indices = @transform_6, window_bounds = array<i64: 2, 4, 1024>}]} {
    %c0 = arith.constant 0 : index
    %c0_0 = arith.constant 0 : index
    %c0_1 = arith.constant 0 : index
    %0 = vector.load %arg1[%c0, %c0_0, %c0_1] : memref<2x8x32xf32, #tpu.memory_space<vmem>>, vector<2x8x32xf32>
    %c0_2 = arith.constant 0 : index
    %c0_3 = arith.constant 0 : index
    %1 = vector.load %arg6[%c0_2, %c0_3] : memref<4x1024xf32, #tpu.memory_space<vmem>>, vector<1x1024xf32>
    %2 = vector.shape_cast %1 : vector<1x1024xf32> to vector<1024xf32>
    %3 = vector.extract_strided_slice %0 {offsets = [0, 0, 0], sizes = [1, 8, 32], strides = [1, 1, 1]} : vector<2x8x32xf32> to vector<1x8x32xf32>
    %4 = vector.shape_cast %3 : vector<1x8x32xf32> to vector<8x32xf32>
    %c0_4 = arith.constant 0 : index
    %c0_5 = arith.constant 0 : index
    %5 = vector.load %arg2[%c0_4, %c0_5] : memref<32x1024xf32, #tpu.memory_space<vmem>>, vector<32x1024xf32>
    %cst = arith.constant dense<0.000000e+00> : vector<8x1024xf32>
    %6 = tpu.matmul %4, %5, %cst {dimension_numbers = #tpu.dot_dimension_numbers<[1], [0], [0], [1], [0, 0, 1, 1], [], []>} : vector<8x32xf32>, vector<32x1024xf32>, vector<8x1024xf32> -> vector<8x1024xf32>
    %7 = vector.shape_cast %2 : vector<1024xf32> to vector<1x1024xf32>
    %8 = vector.broadcast %7 : vector<1x1024xf32> to vector<8x1024xf32>
    %9 = arith.addf %6, %8 : vector<8x1024xf32>
    %10 = math.tanh %9 : vector<8x1024xf32>
    %cst_6 = arith.constant dense<0xFF800000> : vector<1024xf32>
    %11 = vector.multi_reduction <maximumf>, %10, %cst_6 [0] : vector<8x1024xf32> to vector<1024xf32>
    %12 = vector.shape_cast %11 : vector<1024xf32> to vector<1x1024xf32>
    %c0_7 = arith.constant 0 : index
    %c0_8 = arith.constant 0 : index
    %c0_9 = arith.constant 0 : index
    %13 = vector.load %arg7[%c0_7, %c0_8, %c0_9] : memref<2x4x1024xf32, #tpu.memory_space<vmem>>, vector<1x1x1024xf32>
    %14 = vector.shape_cast %13 : vector<1x1x1024xf32> to vector<1x1024xf32>
    %15 = vector.shape_cast %12 : vector<1x1024xf32> to vector<1x1x1024xf32>
    tpu.vector_store %arg7[%c0_7, %c0_8, %c0_9], %15 {strides = array<i32>} : memref<2x4x1024xf32, #tpu.memory_space<vmem>>, vector<1x1x1024xf32>,
    %16 = vector.extract_strided_slice %0 {offsets = [1, 0, 0], sizes = [1, 8, 32], strides = [1, 1, 1]} : vector<2x8x32xf32> to vector<1x8x32xf32>
    %17 = vector.shape_cast %16 : vector<1x8x32xf32> to vector<8x32xf32>
    %c0_10 = arith.constant 0 : index
    %c0_11 = arith.constant 0 : index
    %18 = vector.load %arg2[%c0_10, %c0_11] : memref<32x1024xf32, #tpu.memory_space<vmem>>, vector<32x1024xf32>
    %cst_12 = arith.constant dense<0.000000e+00> : vector<8x1024xf32>
    %19 = tpu.matmul %17, %18, %cst_12 {dimension_numbers = #tpu.dot_dimension_numbers<[1], [0], [0], [1], [0, 0, 1, 1], [], []>} : vector<8x32xf32>, vector<32x1024xf32>, vector<8x1024xf32> -> vector<8x1024xf32>
    %20 = vector.shape_cast %2 : vector<1024xf32> to vector<1x1024xf32>
    %21 = vector.broadcast %20 : vector<1x1024xf32> to vector<8x1024xf32>
    %22 = arith.addf %19, %21 : vector<8x1024xf32>
    %23 = math.tanh %22 : vector<8x1024xf32>
    %cst_13 = arith.constant dense<0xFF800000> : vector<1024xf32>
    %24 = vector.multi_reduction <maximumf>, %23, %cst_13 [0] : vector<8x1024xf32> to vector<1024xf32>
    %25 = vector.shape_cast %24 : vector<1024xf32> to vector<1x1024xf32>
    %c1 = arith.constant 1 : index
    %c0_14 = arith.constant 0 : index
    %c0_15 = arith.constant 0 : index
    %26 = vector.load %arg7[%c1, %c0_14, %c0_15] : memref<2x4x1024xf32, #tpu.memory_space<vmem>>, vector<1x1x1024xf32>
    %27 = vector.shape_cast %26 : vector<1x1x1024xf32> to vector<1x1024xf32>
    %28 = vector.shape_cast %25 : vector<1x1024xf32> to vector<1x1x1024xf32>
    tpu.vector_store %arg7[%c1, %c0_14, %c0_15], %28 {strides = array<i32>} : memref<2x4x1024xf32, #tpu.memory_space<vmem>>, vector<1x1x1024xf32>,
    %c1_16 = arith.constant 1 : index
    %c0_17 = arith.constant 0 : index
    %29 = vector.load %arg6[%c1_16, %c0_17] : memref<4x1024xf32, #tpu.memory_space<vmem>>, vector<1x1024xf32>
    %30 = vector.shape_cast %29 : vector<1x1024xf32> to vector<1024xf32>
    %31 = vector.extract_strided_slice %0 {offsets = [0, 0, 0], sizes = [1, 7, 32], strides = [1, 1, 1]} : vector<2x8x32xf32> to vector<1x7x32xf32>
    %32 = vector.shape_cast %31 : vector<1x7x32xf32> to vector<7x32xf32>
    %c0_18 = arith.constant 0 : index
    %c0_19 = arith.constant 0 : index
    %33 = vector.load %arg3[%c0_18, %c0_19] : memref<64x1024xf32, #tpu.memory_space<vmem>>, vector<32x1024xf32>
    %cst_20 = arith.constant dense<0.000000e+00> : vector<7x1024xf32>
    %34 = tpu.matmul %32, %33, %cst_20 {dimension_numbers = #tpu.dot_dimension_numbers<[1], [0], [0], [1], [0, 0, 1, 1], [], []>} : vector<7x32xf32>, vector<32x1024xf32>, vector<7x1024xf32> -> vector<7x1024xf32>
    %35 = vector.extract_strided_slice %0 {offsets = [0, 1, 0], sizes = [1, 7, 32], strides = [1, 1, 1]} : vector<2x8x32xf32> to vector<1x7x32xf32>
    %36 = vector.shape_cast %35 : vector<1x7x32xf32> to vector<7x32xf32>
    %c32 = arith.constant 32 : index
    %c0_21 = arith.constant 0 : index
    %37 = vector.load %arg3[%c32, %c0_21] : memref<64x1024xf32, #tpu.memory_space<vmem>>, vector<32x1024xf32>
    %cst_22 = arith.constant dense<0.000000e+00> : vector<7x1024xf32>
    %38 = tpu.matmul %36, %37, %cst_22 {dimension_numbers = #tpu.dot_dimension_numbers<[1], [0], [0], [1], [0, 0, 1, 1], [], []>} : vector<7x32xf32>, vector<32x1024xf32>, vector<7x1024xf32> -> vector<7x1024xf32>
    %39 = arith.addf %34, %38 : vector<7x1024xf32>
    %40 = vector.shape_cast %30 : vector<1024xf32> to vector<1x1024xf32>
    %41 = vector.broadcast %40 : vector<1x1024xf32> to vector<7x1024xf32>
    %42 = arith.addf %39, %41 : vector<7x1024xf32>
    %43 = math.tanh %42 : vector<7x1024xf32>
    %cst_23 = arith.constant dense<0xFF800000> : vector<1024xf32>
    %44 = vector.multi_reduction <maximumf>, %43, %cst_23 [0] : vector<7x1024xf32> to vector<1024xf32>
    %45 = vector.shape_cast %44 : vector<1024xf32> to vector<1x1024xf32>
    %c0_24 = arith.constant 0 : index
    %c1_25 = arith.constant 1 : index
    %c0_26 = arith.constant 0 : index
    %46 = vector.load %arg7[%c0_24, %c1_25, %c0_26] : memref<2x4x1024xf32, #tpu.memory_space<vmem>>, vector<1x1x1024xf32>
    %47 = vector.shape_cast %46 : vector<1x1x1024xf32> to vector<1x1024xf32>
    %48 = vector.shape_cast %45 : vector<1x1024xf32> to vector<1x1x1024xf32>
    tpu.vector_store %arg7[%c0_24, %c1_25, %c0_26], %48 {strides = array<i32>} : memref<2x4x1024xf32, #tpu.memory_space<vmem>>, vector<1x1x1024xf32>,
    %49 = vector.extract_strided_slice %0 {offsets = [1, 0, 0], sizes = [1, 7, 32], strides = [1, 1, 1]} : vector<2x8x32xf32> to vector<1x7x32xf32>
    %50 = vector.shape_cast %49 : vector<1x7x32xf32> to vector<7x32xf32>
    %c0_27 = arith.constant 0 : index
    %c0_28 = arith.constant 0 : index
    %51 = vector.load %arg3[%c0_27, %c0_28] : memref<64x1024xf32, #tpu.memory_space<vmem>>, vector<32x1024xf32>
    %cst_29 = arith.constant dense<0.000000e+00> : vector<7x1024xf32>
    %52 = tpu.matmul %50, %51, %cst_29 {dimension_numbers = #tpu.dot_dimension_numbers<[1], [0], [0], [1], [0, 0, 1, 1], [], []>} : vector<7x32xf32>, vector<32x1024xf32>, vector<7x1024xf32> -> vector<7x1024xf32>
    %53 = vector.extract_strided_slice %0 {offsets = [1, 1, 0], sizes = [1, 7, 32], strides = [1, 1, 1]} : vector<2x8x32xf32> to vector<1x7x32xf32>
    %54 = vector.shape_cast %53 : vector<1x7x32xf32> to vector<7x32xf32>
    %c32_30 = arith.constant 32 : index
    %c0_31 = arith.constant 0 : index
    %55 = vector.load %arg3[%c32_30, %c0_31] : memref<64x1024xf32, #tpu.memory_space<vmem>>, vector<32x1024xf32>
    %cst_32 = arith.constant dense<0.000000e+00> : vector<7x1024xf32>
    %56 = tpu.matmul %54, %55, %cst_32 {dimension_numbers = #tpu.dot_dimension_numbers<[1], [0], [0], [1], [0, 0, 1, 1], [], []>} : vector<7x32xf32>, vector<32x1024xf32>, vector<7x1024xf32> -> vector<7x1024xf32>
    %57 = arith.addf %52, %56 : vector<7x1024xf32>
    %58 = vector.shape_cast %30 : vector<1024xf32> to vector<1x1024xf32>
    %59 = vector.broadcast %58 : vector<1x1024xf32> to vector<7x1024xf32>
    %60 = arith.addf %57, %59 : vector<7x1024xf32>
    %61 = math.tanh %60 : vector<7x1024xf32>
    %cst_33 = arith.constant dense<0xFF800000> : vector<1024xf32>
    %62 = vector.multi_reduction <maximumf>, %61, %cst_33 [0] : vector<7x1024xf32> to vector<1024xf32>
    %63 = vector.shape_cast %62 : vector<1024xf32> to vector<1x1024xf32>
    %c1_34 = arith.constant 1 : index
    %c1_35 = arith.constant 1 : index
    %c0_36 = arith.constant 0 : index
    %64 = vector.load %arg7[%c1_34, %c1_35, %c0_36] : memref<2x4x1024xf32, #tpu.memory_space<vmem>>, vector<1x1x1024xf32>
    %65 = vector.shape_cast %64 : vector<1x1x1024xf32> to vector<1x1024xf32>
    %66 = vector.shape_cast %63 : vector<1x1024xf32> to vector<1x1x1024xf32>
    tpu.vector_store %arg7[%c1_34, %c1_35, %c0_36], %66 {strides = array<i32>} : memref<2x4x1024xf32, #tpu.memory_space<vmem>>, vector<1x1x1024xf32>,
    %c2 = arith.constant 2 : index
    %c0_37 = arith.constant 0 : index
    %67 = vector.load %arg6[%c2, %c0_37] : memref<4x1024xf32, #tpu.memory_space<vmem>>, vector<1x1024xf32>
    %68 = vector.shape_cast %67 : vector<1x1024xf32> to vector<1024xf32>
    %69 = vector.extract_strided_slice %0 {offsets = [0, 0, 0], sizes = [1, 6, 32], strides = [1, 1, 1]} : vector<2x8x32xf32> to vector<1x6x32xf32>
    %70 = vector.shape_cast %69 : vector<1x6x32xf32> to vector<6x32xf32>
    %c0_38 = arith.constant 0 : index
    %c0_39 = arith.constant 0 : index
    %71 = vector.load %arg4[%c0_38, %c0_39] : memref<96x1024xf32, #tpu.memory_space<vmem>>, vector<32x1024xf32>
    %cst_40 = arith.constant dense<0.000000e+00> : vector<6x1024xf32>
    %72 = tpu.matmul %70, %71, %cst_40 {dimension_numbers = #tpu.dot_dimension_numbers<[1], [0], [0], [1], [0, 0, 1, 1], [], []>} : vector<6x32xf32>, vector<32x1024xf32>, vector<6x1024xf32> -> vector<6x1024xf32>
    %73 = vector.extract_strided_slice %0 {offsets = [0, 1, 0], sizes = [1, 6, 32], strides = [1, 1, 1]} : vector<2x8x32xf32> to vector<1x6x32xf32>
    %74 = vector.shape_cast %73 : vector<1x6x32xf32> to vector<6x32xf32>
    %c32_41 = arith.constant 32 : index
    %c0_42 = arith.constant 0 : index
    %75 = vector.load %arg4[%c32_41, %c0_42] : memref<96x1024xf32, #tpu.memory_space<vmem>>, vector<32x1024xf32>
    %cst_43 = arith.constant dense<0.000000e+00> : vector<6x1024xf32>
    %76 = tpu.matmul %74, %75, %cst_43 {dimension_numbers = #tpu.dot_dimension_numbers<[1], [0], [0], [1], [0, 0, 1, 1], [], []>} : vector<6x32xf32>, vector<32x1024xf32>, vector<6x1024xf32> -> vector<6x1024xf32>
    %77 = arith.addf %72, %76 : vector<6x1024xf32>
    %78 = vector.extract_strided_slice %0 {offsets = [0, 2, 0], sizes = [1, 6, 32], strides = [1, 1, 1]} : vector<2x8x32xf32> to vector<1x6x32xf32>
    %79 = vector.shape_cast %78 : vector<1x6x32xf32> to vector<6x32xf32>
    %c64 = arith.constant 64 : index
    %c0_44 = arith.constant 0 : index
    %80 = vector.load %arg4[%c64, %c0_44] : memref<96x1024xf32, #tpu.memory_space<vmem>>, vector<32x1024xf32>
    %cst_45 = arith.constant dense<0.000000e+00> : vector<6x1024xf32>
    %81 = tpu.matmul %79, %80, %cst_45 {dimension_numbers = #tpu.dot_dimension_numbers<[1], [0], [0], [1], [0, 0, 1, 1], [], []>} : vector<6x32xf32>, vector<32x1024xf32>, vector<6x1024xf32> -> vector<6x1024xf32>
    %82 = arith.addf %77, %81 : vector<6x1024xf32>
    %83 = vector.shape_cast %68 : vector<1024xf32> to vector<1x1024xf32>
    %84 = vector.broadcast %83 : vector<1x1024xf32> to vector<6x1024xf32>
    %85 = arith.addf %82, %84 : vector<6x1024xf32>
    %86 = math.tanh %85 : vector<6x1024xf32>
    %cst_46 = arith.constant dense<0xFF800000> : vector<1024xf32>
    %87 = vector.multi_reduction <maximumf>, %86, %cst_46 [0] : vector<6x1024xf32> to vector<1024xf32>
    %88 = vector.shape_cast %87 : vector<1024xf32> to vector<1x1024xf32>
    %c0_47 = arith.constant 0 : index
    %c2_48 = arith.constant 2 : index
    %c0_49 = arith.constant 0 : index
    %89 = vector.load %arg7[%c0_47, %c2_48, %c0_49] : memref<2x4x1024xf32, #tpu.memory_space<vmem>>, vector<1x1x1024xf32>
    %90 = vector.shape_cast %89 : vector<1x1x1024xf32> to vector<1x1024xf32>
    %91 = vector.shape_cast %88 : vector<1x1024xf32> to vector<1x1x1024xf32>
    tpu.vector_store %arg7[%c0_47, %c2_48, %c0_49], %91 {strides = array<i32>} : memref<2x4x1024xf32, #tpu.memory_space<vmem>>, vector<1x1x1024xf32>,
    %92 = vector.extract_strided_slice %0 {offsets = [1, 0, 0], sizes = [1, 6, 32], strides = [1, 1, 1]} : vector<2x8x32xf32> to vector<1x6x32xf32>
    %93 = vector.shape_cast %92 : vector<1x6x32xf32> to vector<6x32xf32>
    %c0_50 = arith.constant 0 : index
    %c0_51 = arith.constant 0 : index
    %94 = vector.load %arg4[%c0_50, %c0_51] : memref<96x1024xf32, #tpu.memory_space<vmem>>, vector<32x1024xf32>
    %cst_52 = arith.constant dense<0.000000e+00> : vector<6x1024xf32>
    %95 = tpu.matmul %93, %94, %cst_52 {dimension_numbers = #tpu.dot_dimension_numbers<[1], [0], [0], [1], [0, 0, 1, 1], [], []>} : vector<6x32xf32>, vector<32x1024xf32>, vector<6x1024xf32> -> vector<6x1024xf32>
    %96 = vector.extract_strided_slice %0 {offsets = [1, 1, 0], sizes = [1, 6, 32], strides = [1, 1, 1]} : vector<2x8x32xf32> to vector<1x6x32xf32>
    %97 = vector.shape_cast %96 : vector<1x6x32xf32> to vector<6x32xf32>
    %c32_53 = arith.constant 32 : index
    %c0_54 = arith.constant 0 : index
    %98 = vector.load %arg4[%c32_53, %c0_54] : memref<96x1024xf32, #tpu.memory_space<vmem>>, vector<32x1024xf32>
    %cst_55 = arith.constant dense<0.000000e+00> : vector<6x1024xf32>
    %99 = tpu.matmul %97, %98, %cst_55 {dimension_numbers = #tpu.dot_dimension_numbers<[1], [0], [0], [1], [0, 0, 1, 1], [], []>} : vector<6x32xf32>, vector<32x1024xf32>, vector<6x1024xf32> -> vector<6x1024xf32>
    %100 = arith.addf %95, %99 : vector<6x1024xf32>
    %101 = vector.extract_strided_slice %0 {offsets = [1, 2, 0], sizes = [1, 6, 32], strides = [1, 1, 1]} : vector<2x8x32xf32> to vector<1x6x32xf32>
    %102 = vector.shape_cast %101 : vector<1x6x32xf32> to vector<6x32xf32>
    %c64_56 = arith.constant 64 : index
    %c0_57 = arith.constant 0 : index
    %103 = vector.load %arg4[%c64_56, %c0_57] : memref<96x1024xf32, #tpu.memory_space<vmem>>, vector<32x1024xf32>
    %cst_58 = arith.constant dense<0.000000e+00> : vector<6x1024xf32>
    %104 = tpu.matmul %102, %103, %cst_58 {dimension_numbers = #tpu.dot_dimension_numbers<[1], [0], [0], [1], [0, 0, 1, 1], [], []>} : vector<6x32xf32>, vector<32x1024xf32>, vector<6x1024xf32> -> vector<6x1024xf32>
    %105 = arith.addf %100, %104 : vector<6x1024xf32>
    %106 = vector.shape_cast %68 : vector<1024xf32> to vector<1x1024xf32>
    %107 = vector.broadcast %106 : vector<1x1024xf32> to vector<6x1024xf32>
    %108 = arith.addf %105, %107 : vector<6x1024xf32>
    %109 = math.tanh %108 : vector<6x1024xf32>
    %cst_59 = arith.constant dense<0xFF800000> : vector<1024xf32>
    %110 = vector.multi_reduction <maximumf>, %109, %cst_59 [0] : vector<6x1024xf32> to vector<1024xf32>
    %111 = vector.shape_cast %110 : vector<1024xf32> to vector<1x1024xf32>
    %c1_60 = arith.constant 1 : index
    %c2_61 = arith.constant 2 : index
    %c0_62 = arith.constant 0 : index
    %112 = vector.load %arg7[%c1_60, %c2_61, %c0_62] : memref<2x4x1024xf32, #tpu.memory_space<vmem>>, vector<1x1x1024xf32>
    %113 = vector.shape_cast %112 : vector<1x1x1024xf32> to vector<1x1024xf32>
    %114 = vector.shape_cast %111 : vector<1x1024xf32> to vector<1x1x1024xf32>
    tpu.vector_store %arg7[%c1_60, %c2_61, %c0_62], %114 {strides = array<i32>} : memref<2x4x1024xf32, #tpu.memory_space<vmem>>, vector<1x1x1024xf32>,
    %c3 = arith.constant 3 : index
    %c0_63 = arith.constant 0 : index
    %115 = vector.load %arg6[%c3, %c0_63] : memref<4x1024xf32, #tpu.memory_space<vmem>>, vector<1x1024xf32>
    %116 = vector.shape_cast %115 : vector<1x1024xf32> to vector<1024xf32>
    %117 = vector.extract_strided_slice %0 {offsets = [0, 0, 0], sizes = [1, 5, 32], strides = [1, 1, 1]} : vector<2x8x32xf32> to vector<1x5x32xf32>
    %118 = vector.shape_cast %117 : vector<1x5x32xf32> to vector<5x32xf32>
    %c0_64 = arith.constant 0 : index
    %c0_65 = arith.constant 0 : index
    %119 = vector.load %arg5[%c0_64, %c0_65] : memref<128x1024xf32, #tpu.memory_space<vmem>>, vector<32x1024xf32>
    %cst_66 = arith.constant dense<0.000000e+00> : vector<5x1024xf32>
    %120 = tpu.matmul %118, %119, %cst_66 {dimension_numbers = #tpu.dot_dimension_numbers<[1], [0], [0], [1], [0, 0, 1, 1], [], []>} : vector<5x32xf32>, vector<32x1024xf32>, vector<5x1024xf32> -> vector<5x1024xf32>
    %121 = vector.extract_strided_slice %0 {offsets = [0, 1, 0], sizes = [1, 5, 32], strides = [1, 1, 1]} : vector<2x8x32xf32> to vector<1x5x32xf32>
    %122 = vector.shape_cast %121 : vector<1x5x32xf32> to vector<5x32xf32>
    %c32_67 = arith.constant 32 : index
    %c0_68 = arith.constant 0 : index
    %123 = vector.load %arg5[%c32_67, %c0_68] : memref<128x1024xf32, #tpu.memory_space<vmem>>, vector<32x1024xf32>
    %cst_69 = arith.constant dense<0.000000e+00> : vector<5x1024xf32>
    %124 = tpu.matmul %122, %123, %cst_69 {dimension_numbers = #tpu.dot_dimension_numbers<[1], [0], [0], [1], [0, 0, 1, 1], [], []>} : vector<5x32xf32>, vector<32x1024xf32>, vector<5x1024xf32> -> vector<5x1024xf32>
    %125 = arith.addf %120, %124 : vector<5x1024xf32>
    %126 = vector.extract_strided_slice %0 {offsets = [0, 2, 0], sizes = [1, 5, 32], strides = [1, 1, 1]} : vector<2x8x32xf32> to vector<1x5x32xf32>
    %127 = vector.shape_cast %126 : vector<1x5x32xf32> to vector<5x32xf32>
    %c64_70 = arith.constant 64 : index
    %c0_71 = arith.constant 0 : index
    %128 = vector.load %arg5[%c64_70, %c0_71] : memref<128x1024xf32, #tpu.memory_space<vmem>>, vector<32x1024xf32>
    %cst_72 = arith.constant dense<0.000000e+00> : vector<5x1024xf32>
    %129 = tpu.matmul %127, %128, %cst_72 {dimension_numbers = #tpu.dot_dimension_numbers<[1], [0], [0], [1], [0, 0, 1, 1], [], []>} : vector<5x32xf32>, vector<32x1024xf32>, vector<5x1024xf32> -> vector<5x1024xf32>
    %130 = arith.addf %125, %129 : vector<5x1024xf32>
    %131 = vector.extract_strided_slice %0 {offsets = [0, 3, 0], sizes = [1, 5, 32], strides = [1, 1, 1]} : vector<2x8x32xf32> to vector<1x5x32xf32>
    %132 = vector.shape_cast %131 : vector<1x5x32xf32> to vector<5x32xf32>
    %c96 = arith.constant 96 : index
    %c0_73 = arith.constant 0 : index
    %133 = vector.load %arg5[%c96, %c0_73] : memref<128x1024xf32, #tpu.memory_space<vmem>>, vector<32x1024xf32>
    %cst_74 = arith.constant dense<0.000000e+00> : vector<5x1024xf32>
    %134 = tpu.matmul %132, %133, %cst_74 {dimension_numbers = #tpu.dot_dimension_numbers<[1], [0], [0], [1], [0, 0, 1, 1], [], []>} : vector<5x32xf32>, vector<32x1024xf32>, vector<5x1024xf32> -> vector<5x1024xf32>
    %135 = arith.addf %130, %134 : vector<5x1024xf32>
    %136 = vector.shape_cast %116 : vector<1024xf32> to vector<1x1024xf32>
    %137 = vector.broadcast %136 : vector<1x1024xf32> to vector<5x1024xf32>
    %138 = arith.addf %135, %137 : vector<5x1024xf32>
    %139 = math.tanh %138 : vector<5x1024xf32>
    %cst_75 = arith.constant dense<0xFF800000> : vector<1024xf32>
    %140 = vector.multi_reduction <maximumf>, %139, %cst_75 [0] : vector<5x1024xf32> to vector<1024xf32>
    %141 = vector.shape_cast %140 : vector<1024xf32> to vector<1x1024xf32>
    %c0_76 = arith.constant 0 : index
    %c3_77 = arith.constant 3 : index
    %c0_78 = arith.constant 0 : index
    %142 = vector.load %arg7[%c0_76, %c3_77, %c0_78] : memref<2x4x1024xf32, #tpu.memory_space<vmem>>, vector<1x1x1024xf32>
    %143 = vector.shape_cast %142 : vector<1x1x1024xf32> to vector<1x1024xf32>
    %144 = vector.shape_cast %141 : vector<1x1024xf32> to vector<1x1x1024xf32>
    tpu.vector_store %arg7[%c0_76, %c3_77, %c0_78], %144 {strides = array<i32>} : memref<2x4x1024xf32, #tpu.memory_space<vmem>>, vector<1x1x1024xf32>,
    %145 = vector.extract_strided_slice %0 {offsets = [1, 0, 0], sizes = [1, 5, 32], strides = [1, 1, 1]} : vector<2x8x32xf32> to vector<1x5x32xf32>
    %146 = vector.shape_cast %145 : vector<1x5x32xf32> to vector<5x32xf32>
    %c0_79 = arith.constant 0 : index
    %c0_80 = arith.constant 0 : index
    %147 = vector.load %arg5[%c0_79, %c0_80] : memref<128x1024xf32, #tpu.memory_space<vmem>>, vector<32x1024xf32>
    %cst_81 = arith.constant dense<0.000000e+00> : vector<5x1024xf32>
    %148 = tpu.matmul %146, %147, %cst_81 {dimension_numbers = #tpu.dot_dimension_numbers<[1], [0], [0], [1], [0, 0, 1, 1], [], []>} : vector<5x32xf32>, vector<32x1024xf32>, vector<5x1024xf32> -> vector<5x1024xf32>
    %149 = vector.extract_strided_slice %0 {offsets = [1, 1, 0], sizes = [1, 5, 32], strides = [1, 1, 1]} : vector<2x8x32xf32> to vector<1x5x32xf32>
    %150 = vector.shape_cast %149 : vector<1x5x32xf32> to vector<5x32xf32>
    %c32_82 = arith.constant 32 : index
    %c0_83 = arith.constant 0 : index
    %151 = vector.load %arg5[%c32_82, %c0_83] : memref<128x1024xf32, #tpu.memory_space<vmem>>, vector<32x1024xf32>
    %cst_84 = arith.constant dense<0.000000e+00> : vector<5x1024xf32>
    %152 = tpu.matmul %150, %151, %cst_84 {dimension_numbers = #tpu.dot_dimension_numbers<[1], [0], [0], [1], [0, 0, 1, 1], [], []>} : vector<5x32xf32>, vector<32x1024xf32>, vector<5x1024xf32> -> vector<5x1024xf32>
    %153 = arith.addf %148, %152 : vector<5x1024xf32>
    %154 = vector.extract_strided_slice %0 {offsets = [1, 2, 0], sizes = [1, 5, 32], strides = [1, 1, 1]} : vector<2x8x32xf32> to vector<1x5x32xf32>
    %155 = vector.shape_cast %154 : vector<1x5x32xf32> to vector<5x32xf32>
    %c64_85 = arith.constant 64 : index
    %c0_86 = arith.constant 0 : index
    %156 = vector.load %arg5[%c64_85, %c0_86] : memref<128x1024xf32, #tpu.memory_space<vmem>>, vector<32x1024xf32>
    %cst_87 = arith.constant dense<0.000000e+00> : vector<5x1024xf32>
    %157 = tpu.matmul %155, %156, %cst_87 {dimension_numbers = #tpu.dot_dimension_numbers<[1], [0], [0], [1], [0, 0, 1, 1], [], []>} : vector<5x32xf32>, vector<32x1024xf32>, vector<5x1024xf32> -> vector<5x1024xf32>
    %158 = arith.addf %153, %157 : vector<5x1024xf32>
    %159 = vector.extract_strided_slice %0 {offsets = [1, 3, 0], sizes = [1, 5, 32], strides = [1, 1, 1]} : vector<2x8x32xf32> to vector<1x5x32xf32>
    %160 = vector.shape_cast %159 : vector<1x5x32xf32> to vector<5x32xf32>
    %c96_88 = arith.constant 96 : index
    %c0_89 = arith.constant 0 : index
    %161 = vector.load %arg5[%c96_88, %c0_89] : memref<128x1024xf32, #tpu.memory_space<vmem>>, vector<32x1024xf32>
    %cst_90 = arith.constant dense<0.000000e+00> : vector<5x1024xf32>
    %162 = tpu.matmul %160, %161, %cst_90 {dimension_numbers = #tpu.dot_dimension_numbers<[1], [0], [0], [1], [0, 0, 1, 1], [], []>} : vector<5x32xf32>, vector<32x1024xf32>, vector<5x1024xf32> -> vector<5x1024xf32>
    %163 = arith.addf %158, %162 : vector<5x1024xf32>
    %164 = vector.shape_cast %116 : vector<1024xf32> to vector<1x1024xf32>
    %165 = vector.broadcast %164 : vector<1x1024xf32> to vector<5x1024xf32>
    %166 = arith.addf %163, %165 : vector<5x1024xf32>
    %167 = math.tanh %166 : vector<5x1024xf32>
    %cst_91 = arith.constant dense<0xFF800000> : vector<1024xf32>
    %168 = vector.multi_reduction <maximumf>, %167, %cst_91 [0] : vector<5x1024xf32> to vector<1024xf32>
    %169 = vector.shape_cast %168 : vector<1024xf32> to vector<1x1024xf32>
    %c1_92 = arith.constant 1 : index
    %c3_93 = arith.constant 3 : index
    %c0_94 = arith.constant 0 : index
    %170 = vector.load %arg7[%c1_92, %c3_93, %c0_94] : memref<2x4x1024xf32, #tpu.memory_space<vmem>>, vector<1x1x1024xf32>
    %171 = vector.shape_cast %170 : vector<1x1x1024xf32> to vector<1x1024xf32>
    %172 = vector.shape_cast %169 : vector<1x1024xf32> to vector<1x1x1024xf32>
    tpu.vector_store %arg7[%c1_92, %c3_93, %c0_94], %172 {strides = array<i32>} : memref<2x4x1024xf32, #tpu.memory_space<vmem>>, vector<1x1x1024xf32>,
    return
  }
  func.func @transform_0(%arg0: i32) -> (i32, i32, i32) {
    %c0_i32 = arith.constant 0 : i32
    %c0_i32_0 = arith.constant 0 : i32
    %c0_i32_1 = arith.constant 0 : i32
    return %arg0, %c0_i32, %c0_i32_0 : i32, i32, i32
  }
  func.func @transform_1(%arg0: i32) -> (i32, i32) {
    %c0_i32 = arith.constant 0 : i32
    %c0_i32_0 = arith.constant 0 : i32
    %c0_i32_1 = arith.constant 0 : i32
    return %c0_i32, %c0_i32_0 : i32, i32
  }
  func.func @transform_2(%arg0: i32) -> (i32, i32) {
    %c0_i32 = arith.constant 0 : i32
    %c0_i32_0 = arith.constant 0 : i32
    %c0_i32_1 = arith.constant 0 : i32
    return %c0_i32, %c0_i32_0 : i32, i32
  }
  func.func @transform_3(%arg0: i32) -> (i32, i32) {
    %c0_i32 = arith.constant 0 : i32
    %c0_i32_0 = arith.constant 0 : i32
    %c0_i32_1 = arith.constant 0 : i32
    return %c0_i32, %c0_i32_0 : i32, i32
  }
  func.func @transform_4(%arg0: i32) -> (i32, i32) {
    %c0_i32 = arith.constant 0 : i32
    %c0_i32_0 = arith.constant 0 : i32
    %c0_i32_1 = arith.constant 0 : i32
    return %c0_i32, %c0_i32_0 : i32, i32
  }
  func.func @transform_5(%arg0: i32) -> (i32, i32) {
    %c0_i32 = arith.constant 0 : i32
    %c0_i32_0 = arith.constant 0 : i32
    %c0_i32_1 = arith.constant 0 : i32
    return %c0_i32, %c0_i32_0 : i32, i32
  }
  func.func @transform_6(%arg0: i32) -> (i32, i32, i32) {
    %c0_i32 = arith.constant 0 : i32
    %c0_i32_0 = arith.constant 0 : i32
    %c0_i32_1 = arith.constant 0 : i32
    return %arg0, %c0_i32, %c0_i32_0 : i32, i32, i32
  }
}

</mosaic_0001>

<llo_original>
// kernel: tpu_custom_call.1
$region0: #{tpu_custom_call.1}
  #allocation0 [shape = 'u32[]', space=smem, size = 0x4, offset = 0x4, fixed_abs, tag = 'smem constant byte address 0x4 - core index']
  #allocation1 [shape = 'u32[72,128]{1,0:T(1,128)}', space=vmem, size = 0x9000, scoped, tag = 'internal scratch']
  %s0 = inlined_call_operand.hbm [shape: f32[2,8,32], index: 0, kind: input, shape index: {}]
  %s1 = inlined_call_operand.hbm [shape: f32[32,1024], index: 1, kind: input, shape index: {}]
  %s2 = inlined_call_operand.hbm [shape: f32[64,1024], index: 2, kind: input, shape index: {}]
  %s3 = inlined_call_operand.hbm [shape: f32[96,1024], index: 3, kind: input, shape index: {}]
  %s4 = inlined_call_operand.hbm [shape: f32[128,1024], index: 4, kind: input, shape index: {}]
  %s5 = inlined_call_operand.hbm [shape: f32[4,1024], index: 5, kind: input, shape index: {}]
  %s6 = inlined_call_operand.hbm [shape: f32[2,4,1024], index: 6, kind: output, shape index: {}]
  %s7 = sld [smem:[#allocation0]]
  $region58: #{tpu_custom_call.1} parent=0
    _
  %s9 = ssub.s32 1, %s7
  %s10 = scalar_select 0, %s9, %s7
  $region1: #{tpu_custom_call.1} parent=0
    #allocation2 [shape = 'u8[8192]{0}', space=vmem, size = 0x2000, scoped, tag = 'input window, operand 0, single buffered']
    #allocation3 [shape = 's32[1]{0}', space=sflag, size = 0x4, scoped, tag = 'scoped memory for tpu_custom_call.1']
    #allocation4 [shape = 's32[1]{0}', space=sflag, size = 0x4, scoped, tag = 'scoped memory for tpu_custom_call.1']
    #allocation5 [shape = 'u8[131072]{0}', space=vmem, size = 0x20000, scoped, tag = 'input window, operand 1, single buffered']
    #allocation6 [shape = 's32[1]{0}', space=sflag, size = 0x4, scoped, tag = 'scoped memory for tpu_custom_call.1']
    #allocation7 [shape = 'u8[262144]{0}', space=vmem, size = 0x40000, scoped, tag = 'input window, operand 2, single buffered']
    #allocation8 [shape = 'u8[393216]{0}', space=vmem, size = 0x60000, scoped, tag = 'input window, operand 3, single buffered']
    #allocation9 [shape = 's32[1]{0}', space=sflag, size = 0x4, scoped, tag = 'scoped memory for tpu_custom_call.1']
    #allocation10 [shape = 'u8[524288]{0}', space=vmem, size = 0x80000, scoped, tag = 'input window, operand 4, single buffered']
    #allocation11 [shape = 'u8[16384]{0}', space=vmem, size = 0x4000, scoped, tag = 'input window, operand 5, single buffered']
    #allocation12 [shape = 's32[1]{0}', space=sflag, size = 0x4, scoped, tag = 'scoped memory for tpu_custom_call.1']
    #allocation13 [shape = 'u8[32768]{0}', space=vmem, size = 0x8000, scoped, tag = 'output window, operand 0, single buffered']
    %11 = vsyncpa [#allocation3], 0
    %12 = vsyncpa [#allocation6], 0
    %13 = vsyncpa [#allocation9], 0
    %14 = vsyncpa [#allocation12], 0
    %15 = vsyncpa [#allocation4], 0
    // Predicated region
    $region2: #{tpu_custom_call.1} parent=1 // pred_check
      _
    $region3: #{tpu_custom_call.1} parent=1 // pred_check_branch
      %17 = sbr.rel (0) target = $region5
    $region4: #{tpu_custom_call.1} parent=1 // pred_region
      %19 = vsyncadd [#allocation3], 0
      %s20 = sshll.u32 %s0, 4
      %s21 = int_to_ptr.hbm [resolvable:$true] %s20
      %s22 = sshll.u32 [#allocation2], 4
      %s23 = int_to_ptr.vmem [resolvable:$true] %s22
      %28 = dma.hbm_to_vmem [thread:$0]  %s21, 256, %s23, [#allocation3], 128, 128, 8
    $region5: #{tpu_custom_call.1} parent=1 // pred_fallthru
      _
    // Predicated region
    $region6: #{tpu_custom_call.1} parent=1 // pred_check
      _
    $region7: #{tpu_custom_call.1} parent=1 // pred_check_branch
      %30 = sbr.rel (0) target = $region9
    $region8: #{tpu_custom_call.1} parent=1 // pred_region
      %32 = vsyncadd [#allocation6], 0
      %s33 = sshll.u32 %s1, 4
      %s34 = int_to_ptr.hbm [resolvable:$true] %s33
      %s35 = sshll.u32 [#allocation5], 4
      %s36 = int_to_ptr.vmem [resolvable:$true] %s35
      %41 = dma.hbm_to_vmem [thread:$0]  %s34, 4096, %s36, [#allocation6], 1024, 1024, 64
    $region9: #{tpu_custom_call.1} parent=1 // pred_fallthru
      _
    // Predicated region
    $region10: #{tpu_custom_call.1} parent=1 // pred_check
      _
    $region11: #{tpu_custom_call.1} parent=1 // pred_check_branch
      %43 = sbr.rel (0) target = $region13
    $region12: #{tpu_custom_call.1} parent=1 // pred_region
      %45 = vsyncadd [#allocation6], 0
      %s46 = sshll.u32 %s2, 4
      %s47 = int_to_ptr.hbm [resolvable:$true] %s46
      %s48 = sshll.u32 [#allocation7], 4
      %s49 = int_to_ptr.vmem [resolvable:$true] %s48
      %54 = dma.hbm_to_vmem [thread:$0]  %s47, 8192, %s49, [#allocation6], 1024, 1024, 64
    $region13: #{tpu_custom_call.1} parent=1 // pred_fallthru
      _
    // Predicated region
    $region14: #{tpu_custom_call.1} parent=1 // pred_check
      _
    $region15: #{tpu_custom_call.1} parent=1 // pred_check_branch
      %56 = sbr.rel (0) target = $region17
    $region16: #{tpu_custom_call.1} parent=1 // pred_region
      %58 = vsyncadd [#allocation9], 0
      %s59 = sshll.u32 %s3, 4
      %s60 = int_to_ptr.hbm [resolvable:$true] %s59
      %s61 = sshll.u32 [#allocation8], 4
      %s62 = int_to_ptr.vmem [resolvable:$true] %s61
      %67 = dma.hbm_to_vmem [thread:$0]  %s60, 12288, %s62, [#allocation9], 1024, 1024, 64
    $region17: #{tpu_custom_call.1} parent=1 // pred_fallthru
      _
    // Predicated region
    $region18: #{tpu_custom_call.1} parent=1 // pred_check
      _
    $region19: #{tpu_custom_call.1} parent=1 // pred_check_branch
      %69 = sbr.rel (0) target = $region21
    $region20: #{tpu_custom_call.1} parent=1 // pred_region
      %71 = vsyncadd [#allocation9], 0
      %s72 = sshll.u32 %s4, 4
      %s73 = int_to_ptr.hbm [resolvable:$true] %s72
      %s74 = sshll.u32 [#allocation10], 4
      %s75 = int_to_ptr.vmem [resolvable:$true] %s74
      %80 = dma.hbm_to_vmem [thread:$0]  %s73, 16384, %s75, [#allocation9], 1024, 1024, 64
    $region21: #{tpu_custom_call.1} parent=1 // pred_fallthru
      _
    // Predicated region
    $region22: #{tpu_custom_call.1} parent=1 // pred_check
      _
    $region23: #{tpu_custom_call.1} parent=1 // pred_check_branch
      %82 = sbr.rel (0) target = $region25
    $region24: #{tpu_custom_call.1} parent=1 // pred_region
      %84 = vsyncadd [#allocation12], 0
      %s86 = sshll.u32 %s5, 4
      %s87 = int_to_ptr.hbm [resolvable:$true] %s86
      %s88 = sshll.u32 [#allocation11], 4
      %s89 = int_to_ptr.vmem [resolvable:$true] %s88
      %91 = dma.hbm_to_vmem [thread:$0]  %s87, 512, %s89, [#allocation12]
    $region25: #{tpu_custom_call.1} parent=1 // pred_fallthru
      _
    // Predicated region
    $region26: #{tpu_custom_call.1} parent=1 // pred_check
      _
    $region27: #{tpu_custom_call.1} parent=1 // pred_check_branch
      %93 = sbr.rel (0) target = $region29
    $region28: #{tpu_custom_call.1} parent=1 // pred_region
      %95 = dma.done [#allocation3], 256
    $region29: #{tpu_custom_call.1} parent=1 // pred_fallthru
      _
    // Predicated region
    $region30: #{tpu_custom_call.1} parent=1 // pred_check
      _
    $region31: #{tpu_custom_call.1} parent=1 // pred_check_branch
      %97 = sbr.rel (0) target = $region33
    $region32: #{tpu_custom_call.1} parent=1 // pred_region
      %99 = dma.done [#allocation6], 4096
    $region33: #{tpu_custom_call.1} parent=1 // pred_fallthru
      _
    // Predicated region
    $region34: #{tpu_custom_call.1} parent=1 // pred_check
      _
    $region35: #{tpu_custom_call.1} parent=1 // pred_check_branch
      %101 = sbr.rel (0) target = $region37
    $region36: #{tpu_custom_call.1} parent=1 // pred_region
      %103 = dma.done [#allocation6], 8192
    $region37: #{tpu_custom_call.1} parent=1 // pred_fallthru
      _
    // Predicated region
    $region38: #{tpu_custom_call.1} parent=1 // pred_check
      _
    $region39: #{tpu_custom_call.1} parent=1 // pred_check_branch
      %105 = sbr.rel (0) target = $region41
    $region40: #{tpu_custom_call.1} parent=1 // pred_region
      %107 = dma.done [#allocation9], 12288
    $region41: #{tpu_custom_call.1} parent=1 // pred_fallthru
      _
    // Predicated region
    $region42: #{tpu_custom_call.1} parent=1 // pred_check
      _
    $region43: #{tpu_custom_call.1} parent=1 // pred_check_branch
      %109 = sbr.rel (0) target = $region45
    $region44: #{tpu_custom_call.1} parent=1 // pred_region
      %111 = dma.done [#allocation9], 16384
    $region45: #{tpu_custom_call.1} parent=1 // pred_fallthru
      _
    // Predicated region
    $region46: #{tpu_custom_call.1} parent=1 // pred_check
      _
    $region47: #{tpu_custom_call.1} parent=1 // pred_check_branch
      %113 = sbr.rel (0) target = $region49
    $region48: #{tpu_custom_call.1} parent=1 // pred_region
      %115 = dma.done [#allocation12], 512
    $region49: #{tpu_custom_call.1} parent=1 // pred_fallthru
      _
    %v116 = vld [vmem:[#allocation2] sm:$0xff]
    %v117 = vld [vmem:[#allocation2 + $0x8] sm:$0xff]
    %v118 = vld [vmem:[#allocation11] ss:$4 sm:$0xff]
    %v119 = vld [vmem:[#allocation5] sm:$0xff]
    %v120 = vld [vmem:[#allocation5 + $0x8] sm:$0xff]
    %v121 = vld [vmem:[#allocation5 + $0x10] sm:$0xff]
    %v122 = vld [vmem:[#allocation5 + $0x18] sm:$0xff]
    %v123 = vld [vmem:[#allocation5 + $0x20] sm:$0xff]
    %v124 = vld [vmem:[#allocation5 + $0x28] sm:$0xff]
    %v125 = vld [vmem:[#allocation5 + $0x30] sm:$0xff]
    %v126 = vld [vmem:[#allocation5 + $0x38] sm:$0xff]
    %v127 = vld [vmem:[#allocation5 + $0x40] sm:$0xff]
    %v128 = vld [vmem:[#allocation5 + $0x48] sm:$0xff]
    %v129 = vld [vmem:[#allocation5 + $0x50] sm:$0xff]
    %v130 = vld [vmem:[#allocation5 + $0x58] sm:$0xff]
    %v131 = vld [vmem:[#allocation5 + $0x60] sm:$0xff]
    %v132 = vld [vmem:[#allocation5 + $0x68] sm:$0xff]
    %v133 = vld [vmem:[#allocation5 + $0x70] sm:$0xff]
    %v134 = vld [vmem:[#allocation5 + $0x78] sm:$0xff]
    %v135 = vld [vmem:[#allocation5 + $0x80] sm:$0xff]
    %v136 = vld [vmem:[#allocation5 + $0x88] sm:$0xff]
    %v137 = vld [vmem:[#allocation5 + $0x90] sm:$0xff]
    %v138 = vld [vmem:[#allocation5 + $0x98] sm:$0xff]
    %v139 = vld [vmem:[#allocation5 + $0xa0] sm:$0xff]
    %v140 = vld [vmem:[#allocation5 + $0xa8] sm:$0xff]
    %v141 = vld [vmem:[#allocation5 + $0xb0] sm:$0xff]
    %v142 = vld [vmem:[#allocation5 + $0xb8] sm:$0xff]
    %v143 = vld [vmem:[#allocation5 + $0xc0] sm:$0xff]
    %v144 = vld [vmem:[#allocation5 + $0xc8] sm:$0xff]
    %v145 = vld [vmem:[#allocation5 + $0xd0] sm:$0xff]
    %v146 = vld [vmem:[#allocation5 + $0xd8] sm:$0xff]
    %v147 = vld [vmem:[#allocation5 + $0xe0] sm:$0xff]
    %v148 = vld [vmem:[#allocation5 + $0xe8] sm:$0xff]
    %v149 = vld [vmem:[#allocation5 + $0xf0] sm:$0xff]
    %v150 = vld [vmem:[#allocation5 + $0xf8] sm:$0xff]
    %v152 = vperm.slane %v118, 0
    %v153 = vperm.slane %v118, 1
    %v154 = vperm.slane %v118, 2
    %v155 = vperm.slane %v118, 3
    %v156 = vperm.slane %v118, 4
    %v157 = vperm.slane %v118, 5
    %v158 = vperm.slane %v118, 6
    %v159 = vperm.slane %v118, 7
    %vm168 = vcmask 261120
    %v170 = vsel %vm168, %v116, 0
    %172 = vmatpush.msra.mxu0 0.0
    %173 = vmatpush.msra.mxu0 0.0
    %174 = vmatpush.msra.mxu0 0.0
    %175 = vmatpush.msra.mxu0 0.0
    %176 = vmatpush.msra.mxu0 0.0
    %177 = vmatpush.msra.mxu0 0.0
    %178 = vmatpush.msra.mxu0 0.0
    %179 = vmatpush.msra.mxu0 0.0
    %180 = vmatpush.msra.mxu0 0.0
    %181 = vmatpush.msra.mxu0 0.0
    %182 = vmatpush.msra.mxu0 0.0
    %183 = vmatpush.msra.mxu0 0.0
    %184 = vmatpush.msra.mxu0 %v143
    %185 = vmatpush.msra.mxu0 %v135
    %186 = vmatpush.msra.mxu0 %v127
    %187 = vmatpush.msra.mxu0 %v119
    %188 = vmatmul.f32.gmra.mxu0 %v170
    %v189 = vpop.f32.mrf.mxu0
    %v190 = vadd.f32 %v152, %v189
    %191 = vdwg.mxu0
    %192 = vmatpush.msra.mxu0 0.0
    %193 = vmatpush.msra.mxu0 0.0
    %194 = vmatpush.msra.mxu0 0.0
    %195 = vmatpush.msra.mxu0 0.0
    %196 = vmatpush.msra.mxu0 0.0
    %197 = vmatpush.msra.mxu0 0.0
    %198 = vmatpush.msra.mxu0 0.0
    %199 = vmatpush.msra.mxu0 0.0
    %200 = vmatpush.msra.mxu0 0.0
    %201 = vmatpush.msra.mxu0 0.0
    %202 = vmatpush.msra.mxu0 0.0
    %203 = vmatpush.msra.mxu0 0.0
    %204 = vmatpush.msra.mxu0 %v144
    %205 = vmatpush.msra.mxu0 %v136
    %206 = vmatpush.msra.mxu0 %v128
    %207 = vmatpush.msra.mxu0 %v120
    %208 = vmatmul.f32.gmra.mxu0 %v170
    %v209 = vpop.f32.mrf.mxu0
    %v210 = vadd.f32 %v153, %v209
    %211 = vdwg.mxu0
    %212 = vmatpush.msra.mxu0 0.0
    %213 = vmatpush.msra.mxu0 0.0
    %214 = vmatpush.msra.mxu0 0.0
    %215 = vmatpush.msra.mxu0 0.0
    %216 = vmatpush.msra.mxu0 0.0
    %217 = vmatpush.msra.mxu0 0.0
    %218 = vmatpush.msra.mxu0 0.0
    %219 = vmatpush.msra.mxu0 0.0
    %220 = vmatpush.msra.mxu0 0.0
    %221 = vmatpush.msra.mxu0 0.0
    %222 = vmatpush.msra.mxu0 0.0
    %223 = vmatpush.msra.mxu0 0.0
    %224 = vmatpush.msra.mxu0 %v145
    %225 = vmatpush.msra.mxu0 %v137
    %226 = vmatpush.msra.mxu0 %v129
    %227 = vmatpush.msra.mxu0 %v121
    %228 = vmatmul.f32.gmra.mxu0 %v170
    %v229 = vpop.f32.mrf.mxu0
    %v230 = vadd.f32 %v154, %v229
    %231 = vdwg.mxu0
    %232 = vmatpush.msra.mxu0 0.0
    %233 = vmatpush.msra.mxu0 0.0
    %234 = vmatpush.msra.mxu0 0.0
    %235 = vmatpush.msra.mxu0 0.0
    %236 = vmatpush.msra.mxu0 0.0
    %237 = vmatpush.msra.mxu0 0.0
    %238 = vmatpush.msra.mxu0 0.0
    %239 = vmatpush.msra.mxu0 0.0
    %240 = vmatpush.msra.mxu0 0.0
    %241 = vmatpush.msra.mxu0 0.0
    %242 = vmatpush.msra.mxu0 0.0
    %243 = vmatpush.msra.mxu0 0.0
    %244 = vmatpush.msra.mxu0 %v146
    %245 = vmatpush.msra.mxu0 %v138
    %246 = vmatpush.msra.mxu0 %v130
    %247 = vmatpush.msra.mxu0 %v122
    %248 = vmatmul.f32.gmra.mxu0 %v170
    %v249 = vpop.f32.mrf.mxu0
    %v250 = vadd.f32 %v155, %v249
    %251 = vdwg.mxu0
    %252 = vmatpush.msra.mxu0 0.0
    %253 = vmatpush.msra.mxu0 0.0
    %254 = vmatpush.msra.mxu0 0.0
    %255 = vmatpush.msra.mxu0 0.0
    %256 = vmatpush.msra.mxu0 0.0
    %257 = vmatpush.msra.mxu0 0.0
    %258 = vmatpush.msra.mxu0 0.0
    %259 = vmatpush.msra.mxu0 0.0
    %260 = vmatpush.msra.mxu0 0.0
    %261 = vmatpush.msra.mxu0 0.0
    %262 = vmatpush.msra.mxu0 0.0
    %263 = vmatpush.msra.mxu0 0.0
    %264 = vmatpush.msra.mxu0 %v147
    %265 = vmatpush.msra.mxu0 %v139
    %266 = vmatpush.msra.mxu0 %v131
    %267 = vmatpush.msra.mxu0 %v123
    %268 = vmatmul.f32.gmra.mxu0 %v170
    %v269 = vpop.f32.mrf.mxu0
    %v270 = vadd.f32 %v156, %v269
    %271 = vdwg.mxu0
    %272 = vmatpush.msra.mxu0 0.0
    %273 = vmatpush.msra.mxu0 0.0
    %274 = vmatpush.msra.mxu0 0.0
    %275 = vmatpush.msra.mxu0 0.0
    %276 = vmatpush.msra.mxu0 0.0
    %277 = vmatpush.msra.mxu0 0.0
    %278 = vmatpush.msra.mxu0 0.0
    %279 = vmatpush.msra.mxu0 0.0
    %280 = vmatpush.msra.mxu0 0.0
    %281 = vmatpush.msra.mxu0 0.0
    %282 = vmatpush.msra.mxu0 0.0
    %283 = vmatpush.msra.mxu0 0.0
    %284 = vmatpush.msra.mxu0 %v148
    %285 = vmatpush.msra.mxu0 %v140
    %286 = vmatpush.msra.mxu0 %v132
    %287 = vmatpush.msra.mxu0 %v124
    %288 = vmatmul.f32.gmra.mxu0 %v170
    %v289 = vpop.f32.mrf.mxu0
    %v290 = vadd.f32 %v157, %v289
    %291 = vdwg.mxu0
    %292 = vmatpush.msra.mxu0 0.0
    %293 = vmatpush.msra.mxu0 0.0
    %294 = vmatpush.msra.mxu0 0.0
    %295 = vmatpush.msra.mxu0 0.0
    %296 = vmatpush.msra.mxu0 0.0
    %297 = vmatpush.msra.mxu0 0.0
    %298 = vmatpush.msra.mxu0 0.0
    %299 = vmatpush.msra.mxu0 0.0
    %300 = vmatpush.msra.mxu0 0.0
    %301 = vmatpush.msra.mxu0 0.0
    %302 = vmatpush.msra.mxu0 0.0
    %303 = vmatpush.msra.mxu0 0.0
    %304 = vmatpush.msra.mxu0 %v149
    %305 = vmatpush.msra.mxu0 %v141
    %306 = vmatpush.msra.mxu0 %v133
    %307 = vmatpush.msra.mxu0 %v125
    %308 = vmatmul.f32.gmra.mxu0 %v170
    %v309 = vpop.f32.mrf.mxu0
    %v310 = vadd.f32 %v158, %v309
    %311 = vdwg.mxu0
    %312 = vmatpush.msra.mxu0 0.0
    %313 = vmatpush.msra.mxu0 0.0
    %314 = vmatpush.msra.mxu0 0.0
    %315 = vmatpush.msra.mxu0 0.0
    %316 = vmatpush.msra.mxu0 0.0
    %317 = vmatpush.msra.mxu0 0.0
    %318 = vmatpush.msra.mxu0 0.0
    %319 = vmatpush.msra.mxu0 0.0
    %320 = vmatpush.msra.mxu0 0.0
    %321 = vmatpush.msra.mxu0 0.0
    %322 = vmatpush.msra.mxu0 0.0
    %323 = vmatpush.msra.mxu0 0.0
    %324 = vmatpush.msra.mxu0 %v150
    %325 = vmatpush.msra.mxu0 %v142
    %326 = vmatpush.msra.mxu0 %v134
    %327 = vmatpush.msra.mxu0 %v126
    %328 = vmatmul.f32.gmra.mxu0 %v170
    %v329 = vpop.f32.mrf.mxu0
    %v330 = vadd.f32 %v159, %v329
    %331 = vdwg.mxu0
    %v332 = vtanh.pop %v190
    %v333 = vtanh.pop %v210
    %v334 = vtanh.pop %v230
    %v335 = vtanh.pop %v250
    %v336 = vtanh.pop %v270
    %v337 = vtanh.pop %v290
    %v338 = vtanh.pop %v310
    %v339 = vtanh.pop %v330
    %v340 = vrot.slane %v332, 4
    %v341 = vmax.f32 %v332, %v340
    %v342 = vrot.slane %v341, 2
    %v343 = vmax.f32 %v341, %v342
    %v344 = vrot.slane %v343, 1
    %v345 = vmax.f32 %v343, %v344
    %v346 = vrot.slane %v333, 4
    %v347 = vmax.f32 %v333, %v346
    %v348 = vrot.slane %v347, 2
    %v349 = vmax.f32 %v347, %v348
    %v350 = vrot.slane %v349, 1
    %v351 = vmax.f32 %v349, %v350
    %v352 = vrot.slane %v334, 4
    %v353 = vmax.f32 %v334, %v352
    %v354 = vrot.slane %v353, 2
    %v355 = vmax.f32 %v353, %v354
    %v356 = vrot.slane %v355, 1
    %v357 = vmax.f32 %v355, %v356
    %v358 = vrot.slane %v335, 4
    %v359 = vmax.f32 %v335, %v358
    %v360 = vrot.slane %v359, 2
    %v361 = vmax.f32 %v359, %v360
    %v362 = vrot.slane %v361, 1
    %v363 = vmax.f32 %v361, %v362
    %v364 = vrot.slane %v336, 4
    %v365 = vmax.f32 %v336, %v364
    %v366 = vrot.slane %v365, 2
    %v367 = vmax.f32 %v365, %v366
    %v368 = vrot.slane %v367, 1
    %v369 = vmax.f32 %v367, %v368
    %v370 = vrot.slane %v337, 4
    %v371 = vmax.f32 %v337, %v370
    %v372 = vrot.slane %v371, 2
    %v373 = vmax.f32 %v371, %v372
    %v374 = vrot.slane %v373, 1
    %v375 = vmax.f32 %v373, %v374
    %v376 = vrot.slane %v338, 4
    %v377 = vmax.f32 %v338, %v376
    %v378 = vrot.slane %v377, 2
    %v379 = vmax.f32 %v377, %v378
    %v380 = vrot.slane %v379, 1
    %v381 = vmax.f32 %v379, %v380
    %v382 = vrot.slane %v339, 4
    %v383 = vmax.f32 %v339, %v382
    %v384 = vrot.slane %v383, 2
    %v385 = vmax.f32 %v383, %v384
    %v386 = vrot.slane %v385, 1
    %v387 = vmax.f32 %v385, %v386
    %v396 = vrot.slane %v351, 7
    %v397 = vrot.slane %v357, 6
    %v398 = vrot.slane %v363, 5
    %v399 = vrot.slane %v369, 4
    %v400 = vrot.slane %v375, 3
    %v401 = vrot.slane %v381, 2
    %v402 = vrot.slane %v387, 1
    %vm403 = vcmask 1040384
    %v404 = vsel %vm403, %v345, %v396
    %vm405 = vcmask 1042434
    %v406 = vsel %vm405, %v397, %v398
    %vm407 = vcmask 1041408
    %v408 = vsel %vm407, %v404, %v406
    %vm409 = vcmask 1044484
    %v410 = vsel %vm409, %v399, %v400
    %vm411 = vcmask 1046534
    %v412 = vsel %vm411, %v401, %v402
    %vm413 = vcmask 1045508
    %v414 = vsel %vm413, %v410, %v412
    %vm415 = vcmask 1043456
    %v416 = vsel %vm415, %v408, %v414
    %418 = vst [vmem:[#allocation13] ss:$4 sm:$0xff] %v416
    %v419 = vld [vmem:[#allocation5] sm:$0xff]
    %v420 = vld [vmem:[#allocation5 + $0x8] sm:$0xff]
    %v421 = vld [vmem:[#allocation5 + $0x10] sm:$0xff]
    %v422 = vld [vmem:[#allocation5 + $0x18] sm:$0xff]
    %v423 = vld [vmem:[#allocation5 + $0x20] sm:$0xff]
    %v424 = vld [vmem:[#allocation5 + $0x28] sm:$0xff]
    %v425 = vld [vmem:[#allocation5 + $0x30] sm:$0xff]
    %v426 = vld [vmem:[#allocation5 + $0x38] sm:$0xff]
    %v427 = vld [vmem:[#allocation5 + $0x40] sm:$0xff]
    %v428 = vld [vmem:[#allocation5 + $0x48] sm:$0xff]
    %v429 = vld [vmem:[#allocation5 + $0x50] sm:$0xff]
    %v430 = vld [vmem:[#allocation5 + $0x58] sm:$0xff]
    %v431 = vld [vmem:[#allocation5 + $0x60] sm:$0xff]
    %v432 = vld [vmem:[#allocation5 + $0x68] sm:$0xff]
    %v433 = vld [vmem:[#allocation5 + $0x70] sm:$0xff]
    %v434 = vld [vmem:[#allocation5 + $0x78] sm:$0xff]
    %v435 = vld [vmem:[#allocation5 + $0x80] sm:$0xff]
    %v436 = vld [vmem:[#allocation5 + $0x88] sm:$0xff]
    %v437 = vld [vmem:[#allocation5 + $0x90] sm:$0xff]
    %v438 = vld [vmem:[#allocation5 + $0x98] sm:$0xff]
    %v439 = vld [vmem:[#allocation5 + $0xa0] sm:$0xff]
    %v440 = vld [vmem:[#allocation5 + $0xa8] sm:$0xff]
    %v441 = vld [vmem:[#allocation5 + $0xb0] sm:$0xff]
    %v442 = vld [vmem:[#allocation5 + $0xb8] sm:$0xff]
    %v443 = vld [vmem:[#allocation5 + $0xc0] sm:$0xff]
    %v444 = vld [vmem:[#allocation5 + $0xc8] sm:$0xff]
    %v445 = vld [vmem:[#allocation5 + $0xd0] sm:$0xff]
    %v446 = vld [vmem:[#allocation5 + $0xd8] sm:$0xff]
    %v447 = vld [vmem:[#allocation5 + $0xe0] sm:$0xff]
    %v448 = vld [vmem:[#allocation5 + $0xe8] sm:$0xff]
    %v449 = vld [vmem:[#allocation5 + $0xf0] sm:$0xff]
    %v450 = vld [vmem:[#allocation5 + $0xf8] sm:$0xff]
    %v452 = vsel %vm168, %v117, 0
    %454 = vmatpush.msra.mxu0 0.0
    %455 = vmatpush.msra.mxu0 0.0
    %456 = vmatpush.msra.mxu0 0.0
    %457 = vmatpush.msra.mxu0 0.0
    %458 = vmatpush.msra.mxu0 0.0
    %459 = vmatpush.msra.mxu0 0.0
    %460 = vmatpush.msra.mxu0 0.0
    %461 = vmatpush.msra.mxu0 0.0
    %462 = vmatpush.msra.mxu0 0.0
    %463 = vmatpush.msra.mxu0 0.0
    %464 = vmatpush.msra.mxu0 0.0
    %465 = vmatpush.msra.mxu0 0.0
    %466 = vmatpush.msra.mxu0 %v443
    %467 = vmatpush.msra.mxu0 %v435
    %468 = vmatpush.msra.mxu0 %v427
    %469 = vmatpush.msra.mxu0 %v419
    %470 = vmatmul.f32.gmra.mxu0 %v452
    %v471 = vpop.f32.mrf.mxu0
    %v472 = vadd.f32 %v152, %v471
    %473 = vdwg.mxu0
    %474 = vmatpush.msra.mxu0 0.0
    %475 = vmatpush.msra.mxu0 0.0
    %476 = vmatpush.msra.mxu0 0.0
    %477 = vmatpush.msra.mxu0 0.0
    %478 = vmatpush.msra.mxu0 0.0
    %479 = vmatpush.msra.mxu0 0.0
    %480 = vmatpush.msra.mxu0 0.0
    %481 = vmatpush.msra.mxu0 0.0
    %482 = vmatpush.msra.mxu0 0.0
    %483 = vmatpush.msra.mxu0 0.0
    %484 = vmatpush.msra.mxu0 0.0
    %485 = vmatpush.msra.mxu0 0.0
    %486 = vmatpush.msra.mxu0 %v444
    %487 = vmatpush.msra.mxu0 %v436
    %488 = vmatpush.msra.mxu0 %v428
    %489 = vmatpush.msra.mxu0 %v420
    %490 = vmatmul.f32.gmra.mxu0 %v452
    %v491 = vpop.f32.mrf.mxu0
    %v492 = vadd.f32 %v153, %v491
    %493 = vdwg.mxu0
    %494 = vmatpush.msra.mxu0 0.0
    %495 = vmatpush.msra.mxu0 0.0
    %496 = vmatpush.msra.mxu0 0.0
    %497 = vmatpush.msra.mxu0 0.0
    %498 = vmatpush.msra.mxu0 0.0
    %499 = vmatpush.msra.mxu0 0.0
    %500 = vmatpush.msra.mxu0 0.0
    %501 = vmatpush.msra.mxu0 0.0
    %502 = vmatpush.msra.mxu0 0.0
    %503 = vmatpush.msra.mxu0 0.0
    %504 = vmatpush.msra.mxu0 0.0
    %505 = vmatpush.msra.mxu0 0.0
    %506 = vmatpush.msra.mxu0 %v445
    %507 = vmatpush.msra.mxu0 %v437
    %508 = vmatpush.msra.mxu0 %v429
    %509 = vmatpush.msra.mxu0 %v421
    %510 = vmatmul.f32.gmra.mxu0 %v452
    %v511 = vpop.f32.mrf.mxu0
    %v512 = vadd.f32 %v154, %v511
    %513 = vdwg.mxu0
    %514 = vmatpush.msra.mxu0 0.0
    %515 = vmatpush.msra.mxu0 0.0
    %516 = vmatpush.msra.mxu0 0.0
    %517 = vmatpush.msra.mxu0 0.0
    %518 = vmatpush.msra.mxu0 0.0
    %519 = vmatpush.msra.mxu0 0.0
    %520 = vmatpush.msra.mxu0 0.0
    %521 = vmatpush.msra.mxu0 0.0
    %522 = vmatpush.msra.mxu0 0.0
    %523 = vmatpush.msra.mxu0 0.0
    %524 = vmatpush.msra.mxu0 0.0
    %525 = vmatpush.msra.mxu0 0.0
    %526 = vmatpush.msra.mxu0 %v446
    %527 = vmatpush.msra.mxu0 %v438
    %528 = vmatpush.msra.mxu0 %v430
    %529 = vmatpush.msra.mxu0 %v422
    %530 = vmatmul.f32.gmra.mxu0 %v452
    %v531 = vpop.f32.mrf.mxu0
    %v532 = vadd.f32 %v155, %v531
    %533 = vdwg.mxu0
    %534 = vmatpush.msra.mxu0 0.0
    %535 = vmatpush.msra.mxu0 0.0
    %536 = vmatpush.msra.mxu0 0.0
    %537 = vmatpush.msra.mxu0 0.0
    %538 = vmatpush.msra.mxu0 0.0
    %539 = vmatpush.msra.mxu0 0.0
    %540 = vmatpush.msra.mxu0 0.0
    %541 = vmatpush.msra.mxu0 0.0
    %542 = vmatpush.msra.mxu0 0.0
    %543 = vmatpush.msra.mxu0 0.0
    %544 = vmatpush.msra.mxu0 0.0
    %545 = vmatpush.msra.mxu0 0.0
    %546 = vmatpush.msra.mxu0 %v447
    %547 = vmatpush.msra.mxu0 %v439
    %548 = vmatpush.msra.mxu0 %v431
    %549 = vmatpush.msra.mxu0 %v423
    %550 = vmatmul.f32.gmra.mxu0 %v452
    %v551 = vpop.f32.mrf.mxu0
    %v552 = vadd.f32 %v156, %v551
    %553 = vdwg.mxu0
    %554 = vmatpush.msra.mxu0 0.0
    %555 = vmatpush.msra.mxu0 0.0
    %556 = vmatpush.msra.mxu0 0.0
    %557 = vmatpush.msra.mxu0 0.0
    %558 = vmatpush.msra.mxu0 0.0
    %559 = vmatpush.msra.mxu0 0.0
    %560 = vmatpush.msra.mxu0 0.0
    %561 = vmatpush.msra.mxu0 0.0
    %562 = vmatpush.msra.mxu0 0.0
    %563 = vmatpush.msra.mxu0 0.0
    %564 = vmatpush.msra.mxu0 0.0
    %565 = vmatpush.msra.mxu0 0.0
    %566 = vmatpush.msra.mxu0 %v448
    %567 = vmatpush.msra.mxu0 %v440
    %568 = vmatpush.msra.mxu0 %v432
    %569 = vmatpush.msra.mxu0 %v424
    %570 = vmatmul.f32.gmra.mxu0 %v452
    %v571 = vpop.f32.mrf.mxu0
    %v572 = vadd.f32 %v157, %v571
    %573 = vdwg.mxu0
    %574 = vmatpush.msra.mxu0 0.0
    %575 = vmatpush.msra.mxu0 0.0
    %576 = vmatpush.msra.mxu0 0.0
    %577 = vmatpush.msra.mxu0 0.0
    %578 = vmatpush.msra.mxu0 0.0
    %579 = vmatpush.msra.mxu0 0.0
    %580 = vmatpush.msra.mxu0 0.0
    %581 = vmatpush.msra.mxu0 0.0
    %582 = vmatpush.msra.mxu0 0.0
    %583 = vmatpush.msra.mxu0 0.0
    %584 = vmatpush.msra.mxu0 0.0
    %585 = vmatpush.msra.mxu0 0.0
    %586 = vmatpush.msra.mxu0 %v449
    %587 = vmatpush.msra.mxu0 %v441
    %588 = vmatpush.msra.mxu0 %v433
    %589 = vmatpush.msra.mxu0 %v425
    %590 = vmatmul.f32.gmra.mxu0 %v452
    %v591 = vpop.f32.mrf.mxu0
    %v592 = vadd.f32 %v158, %v591
    %593 = vdwg.mxu0
    %594 = vmatpush.msra.mxu0 0.0
    %595 = vmatpush.msra.mxu0 0.0
    %596 = vmatpush.msra.mxu0 0.0
    %597 = vmatpush.msra.mxu0 0.0
    %598 = vmatpush.msra.mxu0 0.0
    %599 = vmatpush.msra.mxu0 0.0
    %600 = vmatpush.msra.mxu0 0.0
    %601 = vmatpush.msra.mxu0 0.0
    %602 = vmatpush.msra.mxu0 0.0
    %603 = vmatpush.msra.mxu0 0.0
    %604 = vmatpush.msra.mxu0 0.0
    %605 = vmatpush.msra.mxu0 0.0
    %606 = vmatpush.msra.mxu0 %v450
    %607 = vmatpush.msra.mxu0 %v442
    %608 = vmatpush.msra.mxu0 %v434
    %609 = vmatpush.msra.mxu0 %v426
    %610 = vmatmul.f32.gmra.mxu0 %v452
    %v611 = vpop.f32.mrf.mxu0
    %v612 = vadd.f32 %v159, %v611
    %613 = vdwg.mxu0
    %v614 = vtanh.pop %v472
    %v615 = vtanh.pop %v492
    %v616 = vtanh.pop %v512
    %v617 = vtanh.pop %v532
    %v618 = vtanh.pop %v552
    %v619 = vtanh.pop %v572
    %v620 = vtanh.pop %v592
    %v621 = vtanh.pop %v612
    %v622 = vrot.slane %v614, 4
    %v623 = vmax.f32 %v614, %v622
    %v624 = vrot.slane %v623, 2
    %v625 = vmax.f32 %v623, %v624
    %v626 = vrot.slane %v625, 1
    %v627 = vmax.f32 %v625, %v626
    %v628 = vrot.slane %v615, 4
    %v629 = vmax.f32 %v615, %v628
    %v630 = vrot.slane %v629, 2
    %v631 = vmax.f32 %v629, %v630
    %v632 = vrot.slane %v631, 1
    %v633 = vmax.f32 %v631, %v632
    %v634 = vrot.slane %v616, 4
    %v635 = vmax.f32 %v616, %v634
    %v636 = vrot.slane %v635, 2
    %v637 = vmax.f32 %v635, %v636
    %v638 = vrot.slane %v637, 1
    %v639 = vmax.f32 %v637, %v638
    %v640 = vrot.slane %v617, 4
    %v641 = vmax.f32 %v617, %v640
    %v642 = vrot.slane %v641, 2
    %v643 = vmax.f32 %v641, %v642
    %v644 = vrot.slane %v643, 1
    %v645 = vmax.f32 %v643, %v644
    %v646 = vrot.slane %v618, 4
    %v647 = vmax.f32 %v618, %v646
    %v648 = vrot.slane %v647, 2
    %v649 = vmax.f32 %v647, %v648
    %v650 = vrot.slane %v649, 1
    %v651 = vmax.f32 %v649, %v650
    %v652 = vrot.slane %v619, 4
    %v653 = vmax.f32 %v619, %v652
    %v654 = vrot.slane %v653, 2
    %v655 = vmax.f32 %v653, %v654
    %v656 = vrot.slane %v655, 1
    %v657 = vmax.f32 %v655, %v656
    %v658 = vrot.slane %v620, 4
    %v659 = vmax.f32 %v620, %v658
    %v660 = vrot.slane %v659, 2
    %v661 = vmax.f32 %v659, %v660
    %v662 = vrot.slane %v661, 1
    %v663 = vmax.f32 %v661, %v662
    %v664 = vrot.slane %v621, 4
    %v665 = vmax.f32 %v621, %v664
    %v666 = vrot.slane %v665, 2
    %v667 = vmax.f32 %v665, %v666
    %v668 = vrot.slane %v667, 1
    %v669 = vmax.f32 %v667, %v668
    %v678 = vrot.slane %v633, 7
    %v679 = vrot.slane %v639, 6
    %v680 = vrot.slane %v645, 5
    %v681 = vrot.slane %v651, 4
    %v682 = vrot.slane %v657, 3
    %v683 = vrot.slane %v663, 2
    %v684 = vrot.slane %v669, 1
    %v685 = vsel %vm403, %v627, %v678
    %v686 = vsel %vm405, %v679, %v680
    %v687 = vsel %vm407, %v685, %v686
    %v688 = vsel %vm409, %v681, %v682
    %v689 = vsel %vm411, %v683, %v684
    %v690 = vsel %vm413, %v688, %v689
    %v691 = vsel %vm415, %v687, %v690
    %s693 = scalar_lea.vmem [#allocation13], 32
    %694 = vst [vmem:[%s693] ss:$4 sm:$0xff] %v691
    %s695 = scalar_lea.vmem [#allocation11], 1
    %v696 = vld [vmem:[%s695] ss:$4 sm:$0xff]
    %v697 = vld [vmem:[#allocation7] sm:$0xff]
    %v698 = vld [vmem:[#allocation7 + $0x8] sm:$0xff]
    %v699 = vld [vmem:[#allocation7 + $0x10] sm:$0xff]
    %v700 = vld [vmem:[#allocation7 + $0x18] sm:$0xff]
    %v701 = vld [vmem:[#allocation7 + $0x20] sm:$0xff]
    %v702 = vld [vmem:[#allocation7 + $0x28] sm:$0xff]
    %v703 = vld [vmem:[#allocation7 + $0x30] sm:$0xff]
    %v704 = vld [vmem:[#allocation7 + $0x38] sm:$0xff]
    %v705 = vld [vmem:[#allocation7 + $0x40] sm:$0xff]
    %v706 = vld [vmem:[#allocation7 + $0x48] sm:$0xff]
    %v707 = vld [vmem:[#allocation7 + $0x50] sm:$0xff]
    %v708 = vld [vmem:[#allocation7 + $0x58] sm:$0xff]
    %v709 = vld [vmem:[#allocation7 + $0x60] sm:$0xff]
    %v710 = vld [vmem:[#allocation7 + $0x68] sm:$0xff]
    %v711 = vld [vmem:[#allocation7 + $0x70] sm:$0xff]
    %v712 = vld [vmem:[#allocation7 + $0x78] sm:$0xff]
    %v713 = vld [vmem:[#allocation7 + $0x80] sm:$0xff]
    %v714 = vld [vmem:[#allocation7 + $0x88] sm:$0xff]
    %v715 = vld [vmem:[#allocation7 + $0x90] sm:$0xff]
    %v716 = vld [vmem:[#allocation7 + $0x98] sm:$0xff]
    %v717 = vld [vmem:[#allocation7 + $0xa0] sm:$0xff]
    %v718 = vld [vmem:[#allocation7 + $0xa8] sm:$0xff]
    %v719 = vld [vmem:[#allocation7 + $0xb0] sm:$0xff]
    %v720 = vld [vmem:[#allocation7 + $0xb8] sm:$0xff]
    %v721 = vld [vmem:[#allocation7 + $0xc0] sm:$0xff]
    %v722 = vld [vmem:[#allocation7 + $0xc8] sm:$0xff]
    %v723 = vld [vmem:[#allocation7 + $0xd0] sm:$0xff]
    %v724 = vld [vmem:[#allocation7 + $0xd8] sm:$0xff]
    %v725 = vld [vmem:[#allocation7 + $0xe0] sm:$0xff]
    %v726 = vld [vmem:[#allocation7 + $0xe8] sm:$0xff]
    %v727 = vld [vmem:[#allocation7 + $0xf0] sm:$0xff]
    %v728 = vld [vmem:[#allocation7 + $0xf8] sm:$0xff]
    %v729 = vld [vmem:[#allocation7 + $0x100] sm:$0xff]
    %v730 = vld [vmem:[#allocation7 + $0x108] sm:$0xff]
    %v731 = vld [vmem:[#allocation7 + $0x110] sm:$0xff]
    %v732 = vld [vmem:[#allocation7 + $0x118] sm:$0xff]
    %v733 = vld [vmem:[#allocation7 + $0x120] sm:$0xff]
    %v734 = vld [vmem:[#allocation7 + $0x128] sm:$0xff]
    %v735 = vld [vmem:[#allocation7 + $0x130] sm:$0xff]
    %v736 = vld [vmem:[#allocation7 + $0x138] sm:$0xff]
    %v737 = vld [vmem:[#allocation7 + $0x140] sm:$0xff]
    %v738 = vld [vmem:[#allocation7 + $0x148] sm:$0xff]
    %v739 = vld [vmem:[#allocation7 + $0x150] sm:$0xff]
    %v740 = vld [vmem:[#allocation7 + $0x158] sm:$0xff]
    %v741 = vld [vmem:[#allocation7 + $0x160] sm:$0xff]
    %v742 = vld [vmem:[#allocation7 + $0x168] sm:$0xff]
    %v743 = vld [vmem:[#allocation7 + $0x170] sm:$0xff]
    %v744 = vld [vmem:[#allocation7 + $0x178] sm:$0xff]
    %v745 = vld [vmem:[#allocation7 + $0x180] sm:$0xff]
    %v746 = vld [vmem:[#allocation7 + $0x188] sm:$0xff]
    %v747 = vld [vmem:[#allocation7 + $0x190] sm:$0xff]
    %v748 = vld [vmem:[#allocation7 + $0x198] sm:$0xff]
    %v749 = vld [vmem:[#allocation7 + $0x1a0] sm:$0xff]
    %v750 = vld [vmem:[#allocation7 + $0x1a8] sm:$0xff]
    %v751 = vld [vmem:[#allocation7 + $0x1b0] sm:$0xff]
    %v752 = vld [vmem:[#allocation7 + $0x1b8] sm:$0xff]
    %v753 = vld [vmem:[#allocation7 + $0x1c0] sm:$0xff]
    %v754 = vld [vmem:[#allocation7 + $0x1c8] sm:$0xff]
    %v755 = vld [vmem:[#allocation7 + $0x1d0] sm:$0xff]
    %v756 = vld [vmem:[#allocation7 + $0x1d8] sm:$0xff]
    %v757 = vld [vmem:[#allocation7 + $0x1e0] sm:$0xff]
    %v758 = vld [vmem:[#allocation7 + $0x1e8] sm:$0xff]
    %v759 = vld [vmem:[#allocation7 + $0x1f0] sm:$0xff]
    %v760 = vld [vmem:[#allocation7 + $0x1f8] sm:$0xff]
    %v761 = vrot.slane %v116, 1
    %v762 = vsel %vm168, %v761, 0
    %764 = vmatpush.msra.mxu0 0.0
    %765 = vmatpush.msra.mxu0 0.0
    %766 = vmatpush.msra.mxu0 0.0
    %767 = vmatpush.msra.mxu0 0.0
    %768 = vmatpush.msra.mxu0 0.0
    %769 = vmatpush.msra.mxu0 0.0
    %770 = vmatpush.msra.mxu0 0.0
    %771 = vmatpush.msra.mxu0 0.0
    %772 = vmatpush.msra.mxu0 0.0
    %773 = vmatpush.msra.mxu0 0.0
    %774 = vmatpush.msra.mxu0 0.0
    %775 = vmatpush.msra.mxu0 0.0
    %776 = vmatpush.msra.mxu0 %v753
    %777 = vmatpush.msra.mxu0 %v745
    %778 = vmatpush.msra.mxu0 %v737
    %779 = vmatpush.msra.mxu0 %v729
    %780 = vmatmul.f32.gmra.mxu0 %v762
    %v781 = vpop.f32.mrf.mxu0
    %v782 = vadd.f32 0.0, %v781
    %783 = vdwg.mxu0
    %784 = vmatpush.msra.mxu0 0.0
    %785 = vmatpush.msra.mxu0 0.0
    %786 = vmatpush.msra.mxu0 0.0
    %787 = vmatpush.msra.mxu0 0.0
    %788 = vmatpush.msra.mxu0 0.0
    %789 = vmatpush.msra.mxu0 0.0
    %790 = vmatpush.msra.mxu0 0.0
    %791 = vmatpush.msra.mxu0 0.0
    %792 = vmatpush.msra.mxu0 0.0
    %793 = vmatpush.msra.mxu0 0.0
    %794 = vmatpush.msra.mxu0 0.0
    %795 = vmatpush.msra.mxu0 0.0
    %796 = vmatpush.msra.mxu0 %v754
    %797 = vmatpush.msra.mxu0 %v746
    %798 = vmatpush.msra.mxu0 %v738
    %799 = vmatpush.msra.mxu0 %v730
    %800 = vmatmul.f32.gmra.mxu0 %v762
    %v801 = vpop.f32.mrf.mxu0
    %v802 = vadd.f32 0.0, %v801
    %803 = vdwg.mxu0
    %804 = vmatpush.msra.mxu0 0.0
    %805 = vmatpush.msra.mxu0 0.0
    %806 = vmatpush.msra.mxu0 0.0
    %807 = vmatpush.msra.mxu0 0.0
    %808 = vmatpush.msra.mxu0 0.0
    %809 = vmatpush.msra.mxu0 0.0
    %810 = vmatpush.msra.mxu0 0.0
    %811 = vmatpush.msra.mxu0 0.0
    %812 = vmatpush.msra.mxu0 0.0
    %813 = vmatpush.msra.mxu0 0.0
    %814 = vmatpush.msra.mxu0 0.0
    %815 = vmatpush.msra.mxu0 0.0
    %816 = vmatpush.msra.mxu0 %v755
    %817 = vmatpush.msra.mxu0 %v747
    %818 = vmatpush.msra.mxu0 %v739
    %819 = vmatpush.msra.mxu0 %v731
    %820 = vmatmul.f32.gmra.mxu0 %v762
    %v821 = vpop.f32.mrf.mxu0
    %v822 = vadd.f32 0.0, %v821
    %823 = vdwg.mxu0
    %824 = vmatpush.msra.mxu0 0.0
    %825 = vmatpush.msra.mxu0 0.0
    %826 = vmatpush.msra.mxu0 0.0
    %827 = vmatpush.msra.mxu0 0.0
    %828 = vmatpush.msra.mxu0 0.0
    %829 = vmatpush.msra.mxu0 0.0
    %830 = vmatpush.msra.mxu0 0.0
    %831 = vmatpush.msra.mxu0 0.0
    %832 = vmatpush.msra.mxu0 0.0
    %833 = vmatpush.msra.mxu0 0.0
    %834 = vmatpush.msra.mxu0 0.0
    %835 = vmatpush.msra.mxu0 0.0
    %836 = vmatpush.msra.mxu0 %v756
    %837 = vmatpush.msra.mxu0 %v748
    %838 = vmatpush.msra.mxu0 %v740
    %839 = vmatpush.msra.mxu0 %v732
    %840 = vmatmul.f32.gmra.mxu0 %v762
    %v841 = vpop.f32.mrf.mxu0
    %v842 = vadd.f32 0.0, %v841
    %843 = vdwg.mxu0
    %844 = vmatpush.msra.mxu0 0.0
    %845 = vmatpush.msra.mxu0 0.0
    %846 = vmatpush.msra.mxu0 0.0
    %847 = vmatpush.msra.mxu0 0.0
    %848 = vmatpush.msra.mxu0 0.0
    %849 = vmatpush.msra.mxu0 0.0
    %850 = vmatpush.msra.mxu0 0.0
    %851 = vmatpush.msra.mxu0 0.0
    %852 = vmatpush.msra.mxu0 0.0
    %853 = vmatpush.msra.mxu0 0.0
    %854 = vmatpush.msra.mxu0 0.0
    %855 = vmatpush.msra.mxu0 0.0
    %856 = vmatpush.msra.mxu0 %v757
    %857 = vmatpush.msra.mxu0 %v749
    %858 = vmatpush.msra.mxu0 %v741
    %859 = vmatpush.msra.mxu0 %v733
    %860 = vmatmul.f32.gmra.mxu0 %v762
    %v861 = vpop.f32.mrf.mxu0
    %v862 = vadd.f32 0.0, %v861
    %863 = vdwg.mxu0
    %864 = vmatpush.msra.mxu0 0.0
    %865 = vmatpush.msra.mxu0 0.0
    %866 = vmatpush.msra.mxu0 0.0
    %867 = vmatpush.msra.mxu0 0.0
    %868 = vmatpush.msra.mxu0 0.0
    %869 = vmatpush.msra.mxu0 0.0
    %870 = vmatpush.msra.mxu0 0.0
    %871 = vmatpush.msra.mxu0 0.0
    %872 = vmatpush.msra.mxu0 0.0
    %873 = vmatpush.msra.mxu0 0.0
    %874 = vmatpush.msra.mxu0 0.0
    %875 = vmatpush.msra.mxu0 0.0
    %876 = vmatpush.msra.mxu0 %v758
    %877 = vmatpush.msra.mxu0 %v750
    %878 = vmatpush.msra.mxu0 %v742
    %879 = vmatpush.msra.mxu0 %v734
    %880 = vmatmul.f32.gmra.mxu0 %v762
    %v881 = vpop.f32.mrf.mxu0
    %v882 = vadd.f32 0.0, %v881
    %883 = vdwg.mxu0
    %884 = vmatpush.msra.mxu0 0.0
    %885 = vmatpush.msra.mxu0 0.0
    %886 = vmatpush.msra.mxu0 0.0
    %887 = vmatpush.msra.mxu0 0.0
    %888 = vmatpush.msra.mxu0 0.0
    %889 = vmatpush.msra.mxu0 0.0
    %890 = vmatpush.msra.mxu0 0.0
    %891 = vmatpush.msra.mxu0 0.0
    %892 = vmatpush.msra.mxu0 0.0
    %893 = vmatpush.msra.mxu0 0.0
    %894 = vmatpush.msra.mxu0 0.0
    %895 = vmatpush.msra.mxu0 0.0
    %896 = vmatpush.msra.mxu0 %v759
    %897 = vmatpush.msra.mxu0 %v751
    %898 = vmatpush.msra.mxu0 %v743
    %899 = vmatpush.msra.mxu0 %v735
    %900 = vmatmul.f32.gmra.mxu0 %v762
    %v901 = vpop.f32.mrf.mxu0
    %v902 = vadd.f32 0.0, %v901
    %903 = vdwg.mxu0
    %904 = vmatpush.msra.mxu0 0.0
    %905 = vmatpush.msra.mxu0 0.0
    %906 = vmatpush.msra.mxu0 0.0
    %907 = vmatpush.msra.mxu0 0.0
    %908 = vmatpush.msra.mxu0 0.0
    %909 = vmatpush.msra.mxu0 0.0
    %910 = vmatpush.msra.mxu0 0.0
    %911 = vmatpush.msra.mxu0 0.0
    %912 = vmatpush.msra.mxu0 0.0
    %913 = vmatpush.msra.mxu0 0.0
    %914 = vmatpush.msra.mxu0 0.0
    %915 = vmatpush.msra.mxu0 0.0
    %916 = vmatpush.msra.mxu0 %v760
    %917 = vmatpush.msra.mxu0 %v752
    %918 = vmatpush.msra.mxu0 %v744
    %919 = vmatpush.msra.mxu0 %v736
    %920 = vmatmul.f32.gmra.mxu0 %v762
    %v921 = vpop.f32.mrf.mxu0
    %v922 = vadd.f32 0.0, %v921
    %923 = vdwg.mxu0
    %924 = vmatpush.msra.mxu0 0.0
    %925 = vmatpush.msra.mxu0 0.0
    %926 = vmatpush.msra.mxu0 0.0
    %927 = vmatpush.msra.mxu0 0.0
    %928 = vmatpush.msra.mxu0 0.0
    %929 = vmatpush.msra.mxu0 0.0
    %930 = vmatpush.msra.mxu0 0.0
    %931 = vmatpush.msra.mxu0 0.0
    %932 = vmatpush.msra.mxu0 0.0
    %933 = vmatpush.msra.mxu0 0.0
    %934 = vmatpush.msra.mxu0 0.0
    %935 = vmatpush.msra.mxu0 0.0
    %936 = vmatpush.msra.mxu0 %v721
    %937 = vmatpush.msra.mxu0 %v713
    %938 = vmatpush.msra.mxu0 %v705
    %939 = vmatpush.msra.mxu0 %v697
    %940 = vmatmul.f32.gmra.mxu0 %v170
    %v941 = vpop.f32.mrf.mxu0
    %v942 = vadd.f32 %v782, %v941
    %943 = vdwg.mxu0
    %944 = vmatpush.msra.mxu0 0.0
    %945 = vmatpush.msra.mxu0 0.0
    %946 = vmatpush.msra.mxu0 0.0
    %947 = vmatpush.msra.mxu0 0.0
    %948 = vmatpush.msra.mxu0 0.0
    %949 = vmatpush.msra.mxu0 0.0
    %950 = vmatpush.msra.mxu0 0.0
    %951 = vmatpush.msra.mxu0 0.0
    %952 = vmatpush.msra.mxu0 0.0
    %953 = vmatpush.msra.mxu0 0.0
    %954 = vmatpush.msra.mxu0 0.0
    %955 = vmatpush.msra.mxu0 0.0
    %956 = vmatpush.msra.mxu0 %v722
    %957 = vmatpush.msra.mxu0 %v714
    %958 = vmatpush.msra.mxu0 %v706
    %959 = vmatpush.msra.mxu0 %v698
    %960 = vmatmul.f32.gmra.mxu0 %v170
    %v961 = vpop.f32.mrf.mxu0
    %v962 = vadd.f32 %v802, %v961
    %963 = vdwg.mxu0
    %964 = vmatpush.msra.mxu0 0.0
    %965 = vmatpush.msra.mxu0 0.0
    %966 = vmatpush.msra.mxu0 0.0
    %967 = vmatpush.msra.mxu0 0.0
    %968 = vmatpush.msra.mxu0 0.0
    %969 = vmatpush.msra.mxu0 0.0
    %970 = vmatpush.msra.mxu0 0.0
    %971 = vmatpush.msra.mxu0 0.0
    %972 = vmatpush.msra.mxu0 0.0
    %973 = vmatpush.msra.mxu0 0.0
    %974 = vmatpush.msra.mxu0 0.0
    %975 = vmatpush.msra.mxu0 0.0
    %976 = vmatpush.msra.mxu0 %v723
    %977 = vmatpush.msra.mxu0 %v715
    %978 = vmatpush.msra.mxu0 %v707
    %979 = vmatpush.msra.mxu0 %v699
    %980 = vmatmul.f32.gmra.mxu0 %v170
    %v981 = vpop.f32.mrf.mxu0
    %v982 = vadd.f32 %v822, %v981
    %983 = vdwg.mxu0
    %984 = vmatpush.msra.mxu0 0.0
    %985 = vmatpush.msra.mxu0 0.0
    %986 = vmatpush.msra.mxu0 0.0
    %987 = vmatpush.msra.mxu0 0.0
    %988 = vmatpush.msra.mxu0 0.0
    %989 = vmatpush.msra.mxu0 0.0
    %990 = vmatpush.msra.mxu0 0.0
    %991 = vmatpush.msra.mxu0 0.0
    %992 = vmatpush.msra.mxu0 0.0
    %993 = vmatpush.msra.mxu0 0.0
    %994 = vmatpush.msra.mxu0 0.0
    %995 = vmatpush.msra.mxu0 0.0
    %996 = vmatpush.msra.mxu0 %v724
    %997 = vmatpush.msra.mxu0 %v716
    %998 = vmatpush.msra.mxu0 %v708
    %999 = vmatpush.msra.mxu0 %v700
    %1000 = vmatmul.f32.gmra.mxu0 %v170
    %v1001 = vpop.f32.mrf.mxu0
    %v1002 = vadd.f32 %v842, %v1001
    %1003 = vdwg.mxu0
    %1004 = vmatpush.msra.mxu0 0.0
    %1005 = vmatpush.msra.mxu0 0.0
    %1006 = vmatpush.msra.mxu0 0.0
    %1007 = vmatpush.msra.mxu0 0.0
    %1008 = vmatpush.msra.mxu0 0.0
    %1009 = vmatpush.msra.mxu0 0.0
    %1010 = vmatpush.msra.mxu0 0.0
    %1011 = vmatpush.msra.mxu0 0.0
    %1012 = vmatpush.msra.mxu0 0.0
    %1013 = vmatpush.msra.mxu0 0.0
    %1014 = vmatpush.msra.mxu0 0.0
    %1015 = vmatpush.msra.mxu0 0.0
    %1016 = vmatpush.msra.mxu0 %v725
    %1017 = vmatpush.msra.mxu0 %v717
    %1018 = vmatpush.msra.mxu0 %v709
    %1019 = vmatpush.msra.mxu0 %v701
    %1020 = vmatmul.f32.gmra.mxu0 %v170
    %v1021 = vpop.f32.mrf.mxu0
    %v1022 = vadd.f32 %v862, %v1021
    %1023 = vdwg.mxu0
    %1024 = vmatpush.msra.mxu0 0.0
    %1025 = vmatpush.msra.mxu0 0.0
    %1026 = vmatpush.msra.mxu0 0.0
    %1027 = vmatpush.msra.mxu0 0.0
    %1028 = vmatpush.msra.mxu0 0.0
    %1029 = vmatpush.msra.mxu0 0.0
    %1030 = vmatpush.msra.mxu0 0.0
    %1031 = vmatpush.msra.mxu0 0.0
    %1032 = vmatpush.msra.mxu0 0.0
    %1033 = vmatpush.msra.mxu0 0.0
    %1034 = vmatpush.msra.mxu0 0.0
    %1035 = vmatpush.msra.mxu0 0.0
    %1036 = vmatpush.msra.mxu0 %v726
    %1037 = vmatpush.msra.mxu0 %v718
    %1038 = vmatpush.msra.mxu0 %v710
    %1039 = vmatpush.msra.mxu0 %v702
    %1040 = vmatmul.f32.gmra.mxu0 %v170
    %v1041 = vpop.f32.mrf.mxu0
    %v1042 = vadd.f32 %v882, %v1041
    %1043 = vdwg.mxu0
    %1044 = vmatpush.msra.mxu0 0.0
    %1045 = vmatpush.msra.mxu0 0.0
    %1046 = vmatpush.msra.mxu0 0.0
    %1047 = vmatpush.msra.mxu0 0.0
    %1048 = vmatpush.msra.mxu0 0.0
    %1049 = vmatpush.msra.mxu0 0.0
    %1050 = vmatpush.msra.mxu0 0.0
    %1051 = vmatpush.msra.mxu0 0.0
    %1052 = vmatpush.msra.mxu0 0.0
    %1053 = vmatpush.msra.mxu0 0.0
    %1054 = vmatpush.msra.mxu0 0.0
    %1055 = vmatpush.msra.mxu0 0.0
    %1056 = vmatpush.msra.mxu0 %v727
    %1057 = vmatpush.msra.mxu0 %v719
    %1058 = vmatpush.msra.mxu0 %v711
    %1059 = vmatpush.msra.mxu0 %v703
    %1060 = vmatmul.f32.gmra.mxu0 %v170
    %v1061 = vpop.f32.mrf.mxu0
    %v1062 = vadd.f32 %v902, %v1061
    %1063 = vdwg.mxu0
    %1064 = vmatpush.msra.mxu0 0.0
    %1065 = vmatpush.msra.mxu0 0.0
    %1066 = vmatpush.msra.mxu0 0.0
    %1067 = vmatpush.msra.mxu0 0.0
    %1068 = vmatpush.msra.mxu0 0.0
    %1069 = vmatpush.msra.mxu0 0.0
    %1070 = vmatpush.msra.mxu0 0.0
    %1071 = vmatpush.msra.mxu0 0.0
    %1072 = vmatpush.msra.mxu0 0.0
    %1073 = vmatpush.msra.mxu0 0.0
    %1074 = vmatpush.msra.mxu0 0.0
    %1075 = vmatpush.msra.mxu0 0.0
    %1076 = vmatpush.msra.mxu0 %v728
    %1077 = vmatpush.msra.mxu0 %v720
    %1078 = vmatpush.msra.mxu0 %v712
    %1079 = vmatpush.msra.mxu0 %v704
    %1080 = vmatmul.f32.gmra.mxu0 %v170
    %v1081 = vpop.f32.mrf.mxu0
    %v1082 = vadd.f32 %v922, %v1081
    %1083 = vdwg.mxu0
    %v1085 = vperm.slane %v696, 0
    %v1086 = vperm.slane %v696, 1
    %v1087 = vperm.slane %v696, 2
    %v1088 = vperm.slane %v696, 3
    %v1089 = vperm.slane %v696, 4
    %v1090 = vperm.slane %v696, 5
    %v1091 = vperm.slane %v696, 6
    %v1092 = vperm.slane %v696, 7
    %v1101 = vadd.f32 %v942, %v1085
    %v1102 = vadd.f32 %v962, %v1086
    %v1103 = vadd.f32 %v982, %v1087
    %v1104 = vadd.f32 %v1002, %v1088
    %v1105 = vadd.f32 %v1022, %v1089
    %v1106 = vadd.f32 %v1042, %v1090
    %v1107 = vadd.f32 %v1062, %v1091
    %v1108 = vadd.f32 %v1082, %v1092
    %v1109 = vtanh.pop %v1101
    %v1110 = vtanh.pop %v1102
    %v1111 = vtanh.pop %v1103
    %v1112 = vtanh.pop %v1104
    %v1113 = vtanh.pop %v1105
    %v1114 = vtanh.pop %v1106
    %v1115 = vtanh.pop %v1107
    %v1116 = vtanh.pop %v1108
    %vm1117 = vcmask 1046528
    %v1118 = vsel %vm1117, %v1109, -inf
    %v1119 = vrot.slane %v1118, 4
    %v1120 = vmax.f32 %v1118, %v1119
    %v1121 = vrot.slane %v1120, 2
    %v1122 = vmax.f32 %v1120, %v1121
    %v1123 = vrot.slane %v1122, 1
    %v1124 = vmax.f32 %v1122, %v1123
    %v1125 = vsel %vm1117, %v1110, -inf
    %v1126 = vrot.slane %v1125, 4
    %v1127 = vmax.f32 %v1125, %v1126
    %v1128 = vrot.slane %v1127, 2
    %v1129 = vmax.f32 %v1127, %v1128
    %v1130 = vrot.slane %v1129, 1
    %v1131 = vmax.f32 %v1129, %v1130
    %v1132 = vsel %vm1117, %v1111, -inf
    %v1133 = vrot.slane %v1132, 4
    %v1134 = vmax.f32 %v1132, %v1133
    %v1135 = vrot.slane %v1134, 2
    %v1136 = vmax.f32 %v1134, %v1135
    %v1137 = vrot.slane %v1136, 1
    %v1138 = vmax.f32 %v1136, %v1137
    %v1139 = vsel %vm1117, %v1112, -inf
    %v1140 = vrot.slane %v1139, 4
    %v1141 = vmax.f32 %v1139, %v1140
    %v1142 = vrot.slane %v1141, 2
    %v1143 = vmax.f32 %v1141, %v1142
    %v1144 = vrot.slane %v1143, 1
    %v1145 = vmax.f32 %v1143, %v1144
    %v1146 = vsel %vm1117, %v1113, -inf
    %v1147 = vrot.slane %v1146, 4
    %v1148 = vmax.f32 %v1146, %v1147
    %v1149 = vrot.slane %v1148, 2
    %v1150 = vmax.f32 %v1148, %v1149
    %v1151 = vrot.slane %v1150, 1
    %v1152 = vmax.f32 %v1150, %v1151
    %v1153 = vsel %vm1117, %v1114, -inf
    %v1154 = vrot.slane %v1153, 4
    %v1155 = vmax.f32 %v1153, %v1154
    %v1156 = vrot.slane %v1155, 2
    %v1157 = vmax.f32 %v1155, %v1156
    %v1158 = vrot.slane %v1157, 1
    %v1159 = vmax.f32 %v1157, %v1158
    %v1160 = vsel %vm1117, %v1115, -inf
    %v1161 = vrot.slane %v1160, 4
    %v1162 = vmax.f32 %v1160, %v1161
    %v1163 = vrot.slane %v1162, 2
    %v1164 = vmax.f32 %v1162, %v1163
    %v1165 = vrot.slane %v1164, 1
    %v1166 = vmax.f32 %v1164, %v1165
    %v1167 = vsel %vm1117, %v1116, -inf
    %v1168 = vrot.slane %v1167, 4
    %v1169 = vmax.f32 %v1167, %v1168
    %v1170 = vrot.slane %v1169, 2
    %v1171 = vmax.f32 %v1169, %v1170
    %v1172 = vrot.slane %v1171, 1
    %v1173 = vmax.f32 %v1171, %v1172
    %v1182 = vrot.slane %v1131, 7
    %v1183 = vrot.slane %v1138, 6
    %v1184 = vrot.slane %v1145, 5
    %v1185 = vrot.slane %v1152, 4
    %v1186 = vrot.slane %v1159, 3
    %v1187 = vrot.slane %v1166, 2
    %v1188 = vrot.slane %v1173, 1
    %v1189 = vsel %vm403, %v1124, %v1182
    %v1190 = vsel %vm405, %v1183, %v1184
    %v1191 = vsel %vm407, %v1189, %v1190
    %v1192 = vsel %vm409, %v1185, %v1186
    %v1193 = vsel %vm411, %v1187, %v1188
    %v1194 = vsel %vm413, %v1192, %v1193
    %v1195 = vsel %vm415, %v1191, %v1194
    %s1197 = scalar_lea.vmem [#allocation13], 1
    %1198 = vst [vmem:[%s1197] ss:$4 sm:$0xff] %v1195
    %v1199 = vld [vmem:[#allocation7] sm:$0xff]
    %v1200 = vld [vmem:[#allocation7 + $0x8] sm:$0xff]
    %v1201 = vld [vmem:[#allocation7 + $0x10] sm:$0xff]
    %v1202 = vld [vmem:[#allocation7 + $0x18] sm:$0xff]
    %v1203 = vld [vmem:[#allocation7 + $0x20] sm:$0xff]
    %v1204 = vld [vmem:[#allocation7 + $0x28] sm:$0xff]
    %v1205 = vld [vmem:[#allocation7 + $0x30] sm:$0xff]
    %v1206 = vld [vmem:[#allocation7 + $0x38] sm:$0xff]
    %v1207 = vld [vmem:[#allocation7 + $0x40] sm:$0xff]
    %v1208 = vld [vmem:[#allocation7 + $0x48] sm:$0xff]
    %v1209 = vld [vmem:[#allocation7 + $0x50] sm:$0xff]
    %v1210 = vld [vmem:[#allocation7 + $0x58] sm:$0xff]
    %v1211 = vld [vmem:[#allocation7 + $0x60] sm:$0xff]
    %v1212 = vld [vmem:[#allocation7 + $0x68] sm:$0xff]
    %v1213 = vld [vmem:[#allocation7 + $0x70] sm:$0xff]
    %v1214 = vld [vmem:[#allocation7 + $0x78] sm:$0xff]
    %v1215 = vld [vmem:[#allocation7 + $0x80] sm:$0xff]
    %v1216 = vld [vmem:[#allocation7 + $0x88] sm:$0xff]
    %v1217 = vld [vmem:[#allocation7 + $0x90] sm:$0xff]
    %v1218 = vld [vmem:[#allocation7 + $0x98] sm:$0xff]
    %v1219 = vld [vmem:[#allocation7 + $0xa0] sm:$0xff]
    %v1220 = vld [vmem:[#allocation7 + $0xa8] sm:$0xff]
    %v1221 = vld [vmem:[#allocation7 + $0xb0] sm:$0xff]
    %v1222 = vld [vmem:[#allocation7 + $0xb8] sm:$0xff]
    %v1223 = vld [vmem:[#allocation7 + $0xc0] sm:$0xff]
    %v1224 = vld [vmem:[#allocation7 + $0xc8] sm:$0xff]
    %v1225 = vld [vmem:[#allocation7 + $0xd0] sm:$0xff]
    %v1226 = vld [vmem:[#allocation7 + $0xd8] sm:$0xff]
    %v1227 = vld [vmem:[#allocation7 + $0xe0] sm:$0xff]
    %v1228 = vld [vmem:[#allocation7 + $0xe8] sm:$0xff]
    %v1229 = vld [vmem:[#allocation7 + $0xf0] sm:$0xff]
    %v1230 = vld [vmem:[#allocation7 + $0xf8] sm:$0xff]
    %v1231 = vld [vmem:[#allocation7 + $0x100] sm:$0xff]
    %v1232 = vld [vmem:[#allocation7 + $0x108] sm:$0xff]
    %v1233 = vld [vmem:[#allocation7 + $0x110] sm:$0xff]
    %v1234 = vld [vmem:[#allocation7 + $0x118] sm:$0xff]
    %v1235 = vld [vmem:[#allocation7 + $0x120] sm:$0xff]
    %v1236 = vld [vmem:[#allocation7 + $0x128] sm:$0xff]
    %v1237 = vld [vmem:[#allocation7 + $0x130] sm:$0xff]
    %v1238 = vld [vmem:[#allocation7 + $0x138] sm:$0xff]
    %v1239 = vld [vmem:[#allocation7 + $0x140] sm:$0xff]
    %v1240 = vld [vmem:[#allocation7 + $0x148] sm:$0xff]
    %v1241 = vld [vmem:[#allocation7 + $0x150] sm:$0xff]
    %v1242 = vld [vmem:[#allocation7 + $0x158] sm:$0xff]
    %v1243 = vld [vmem:[#allocation7 + $0x160] sm:$0xff]
    %v1244 = vld [vmem:[#allocation7 + $0x168] sm:$0xff]
    %v1245 = vld [vmem:[#allocation7 + $0x170] sm:$0xff]
    %v1246 = vld [vmem:[#allocation7 + $0x178] sm:$0xff]
    %v1247 = vld [vmem:[#allocation7 + $0x180] sm:$0xff]
    %v1248 = vld [vmem:[#allocation7 + $0x188] sm:$0xff]
    %v1249 = vld [vmem:[#allocation7 + $0x190] sm:$0xff]
    %v1250 = vld [vmem:[#allocation7 + $0x198] sm:$0xff]
    %v1251 = vld [vmem:[#allocation7 + $0x1a0] sm:$0xff]
    %v1252 = vld [vmem:[#allocation7 + $0x1a8] sm:$0xff]
    %v1253 = vld [vmem:[#allocation7 + $0x1b0] sm:$0xff]
    %v1254 = vld [vmem:[#allocation7 + $0x1b8] sm:$0xff]
    %v1255 = vld [vmem:[#allocation7 + $0x1c0] sm:$0xff]
    %v1256 = vld [vmem:[#allocation7 + $0x1c8] sm:$0xff]
    %v1257 = vld [vmem:[#allocation7 + $0x1d0] sm:$0xff]
    %v1258 = vld [vmem:[#allocation7 + $0x1d8] sm:$0xff]
    %v1259 = vld [vmem:[#allocation7 + $0x1e0] sm:$0xff]
    %v1260 = vld [vmem:[#allocation7 + $0x1e8] sm:$0xff]
    %v1261 = vld [vmem:[#allocation7 + $0x1f0] sm:$0xff]
    %v1262 = vld [vmem:[#allocation7 + $0x1f8] sm:$0xff]
    %v1263 = vrot.slane %v117, 1
    %v1264 = vsel %vm168, %v1263, 0
    %1266 = vmatpush.msra.mxu0 0.0
    %1267 = vmatpush.msra.mxu0 0.0
    %1268 = vmatpush.msra.mxu0 0.0
    %1269 = vmatpush.msra.mxu0 0.0
    %1270 = vmatpush.msra.mxu0 0.0
    %1271 = vmatpush.msra.mxu0 0.0
    %1272 = vmatpush.msra.mxu0 0.0
    %1273 = vmatpush.msra.mxu0 0.0
    %1274 = vmatpush.msra.mxu0 0.0
    %1275 = vmatpush.msra.mxu0 0.0
    %1276 = vmatpush.msra.mxu0 0.0
    %1277 = vmatpush.msra.mxu0 0.0
    %1278 = vmatpush.msra.mxu0 %v1255
    %1279 = vmatpush.msra.mxu0 %v1247
    %1280 = vmatpush.msra.mxu0 %v1239
    %1281 = vmatpush.msra.mxu0 %v1231
    %1282 = vmatmul.f32.gmra.mxu0 %v1264
    %v1283 = vpop.f32.mrf.mxu0
    %v1284 = vadd.f32 0.0, %v1283
    %1285 = vdwg.mxu0
    %1286 = vmatpush.msra.mxu0 0.0
    %1287 = vmatpush.msra.mxu0 0.0
    %1288 = vmatpush.msra.mxu0 0.0
    %1289 = vmatpush.msra.mxu0 0.0
    %1290 = vmatpush.msra.mxu0 0.0
    %1291 = vmatpush.msra.mxu0 0.0
    %1292 = vmatpush.msra.mxu0 0.0
    %1293 = vmatpush.msra.mxu0 0.0
    %1294 = vmatpush.msra.mxu0 0.0
    %1295 = vmatpush.msra.mxu0 0.0
    %1296 = vmatpush.msra.mxu0 0.0
    %1297 = vmatpush.msra.mxu0 0.0
    %1298 = vmatpush.msra.mxu0 %v1256
    %1299 = vmatpush.msra.mxu0 %v1248
    %1300 = vmatpush.msra.mxu0 %v1240
    %1301 = vmatpush.msra.mxu0 %v1232
    %1302 = vmatmul.f32.gmra.mxu0 %v1264
    %v1303 = vpop.f32.mrf.mxu0
    %v1304 = vadd.f32 0.0, %v1303
    %1305 = vdwg.mxu0
    %1306 = vmatpush.msra.mxu0 0.0
    %1307 = vmatpush.msra.mxu0 0.0
    %1308 = vmatpush.msra.mxu0 0.0
    %1309 = vmatpush.msra.mxu0 0.0
    %1310 = vmatpush.msra.mxu0 0.0
    %1311 = vmatpush.msra.mxu0 0.0
    %1312 = vmatpush.msra.mxu0 0.0
    %1313 = vmatpush.msra.mxu0 0.0
    %1314 = vmatpush.msra.mxu0 0.0
    %1315 = vmatpush.msra.mxu0 0.0
    %1316 = vmatpush.msra.mxu0 0.0
    %1317 = vmatpush.msra.mxu0 0.0
    %1318 = vmatpush.msra.mxu0 %v1257
    %1319 = vmatpush.msra.mxu0 %v1249
    %1320 = vmatpush.msra.mxu0 %v1241
    %1321 = vmatpush.msra.mxu0 %v1233
    %1322 = vmatmul.f32.gmra.mxu0 %v1264
    %v1323 = vpop.f32.mrf.mxu0
    %v1324 = vadd.f32 0.0, %v1323
    %1325 = vdwg.mxu0
    %1326 = vmatpush.msra.mxu0 0.0
    %1327 = vmatpush.msra.mxu0 0.0
    %1328 = vmatpush.msra.mxu0 0.0
    %1329 = vmatpush.msra.mxu0 0.0
    %1330 = vmatpush.msra.mxu0 0.0
    %1331 = vmatpush.msra.mxu0 0.0
    %1332 = vmatpush.msra.mxu0 0.0
    %1333 = vmatpush.msra.mxu0 0.0
    %1334 = vmatpush.msra.mxu0 0.0
    %1335 = vmatpush.msra.mxu0 0.0
    %1336 = vmatpush.msra.mxu0 0.0
    %1337 = vmatpush.msra.mxu0 0.0
    %1338 = vmatpush.msra.mxu0 %v1258
    %1339 = vmatpush.msra.mxu0 %v1250
    %1340 = vmatpush.msra.mxu0 %v1242
    %1341 = vmatpush.msra.mxu0 %v1234
    %1342 = vmatmul.f32.gmra.mxu0 %v1264
    %v1343 = vpop.f32.mrf.mxu0
    %v1344 = vadd.f32 0.0, %v1343
    %1345 = vdwg.mxu0
    %1346 = vmatpush.msra.mxu0 0.0
    %1347 = vmatpush.msra.mxu0 0.0
    %1348 = vmatpush.msra.mxu0 0.0
    %1349 = vmatpush.msra.mxu0 0.0
    %1350 = vmatpush.msra.mxu0 0.0
    %1351 = vmatpush.msra.mxu0 0.0
    %1352 = vmatpush.msra.mxu0 0.0
    %1353 = vmatpush.msra.mxu0 0.0
    %1354 = vmatpush.msra.mxu0 0.0
    %1355 = vmatpush.msra.mxu0 0.0
    %1356 = vmatpush.msra.mxu0 0.0
    %1357 = vmatpush.msra.mxu0 0.0
    %1358 = vmatpush.msra.mxu0 %v1259
    %1359 = vmatpush.msra.mxu0 %v1251
    %1360 = vmatpush.msra.mxu0 %v1243
    %1361 = vmatpush.msra.mxu0 %v1235
    %1362 = vmatmul.f32.gmra.mxu0 %v1264
    %v1363 = vpop.f32.mrf.mxu0
    %v1364 = vadd.f32 0.0, %v1363
    %1365 = vdwg.mxu0
    %1366 = vmatpush.msra.mxu0 0.0
    %1367 = vmatpush.msra.mxu0 0.0
    %1368 = vmatpush.msra.mxu0 0.0
    %1369 = vmatpush.msra.mxu0 0.0
    %1370 = vmatpush.msra.mxu0 0.0
    %1371 = vmatpush.msra.mxu0 0.0
    %1372 = vmatpush.msra.mxu0 0.0
    %1373 = vmatpush.msra.mxu0 0.0
    %1374 = vmatpush.msra.mxu0 0.0
    %1375 = vmatpush.msra.mxu0 0.0
    %1376 = vmatpush.msra.mxu0 0.0
    %1377 = vmatpush.msra.mxu0 0.0
    %1378 = vmatpush.msra.mxu0 %v1260
    %1379 = vmatpush.msra.mxu0 %v1252
    %1380 = vmatpush.msra.mxu0 %v1244
    %1381 = vmatpush.msra.mxu0 %v1236
    %1382 = vmatmul.f32.gmra.mxu0 %v1264
    %v1383 = vpop.f32.mrf.mxu0
    %v1384 = vadd.f32 0.0, %v1383
    %1385 = vdwg.mxu0
    %1386 = vmatpush.msra.mxu0 0.0
    %1387 = vmatpush.msra.mxu0 0.0
    %1388 = vmatpush.msra.mxu0 0.0
    %1389 = vmatpush.msra.mxu0 0.0
    %1390 = vmatpush.msra.mxu0 0.0
    %1391 = vmatpush.msra.mxu0 0.0
    %1392 = vmatpush.msra.mxu0 0.0
    %1393 = vmatpush.msra.mxu0 0.0
    %1394 = vmatpush.msra.mxu0 0.0
    %1395 = vmatpush.msra.mxu0 0.0
    %1396 = vmatpush.msra.mxu0 0.0
    %1397 = vmatpush.msra.mxu0 0.0
    %1398 = vmatpush.msra.mxu0 %v1261
    %1399 = vmatpush.msra.mxu0 %v1253
    %1400 = vmatpush.msra.mxu0 %v1245
    %1401 = vmatpush.msra.mxu0 %v1237
    %1402 = vmatmul.f32.gmra.mxu0 %v1264
    %v1403 = vpop.f32.mrf.mxu0
    %v1404 = vadd.f32 0.0, %v1403
    %1405 = vdwg.mxu0
    %1406 = vmatpush.msra.mxu0 0.0
    %1407 = vmatpush.msra.mxu0 0.0
    %1408 = vmatpush.msra.mxu0 0.0
    %1409 = vmatpush.msra.mxu0 0.0
    %1410 = vmatpush.msra.mxu0 0.0
    %1411 = vmatpush.msra.mxu0 0.0
    %1412 = vmatpush.msra.mxu0 0.0
    %1413 = vmatpush.msra.mxu0 0.0
    %1414 = vmatpush.msra.mxu0 0.0
    %1415 = vmatpush.msra.mxu0 0.0
    %1416 = vmatpush.msra.mxu0 0.0
    %1417 = vmatpush.msra.mxu0 0.0
    %1418 = vmatpush.msra.mxu0 %v1262
    %1419 = vmatpush.msra.mxu0 %v1254
    %1420 = vmatpush.msra.mxu0 %v1246
    %1421 = vmatpush.msra.mxu0 %v1238
    %1422 = vmatmul.f32.gmra.mxu0 %v1264
    %v1423 = vpop.f32.mrf.mxu0
    %v1424 = vadd.f32 0.0, %v1423
    %1425 = vdwg.mxu0
    %1426 = vmatpush.msra.mxu0 0.0
    %1427 = vmatpush.msra.mxu0 0.0
    %1428 = vmatpush.msra.mxu0 0.0
    %1429 = vmatpush.msra.mxu0 0.0
    %1430 = vmatpush.msra.mxu0 0.0
    %1431 = vmatpush.msra.mxu0 0.0
    %1432 = vmatpush.msra.mxu0 0.0
    %1433 = vmatpush.msra.mxu0 0.0
    %1434 = vmatpush.msra.mxu0 0.0
    %1435 = vmatpush.msra.mxu0 0.0
    %1436 = vmatpush.msra.mxu0 0.0
    %1437 = vmatpush.msra.mxu0 0.0
    %1438 = vmatpush.msra.mxu0 %v1223
    %1439 = vmatpush.msra.mxu0 %v1215
    %1440 = vmatpush.msra.mxu0 %v1207
    %1441 = vmatpush.msra.mxu0 %v1199
    %1442 = vmatmul.f32.gmra.mxu0 %v452
    %v1443 = vpop.f32.mrf.mxu0
    %v1444 = vadd.f32 %v1284, %v1443
    %1445 = vdwg.mxu0
    %1446 = vmatpush.msra.mxu0 0.0
    %1447 = vmatpush.msra.mxu0 0.0
    %1448 = vmatpush.msra.mxu0 0.0
    %1449 = vmatpush.msra.mxu0 0.0
    %1450 = vmatpush.msra.mxu0 0.0
    %1451 = vmatpush.msra.mxu0 0.0
    %1452 = vmatpush.msra.mxu0 0.0
    %1453 = vmatpush.msra.mxu0 0.0
    %1454 = vmatpush.msra.mxu0 0.0
    %1455 = vmatpush.msra.mxu0 0.0
    %1456 = vmatpush.msra.mxu0 0.0
    %1457 = vmatpush.msra.mxu0 0.0
    %1458 = vmatpush.msra.mxu0 %v1224
    %1459 = vmatpush.msra.mxu0 %v1216
    %1460 = vmatpush.msra.mxu0 %v1208
    %1461 = vmatpush.msra.mxu0 %v1200
    %1462 = vmatmul.f32.gmra.mxu0 %v452
    %v1463 = vpop.f32.mrf.mxu0
    %v1464 = vadd.f32 %v1304, %v1463
    %1465 = vdwg.mxu0
    %1466 = vmatpush.msra.mxu0 0.0
    %1467 = vmatpush.msra.mxu0 0.0
    %1468 = vmatpush.msra.mxu0 0.0
    %1469 = vmatpush.msra.mxu0 0.0
    %1470 = vmatpush.msra.mxu0 0.0
    %1471 = vmatpush.msra.mxu0 0.0
    %1472 = vmatpush.msra.mxu0 0.0
    %1473 = vmatpush.msra.mxu0 0.0
    %1474 = vmatpush.msra.mxu0 0.0
    %1475 = vmatpush.msra.mxu0 0.0
    %1476 = vmatpush.msra.mxu0 0.0
    %1477 = vmatpush.msra.mxu0 0.0
    %1478 = vmatpush.msra.mxu0 %v1225
    %1479 = vmatpush.msra.mxu0 %v1217
    %1480 = vmatpush.msra.mxu0 %v1209
    %1481 = vmatpush.msra.mxu0 %v1201
    %1482 = vmatmul.f32.gmra.mxu0 %v452
    %v1483 = vpop.f32.mrf.mxu0
    %v1484 = vadd.f32 %v1324, %v1483
    %1485 = vdwg.mxu0
    %1486 = vmatpush.msra.mxu0 0.0
    %1487 = vmatpush.msra.mxu0 0.0
    %1488 = vmatpush.msra.mxu0 0.0
    %1489 = vmatpush.msra.mxu0 0.0
    %1490 = vmatpush.msra.mxu0 0.0
    %1491 = vmatpush.msra.mxu0 0.0
    %1492 = vmatpush.msra.mxu0 0.0
    %1493 = vmatpush.msra.mxu0 0.0
    %1494 = vmatpush.msra.mxu0 0.0
    %1495 = vmatpush.msra.mxu0 0.0
    %1496 = vmatpush.msra.mxu0 0.0
    %1497 = vmatpush.msra.mxu0 0.0
    %1498 = vmatpush.msra.mxu0 %v1226
    %1499 = vmatpush.msra.mxu0 %v1218
    %1500 = vmatpush.msra.mxu0 %v1210
    %1501 = vmatpush.msra.mxu0 %v1202
    %1502 = vmatmul.f32.gmra.mxu0 %v452
    %v1503 = vpop.f32.mrf.mxu0
    %v1504 = vadd.f32 %v1344, %v1503
    %1505 = vdwg.mxu0
    %1506 = vmatpush.msra.mxu0 0.0
    %1507 = vmatpush.msra.mxu0 0.0
    %1508 = vmatpush.msra.mxu0 0.0
    %1509 = vmatpush.msra.mxu0 0.0
    %1510 = vmatpush.msra.mxu0 0.0
    %1511 = vmatpush.msra.mxu0 0.0
    %1512 = vmatpush.msra.mxu0 0.0
    %1513 = vmatpush.msra.mxu0 0.0
    %1514 = vmatpush.msra.mxu0 0.0
    %1515 = vmatpush.msra.mxu0 0.0
    %1516 = vmatpush.msra.mxu0 0.0
    %1517 = vmatpush.msra.mxu0 0.0
    %1518 = vmatpush.msra.mxu0 %v1227
    %1519 = vmatpush.msra.mxu0 %v1219
    %1520 = vmatpush.msra.mxu0 %v1211
    %1521 = vmatpush.msra.mxu0 %v1203
    %1522 = vmatmul.f32.gmra.mxu0 %v452
    %v1523 = vpop.f32.mrf.mxu0
    %v1524 = vadd.f32 %v1364, %v1523
    %1525 = vdwg.mxu0
    %1526 = vmatpush.msra.mxu0 0.0
    %1527 = vmatpush.msra.mxu0 0.0
    %1528 = vmatpush.msra.mxu0 0.0
    %1529 = vmatpush.msra.mxu0 0.0
    %1530 = vmatpush.msra.mxu0 0.0
    %1531 = vmatpush.msra.mxu0 0.0
    %1532 = vmatpush.msra.mxu0 0.0
    %1533 = vmatpush.msra.mxu0 0.0
    %1534 = vmatpush.msra.mxu0 0.0
    %1535 = vmatpush.msra.mxu0 0.0
    %1536 = vmatpush.msra.mxu0 0.0
    %1537 = vmatpush.msra.mxu0 0.0
    %1538 = vmatpush.msra.mxu0 %v1228
    %1539 = vmatpush.msra.mxu0 %v1220
    %1540 = vmatpush.msra.mxu0 %v1212
    %1541 = vmatpush.msra.mxu0 %v1204
    %1542 = vmatmul.f32.gmra.mxu0 %v452
    %v1543 = vpop.f32.mrf.mxu0
    %v1544 = vadd.f32 %v1384, %v1543
    %1545 = vdwg.mxu0
    %1546 = vmatpush.msra.mxu0 0.0
    %1547 = vmatpush.msra.mxu0 0.0
    %1548 = vmatpush.msra.mxu0 0.0
    %1549 = vmatpush.msra.mxu0 0.0
    %1550 = vmatpush.msra.mxu0 0.0
    %1551 = vmatpush.msra.mxu0 0.0
    %1552 = vmatpush.msra.mxu0 0.0
    %1553 = vmatpush.msra.mxu0 0.0
    %1554 = vmatpush.msra.mxu0 0.0
    %1555 = vmatpush.msra.mxu0 0.0
    %1556 = vmatpush.msra.mxu0 0.0
    %1557 = vmatpush.msra.mxu0 0.0
    %1558 = vmatpush.msra.mxu0 %v1229
    %1559 = vmatpush.msra.mxu0 %v1221
    %1560 = vmatpush.msra.mxu0 %v1213
    %1561 = vmatpush.msra.mxu0 %v1205
    %1562 = vmatmul.f32.gmra.mxu0 %v452
    %v1563 = vpop.f32.mrf.mxu0
    %v1564 = vadd.f32 %v1404, %v1563
    %1565 = vdwg.mxu0
    %1566 = vmatpush.msra.mxu0 0.0
    %1567 = vmatpush.msra.mxu0 0.0
    %1568 = vmatpush.msra.mxu0 0.0
    %1569 = vmatpush.msra.mxu0 0.0
    %1570 = vmatpush.msra.mxu0 0.0
    %1571 = vmatpush.msra.mxu0 0.0
    %1572 = vmatpush.msra.mxu0 0.0
    %1573 = vmatpush.msra.mxu0 0.0
    %1574 = vmatpush.msra.mxu0 0.0
    %1575 = vmatpush.msra.mxu0 0.0
    %1576 = vmatpush.msra.mxu0 0.0
    %1577 = vmatpush.msra.mxu0 0.0
    %1578 = vmatpush.msra.mxu0 %v1230
    %1579 = vmatpush.msra.mxu0 %v1222
    %1580 = vmatpush.msra.mxu0 %v1214
    %1581 = vmatpush.msra.mxu0 %v1206
    %1582 = vmatmul.f32.gmra.mxu0 %v452
    %v1583 = vpop.f32.mrf.mxu0
    %v1584 = vadd.f32 %v1424, %v1583
    %1585 = vdwg.mxu0
    %v1586 = vadd.f32 %v1444, %v1085
    %v1587 = vadd.f32 %v1464, %v1086
    %v1588 = vadd.f32 %v1484, %v1087
    %v1589 = vadd.f32 %v1504, %v1088
    %v1590 = vadd.f32 %v1524, %v1089
    %v1591 = vadd.f32 %v1544, %v1090
    %v1592 = vadd.f32 %v1564, %v1091
    %v1593 = vadd.f32 %v1584, %v1092
    %v1594 = vtanh.pop %v1586
    %v1595 = vtanh.pop %v1587
    %v1596 = vtanh.pop %v1588
    %v1597 = vtanh.pop %v1589
    %v1598 = vtanh.pop %v1590
    %v1599 = vtanh.pop %v1591
    %v1600 = vtanh.pop %v1592
    %v1601 = vtanh.pop %v1593
    %v1602 = vsel %vm1117, %v1594, -inf
    %v1603 = vrot.slane %v1602, 4
    %v1604 = vmax.f32 %v1602, %v1603
    %v1605 = vrot.slane %v1604, 2
    %v1606 = vmax.f32 %v1604, %v1605
    %v1607 = vrot.slane %v1606, 1
    %v1608 = vmax.f32 %v1606, %v1607
    %v1609 = vsel %vm1117, %v1595, -inf
    %v1610 = vrot.slane %v1609, 4
    %v1611 = vmax.f32 %v1609, %v1610
    %v1612 = vrot.slane %v1611, 2
    %v1613 = vmax.f32 %v1611, %v1612
    %v1614 = vrot.slane %v1613, 1
    %v1615 = vmax.f32 %v1613, %v1614
    %v1616 = vsel %vm1117, %v1596, -inf
    %v1617 = vrot.slane %v1616, 4
    %v1618 = vmax.f32 %v1616, %v1617
    %v1619 = vrot.slane %v1618, 2
    %v1620 = vmax.f32 %v1618, %v1619
    %v1621 = vrot.slane %v1620, 1
    %v1622 = vmax.f32 %v1620, %v1621
    %v1623 = vsel %vm1117, %v1597, -inf
    %v1624 = vrot.slane %v1623, 4
    %v1625 = vmax.f32 %v1623, %v1624
    %v1626 = vrot.slane %v1625, 2
    %v1627 = vmax.f32 %v1625, %v1626
    %v1628 = vrot.slane %v1627, 1
    %v1629 = vmax.f32 %v1627, %v1628
    %v1630 = vsel %vm1117, %v1598, -inf
    %v1631 = vrot.slane %v1630, 4
    %v1632 = vmax.f32 %v1630, %v1631
    %v1633 = vrot.slane %v1632, 2
    %v1634 = vmax.f32 %v1632, %v1633
    %v1635 = vrot.slane %v1634, 1
    %v1636 = vmax.f32 %v1634, %v1635
    %v1637 = vsel %vm1117, %v1599, -inf
    %v1638 = vrot.slane %v1637, 4
    %v1639 = vmax.f32 %v1637, %v1638
    %v1640 = vrot.slane %v1639, 2
    %v1641 = vmax.f32 %v1639, %v1640
    %v1642 = vrot.slane %v1641, 1
    %v1643 = vmax.f32 %v1641, %v1642
    %v1644 = vsel %vm1117, %v1600, -inf
    %v1645 = vrot.slane %v1644, 4
    %v1646 = vmax.f32 %v1644, %v1645
    %v1647 = vrot.slane %v1646, 2
    %v1648 = vmax.f32 %v1646, %v1647
    %v1649 = vrot.slane %v1648, 1
    %v1650 = vmax.f32 %v1648, %v1649
    %v1651 = vsel %vm1117, %v1601, -inf
    %v1652 = vrot.slane %v1651, 4
    %v1653 = vmax.f32 %v1651, %v1652
    %v1654 = vrot.slane %v1653, 2
    %v1655 = vmax.f32 %v1653, %v1654
    %v1656 = vrot.slane %v1655, 1
    %v1657 = vmax.f32 %v1655, %v1656
    %v1666 = vrot.slane %v1615, 7
    %v1667 = vrot.slane %v1622, 6
    %v1668 = vrot.slane %v1629, 5
    %v1669 = vrot.slane %v1636, 4
    %v1670 = vrot.slane %v1643, 3
    %v1671 = vrot.slane %v1650, 2
    %v1672 = vrot.slane %v1657, 1
    %v1673 = vsel %vm403, %v1608, %v1666
    %v1674 = vsel %vm405, %v1667, %v1668
    %v1675 = vsel %vm407, %v1673, %v1674
    %v1676 = vsel %vm409, %v1669, %v1670
    %v1677 = vsel %vm411, %v1671, %v1672
    %v1678 = vsel %vm413, %v1676, %v1677
    %v1679 = vsel %vm415, %v1675, %v1678
    %s1681 = scalar_lea.vmem %s693, 1 [#allocation13]
    %1682 = vst [vmem:[%s1681] ss:$4 sm:$0xff] %v1679
    %s1683 = scalar_lea.vmem [#allocation11], 2
    %v1684 = vld [vmem:[%s1683] ss:$4 sm:$0xff]
    %v1685 = vld [vmem:[#allocation8] sm:$0xff]
    %v1686 = vld [vmem:[#allocation8 + $0x8] sm:$0xff]
    %v1687 = vld [vmem:[#allocation8 + $0x10] sm:$0xff]
    %v1688 = vld [vmem:[#allocation8 + $0x18] sm:$0xff]
    %v1689 = vld [vmem:[#allocation8 + $0x20] sm:$0xff]
    %v1690 = vld [vmem:[#allocation8 + $0x28] sm:$0xff]
    %v1691 = vld [vmem:[#allocation8 + $0x30] sm:$0xff]
    %v1692 = vld [vmem:[#allocation8 + $0x38] sm:$0xff]
    %v1693 = vld [vmem:[#allocation8 + $0x40] sm:$0xff]
    %v1694 = vld [vmem:[#allocation8 + $0x48] sm:$0xff]
    %v1695 = vld [vmem:[#allocation8 + $0x50] sm:$0xff]
    %v1696 = vld [vmem:[#allocation8 + $0x58] sm:$0xff]
    %v1697 = vld [vmem:[#allocation8 + $0x60] sm:$0xff]
    %v1698 = vld [vmem:[#allocation8 + $0x68] sm:$0xff]
    %v1699 = vld [vmem:[#allocation8 + $0x70] sm:$0xff]
    %v1700 = vld [vmem:[#allocation8 + $0x78] sm:$0xff]
    %v1701 = vld [vmem:[#allocation8 + $0x80] sm:$0xff]
    %v1702 = vld [vmem:[#allocation8 + $0x88] sm:$0xff]
    %v1703 = vld [vmem:[#allocation8 + $0x90] sm:$0xff]
    %v1704 = vld [vmem:[#allocation8 + $0x98] sm:$0xff]
    %v1705 = vld [vmem:[#allocation8 + $0xa0] sm:$0xff]
    %v1706 = vld [vmem:[#allocation8 + $0xa8] sm:$0xff]
    %v1707 = vld [vmem:[#allocation8 + $0xb0] sm:$0xff]
    %v1708 = vld [vmem:[#allocation8 + $0xb8] sm:$0xff]
    %v1709 = vld [vmem:[#allocation8 + $0xc0] sm:$0xff]
    %v1710 = vld [vmem:[#allocation8 + $0xc8] sm:$0xff]
    %v1711 = vld [vmem:[#allocation8 + $0xd0] sm:$0xff]
    %v1712 = vld [vmem:[#allocation8 + $0xd8] sm:$0xff]
    %v1713 = vld [vmem:[#allocation8 + $0xe0] sm:$0xff]
    %v1714 = vld [vmem:[#allocation8 + $0xe8] sm:$0xff]
    %v1715 = vld [vmem:[#allocation8 + $0xf0] sm:$0xff]
    %v1716 = vld [vmem:[#allocation8 + $0xf8] sm:$0xff]
    %v1717 = vld [vmem:[#allocation8 + $0x100] sm:$0xff]
    %v1718 = vld [vmem:[#allocation8 + $0x108] sm:$0xff]
    %v1719 = vld [vmem:[#allocation8 + $0x110] sm:$0xff]
    %v1720 = vld [vmem:[#allocation8 + $0x118] sm:$0xff]
    %v1721 = vld [vmem:[#allocation8 + $0x120] sm:$0xff]
    %v1722 = vld [vmem:[#allocation8 + $0x128] sm:$0xff]
    %v1723 = vld [vmem:[#allocation8 + $0x130] sm:$0xff]
    %v1724 = vld [vmem:[#allocation8 + $0x138] sm:$0xff]
    %v1725 = vld [vmem:[#allocation8 + $0x140] sm:$0xff]
    %v1726 = vld [vmem:[#allocation8 + $0x148] sm:$0xff]
    %v1727 = vld [vmem:[#allocation8 + $0x150] sm:$0xff]
    %v1728 = vld [vmem:[#allocation8 + $0x158] sm:$0xff]
    %v1729 = vld [vmem:[#allocation8 + $0x160] sm:$0xff]
    %v1730 = vld [vmem:[#allocation8 + $0x168] sm:$0xff]
    %v1731 = vld [vmem:[#allocation8 + $0x170] sm:$0xff]
    %v1732 = vld [vmem:[#allocation8 + $0x178] sm:$0xff]
    %v1733 = vld [vmem:[#allocation8 + $0x180] sm:$0xff]
    %v1734 = vld [vmem:[#allocation8 + $0x188] sm:$0xff]
    %v1735 = vld [vmem:[#allocation8 + $0x190] sm:$0xff]
    %v1736 = vld [vmem:[#allocation8 + $0x198] sm:$0xff]
    %v1737 = vld [vmem:[#allocation8 + $0x1a0] sm:$0xff]
    %v1738 = vld [vmem:[#allocation8 + $0x1a8] sm:$0xff]
    %v1739 = vld [vmem:[#allocation8 + $0x1b0] sm:$0xff]
    %v1740 = vld [vmem:[#allocation8 + $0x1b8] sm:$0xff]
    %v1741 = vld [vmem:[#allocation8 + $0x1c0] sm:$0xff]
    %v1742 = vld [vmem:[#allocation8 + $0x1c8] sm:$0xff]
    %v1743 = vld [vmem:[#allocation8 + $0x1d0] sm:$0xff]
    %v1744 = vld [vmem:[#allocation8 + $0x1d8] sm:$0xff]
    %v1745 = vld [vmem:[#allocation8 + $0x1e0] sm:$0xff]
    %v1746 = vld [vmem:[#allocation8 + $0x1e8] sm:$0xff]
    %v1747 = vld [vmem:[#allocation8 + $0x1f0] sm:$0xff]
    %v1748 = vld [vmem:[#allocation8 + $0x1f8] sm:$0xff]
    %1749 = vmatpush.msra.mxu0 0.0
    %1750 = vmatpush.msra.mxu0 0.0
    %1751 = vmatpush.msra.mxu0 0.0
    %1752 = vmatpush.msra.mxu0 0.0
    %1753 = vmatpush.msra.mxu0 0.0
    %1754 = vmatpush.msra.mxu0 0.0
    %1755 = vmatpush.msra.mxu0 0.0
    %1756 = vmatpush.msra.mxu0 0.0
    %1757 = vmatpush.msra.mxu0 0.0
    %1758 = vmatpush.msra.mxu0 0.0
    %1759 = vmatpush.msra.mxu0 0.0
    %1760 = vmatpush.msra.mxu0 0.0
    %1761 = vmatpush.msra.mxu0 %v1741
    %1762 = vmatpush.msra.mxu0 %v1733
    %1763 = vmatpush.msra.mxu0 %v1725
    %1764 = vmatpush.msra.mxu0 %v1717
    %1765 = vmatmul.f32.gmra.mxu0 %v762
    %v1766 = vpop.f32.mrf.mxu0
    %v1767 = vadd.f32 0.0, %v1766
    %1768 = vdwg.mxu0
    %1769 = vmatpush.msra.mxu0 0.0
    %1770 = vmatpush.msra.mxu0 0.0
    %1771 = vmatpush.msra.mxu0 0.0
    %1772 = vmatpush.msra.mxu0 0.0
    %1773 = vmatpush.msra.mxu0 0.0
    %1774 = vmatpush.msra.mxu0 0.0
    %1775 = vmatpush.msra.mxu0 0.0
    %1776 = vmatpush.msra.mxu0 0.0
    %1777 = vmatpush.msra.mxu0 0.0
    %1778 = vmatpush.msra.mxu0 0.0
    %1779 = vmatpush.msra.mxu0 0.0
    %1780 = vmatpush.msra.mxu0 0.0
    %1781 = vmatpush.msra.mxu0 %v1742
    %1782 = vmatpush.msra.mxu0 %v1734
    %1783 = vmatpush.msra.mxu0 %v1726
    %1784 = vmatpush.msra.mxu0 %v1718
    %1785 = vmatmul.f32.gmra.mxu0 %v762
    %v1786 = vpop.f32.mrf.mxu0
    %v1787 = vadd.f32 0.0, %v1786
    %1788 = vdwg.mxu0
    %1789 = vmatpush.msra.mxu0 0.0
    %1790 = vmatpush.msra.mxu0 0.0
    %1791 = vmatpush.msra.mxu0 0.0
    %1792 = vmatpush.msra.mxu0 0.0
    %1793 = vmatpush.msra.mxu0 0.0
    %1794 = vmatpush.msra.mxu0 0.0
    %1795 = vmatpush.msra.mxu0 0.0
    %1796 = vmatpush.msra.mxu0 0.0
    %1797 = vmatpush.msra.mxu0 0.0
    %1798 = vmatpush.msra.mxu0 0.0
    %1799 = vmatpush.msra.mxu0 0.0
    %1800 = vmatpush.msra.mxu0 0.0
    %1801 = vmatpush.msra.mxu0 %v1743
    %1802 = vmatpush.msra.mxu0 %v1735
    %1803 = vmatpush.msra.mxu0 %v1727
    %1804 = vmatpush.msra.mxu0 %v1719
    %1805 = vmatmul.f32.gmra.mxu0 %v762
    %v1806 = vpop.f32.mrf.mxu0
    %v1807 = vadd.f32 0.0, %v1806
    %1808 = vdwg.mxu0
    %1809 = vmatpush.msra.mxu0 0.0
    %1810 = vmatpush.msra.mxu0 0.0
    %1811 = vmatpush.msra.mxu0 0.0
    %1812 = vmatpush.msra.mxu0 0.0
    %1813 = vmatpush.msra.mxu0 0.0
    %1814 = vmatpush.msra.mxu0 0.0
    %1815 = vmatpush.msra.mxu0 0.0
    %1816 = vmatpush.msra.mxu0 0.0
    %1817 = vmatpush.msra.mxu0 0.0
    %1818 = vmatpush.msra.mxu0 0.0
    %1819 = vmatpush.msra.mxu0 0.0
    %1820 = vmatpush.msra.mxu0 0.0
    %1821 = vmatpush.msra.mxu0 %v1744
    %1822 = vmatpush.msra.mxu0 %v1736
    %1823 = vmatpush.msra.mxu0 %v1728
    %1824 = vmatpush.msra.mxu0 %v1720
    %1825 = vmatmul.f32.gmra.mxu0 %v762
    %v1826 = vpop.f32.mrf.mxu0
    %v1827 = vadd.f32 0.0, %v1826
    %1828 = vdwg.mxu0
    %1829 = vmatpush.msra.mxu0 0.0
    %1830 = vmatpush.msra.mxu0 0.0
    %1831 = vmatpush.msra.mxu0 0.0
    %1832 = vmatpush.msra.mxu0 0.0
    %1833 = vmatpush.msra.mxu0 0.0
    %1834 = vmatpush.msra.mxu0 0.0
    %1835 = vmatpush.msra.mxu0 0.0
    %1836 = vmatpush.msra.mxu0 0.0
    %1837 = vmatpush.msra.mxu0 0.0
    %1838 = vmatpush.msra.mxu0 0.0
    %1839 = vmatpush.msra.mxu0 0.0
    %1840 = vmatpush.msra.mxu0 0.0
    %1841 = vmatpush.msra.mxu0 %v1745
    %1842 = vmatpush.msra.mxu0 %v1737
    %1843 = vmatpush.msra.mxu0 %v1729
    %1844 = vmatpush.msra.mxu0 %v1721
    %1845 = vmatmul.f32.gmra.mxu0 %v762
    %v1846 = vpop.f32.mrf.mxu0
    %v1847 = vadd.f32 0.0, %v1846
    %1848 = vdwg.mxu0
    %1849 = vmatpush.msra.mxu0 0.0
    %1850 = vmatpush.msra.mxu0 0.0
    %1851 = vmatpush.msra.mxu0 0.0
    %1852 = vmatpush.msra.mxu0 0.0
    %1853 = vmatpush.msra.mxu0 0.0
    %1854 = vmatpush.msra.mxu0 0.0
    %1855 = vmatpush.msra.mxu0 0.0
    %1856 = vmatpush.msra.mxu0 0.0
    %1857 = vmatpush.msra.mxu0 0.0
    %1858 = vmatpush.msra.mxu0 0.0
    %1859 = vmatpush.msra.mxu0 0.0
    %1860 = vmatpush.msra.mxu0 0.0
    %1861 = vmatpush.msra.mxu0 %v1746
    %1862 = vmatpush.msra.mxu0 %v1738
    %1863 = vmatpush.msra.mxu0 %v1730
    %1864 = vmatpush.msra.mxu0 %v1722
    %1865 = vmatmul.f32.gmra.mxu0 %v762
    %v1866 = vpop.f32.mrf.mxu0
    %v1867 = vadd.f32 0.0, %v1866
    %1868 = vdwg.mxu0
    %1869 = vmatpush.msra.mxu0 0.0
    %1870 = vmatpush.msra.mxu0 0.0
    %1871 = vmatpush.msra.mxu0 0.0
    %1872 = vmatpush.msra.mxu0 0.0
    %1873 = vmatpush.msra.mxu0 0.0
    %1874 = vmatpush.msra.mxu0 0.0
    %1875 = vmatpush.msra.mxu0 0.0
    %1876 = vmatpush.msra.mxu0 0.0
    %1877 = vmatpush.msra.mxu0 0.0
    %1878 = vmatpush.msra.mxu0 0.0
    %1879 = vmatpush.msra.mxu0 0.0
    %1880 = vmatpush.msra.mxu0 0.0
    %1881 = vmatpush.msra.mxu0 %v1747
    %1882 = vmatpush.msra.mxu0 %v1739
    %1883 = vmatpush.msra.mxu0 %v1731
    %1884 = vmatpush.msra.mxu0 %v1723
    %1885 = vmatmul.f32.gmra.mxu0 %v762
    %v1886 = vpop.f32.mrf.mxu0
    %v1887 = vadd.f32 0.0, %v1886
    %1888 = vdwg.mxu0
    %1889 = vmatpush.msra.mxu0 0.0
    %1890 = vmatpush.msra.mxu0 0.0
    %1891 = vmatpush.msra.mxu0 0.0
    %1892 = vmatpush.msra.mxu0 0.0
    %1893 = vmatpush.msra.mxu0 0.0
    %1894 = vmatpush.msra.mxu0 0.0
    %1895 = vmatpush.msra.mxu0 0.0
    %1896 = vmatpush.msra.mxu0 0.0
    %1897 = vmatpush.msra.mxu0 0.0
    %1898 = vmatpush.msra.mxu0 0.0
    %1899 = vmatpush.msra.mxu0 0.0
    %1900 = vmatpush.msra.mxu0 0.0
    %1901 = vmatpush.msra.mxu0 %v1748
    %1902 = vmatpush.msra.mxu0 %v1740
    %1903 = vmatpush.msra.mxu0 %v1732
    %1904 = vmatpush.msra.mxu0 %v1724
    %1905 = vmatmul.f32.gmra.mxu0 %v762
    %v1906 = vpop.f32.mrf.mxu0
    %v1907 = vadd.f32 0.0, %v1906
    %1908 = vdwg.mxu0
    %1909 = vmatpush.msra.mxu0 0.0
    %1910 = vmatpush.msra.mxu0 0.0
    %1911 = vmatpush.msra.mxu0 0.0
    %1912 = vmatpush.msra.mxu0 0.0
    %1913 = vmatpush.msra.mxu0 0.0
    %1914 = vmatpush.msra.mxu0 0.0
    %1915 = vmatpush.msra.mxu0 0.0
    %1916 = vmatpush.msra.mxu0 0.0
    %1917 = vmatpush.msra.mxu0 0.0
    %1918 = vmatpush.msra.mxu0 0.0
    %1919 = vmatpush.msra.mxu0 0.0
    %1920 = vmatpush.msra.mxu0 0.0
    %1921 = vmatpush.msra.mxu0 %v1709
    %1922 = vmatpush.msra.mxu0 %v1701
    %1923 = vmatpush.msra.mxu0 %v1693
    %1924 = vmatpush.msra.mxu0 %v1685
    %1925 = vmatmul.f32.gmra.mxu0 %v170
    %v1926 = vpop.f32.mrf.mxu0
    %v1927 = vadd.f32 %v1767, %v1926
    %1928 = vdwg.mxu0
    %1929 = vmatpush.msra.mxu0 0.0
    %1930 = vmatpush.msra.mxu0 0.0
    %1931 = vmatpush.msra.mxu0 0.0
    %1932 = vmatpush.msra.mxu0 0.0
    %1933 = vmatpush.msra.mxu0 0.0
    %1934 = vmatpush.msra.mxu0 0.0
    %1935 = vmatpush.msra.mxu0 0.0
    %1936 = vmatpush.msra.mxu0 0.0
    %1937 = vmatpush.msra.mxu0 0.0
    %1938 = vmatpush.msra.mxu0 0.0
    %1939 = vmatpush.msra.mxu0 0.0
    %1940 = vmatpush.msra.mxu0 0.0
    %1941 = vmatpush.msra.mxu0 %v1710
    %1942 = vmatpush.msra.mxu0 %v1702
    %1943 = vmatpush.msra.mxu0 %v1694
    %1944 = vmatpush.msra.mxu0 %v1686
    %1945 = vmatmul.f32.gmra.mxu0 %v170
    %v1946 = vpop.f32.mrf.mxu0
    %v1947 = vadd.f32 %v1787, %v1946
    %1948 = vdwg.mxu0
    %1949 = vmatpush.msra.mxu0 0.0
    %1950 = vmatpush.msra.mxu0 0.0
    %1951 = vmatpush.msra.mxu0 0.0
    %1952 = vmatpush.msra.mxu0 0.0
    %1953 = vmatpush.msra.mxu0 0.0
    %1954 = vmatpush.msra.mxu0 0.0
    %1955 = vmatpush.msra.mxu0 0.0
    %1956 = vmatpush.msra.mxu0 0.0
    %1957 = vmatpush.msra.mxu0 0.0
    %1958 = vmatpush.msra.mxu0 0.0
    %1959 = vmatpush.msra.mxu0 0.0
    %1960 = vmatpush.msra.mxu0 0.0
    %1961 = vmatpush.msra.mxu0 %v1711
    %1962 = vmatpush.msra.mxu0 %v1703
    %1963 = vmatpush.msra.mxu0 %v1695
    %1964 = vmatpush.msra.mxu0 %v1687
    %1965 = vmatmul.f32.gmra.mxu0 %v170
    %v1966 = vpop.f32.mrf.mxu0
    %v1967 = vadd.f32 %v1807, %v1966
    %1968 = vdwg.mxu0
    %1969 = vmatpush.msra.mxu0 0.0
    %1970 = vmatpush.msra.mxu0 0.0
    %1971 = vmatpush.msra.mxu0 0.0
    %1972 = vmatpush.msra.mxu0 0.0
    %1973 = vmatpush.msra.mxu0 0.0
    %1974 = vmatpush.msra.mxu0 0.0
    %1975 = vmatpush.msra.mxu0 0.0
    %1976 = vmatpush.msra.mxu0 0.0
    %1977 = vmatpush.msra.mxu0 0.0
    %1978 = vmatpush.msra.mxu0 0.0
    %1979 = vmatpush.msra.mxu0 0.0
    %1980 = vmatpush.msra.mxu0 0.0
    %1981 = vmatpush.msra.mxu0 %v1712
    %1982 = vmatpush.msra.mxu0 %v1704
    %1983 = vmatpush.msra.mxu0 %v1696
    %1984 = vmatpush.msra.mxu0 %v1688
    %1985 = vmatmul.f32.gmra.mxu0 %v170
    %v1986 = vpop.f32.mrf.mxu0
    %v1987 = vadd.f32 %v1827, %v1986
    %1988 = vdwg.mxu0
    %1989 = vmatpush.msra.mxu0 0.0
    %1990 = vmatpush.msra.mxu0 0.0
    %1991 = vmatpush.msra.mxu0 0.0
    %1992 = vmatpush.msra.mxu0 0.0
    %1993 = vmatpush.msra.mxu0 0.0
    %1994 = vmatpush.msra.mxu0 0.0
    %1995 = vmatpush.msra.mxu0 0.0
    %1996 = vmatpush.msra.mxu0 0.0
    %1997 = vmatpush.msra.mxu0 0.0
    %1998 = vmatpush.msra.mxu0 0.0
    %1999 = vmatpush.msra.mxu0 0.0
    %2000 = vmatpush.msra.mxu0 0.0
    %2001 = vmatpush.msra.mxu0 %v1713
    %2002 = vmatpush.msra.mxu0 %v1705
    %2003 = vmatpush.msra.mxu0 %v1697
    %2004 = vmatpush.msra.mxu0 %v1689
    %2005 = vmatmul.f32.gmra.mxu0 %v170
    %v2006 = vpop.f32.mrf.mxu0
    %v2007 = vadd.f32 %v1847, %v2006
    %2008 = vdwg.mxu0
    %2009 = vmatpush.msra.mxu0 0.0
    %2010 = vmatpush.msra.mxu0 0.0
    %2011 = vmatpush.msra.mxu0 0.0
    %2012 = vmatpush.msra.mxu0 0.0
    %2013 = vmatpush.msra.mxu0 0.0
    %2014 = vmatpush.msra.mxu0 0.0
    %2015 = vmatpush.msra.mxu0 0.0
    %2016 = vmatpush.msra.mxu0 0.0
    %2017 = vmatpush.msra.mxu0 0.0
    %2018 = vmatpush.msra.mxu0 0.0
    %2019 = vmatpush.msra.mxu0 0.0
    %2020 = vmatpush.msra.mxu0 0.0
    %2021 = vmatpush.msra.mxu0 %v1714
    %2022 = vmatpush.msra.mxu0 %v1706
    %2023 = vmatpush.msra.mxu0 %v1698
    %2024 = vmatpush.msra.mxu0 %v1690
    %2025 = vmatmul.f32.gmra.mxu0 %v170
    %v2026 = vpop.f32.mrf.mxu0
    %v2027 = vadd.f32 %v1867, %v2026
    %2028 = vdwg.mxu0
    %2029 = vmatpush.msra.mxu0 0.0
    %2030 = vmatpush.msra.mxu0 0.0
    %2031 = vmatpush.msra.mxu0 0.0
    %2032 = vmatpush.msra.mxu0 0.0
    %2033 = vmatpush.msra.mxu0 0.0
    %2034 = vmatpush.msra.mxu0 0.0
    %2035 = vmatpush.msra.mxu0 0.0
    %2036 = vmatpush.msra.mxu0 0.0
    %2037 = vmatpush.msra.mxu0 0.0
    %2038 = vmatpush.msra.mxu0 0.0
    %2039 = vmatpush.msra.mxu0 0.0
    %2040 = vmatpush.msra.mxu0 0.0
    %2041 = vmatpush.msra.mxu0 %v1715
    %2042 = vmatpush.msra.mxu0 %v1707
    %2043 = vmatpush.msra.mxu0 %v1699
    %2044 = vmatpush.msra.mxu0 %v1691
    %2045 = vmatmul.f32.gmra.mxu0 %v170
    %v2046 = vpop.f32.mrf.mxu0
    %v2047 = vadd.f32 %v1887, %v2046
    %2048 = vdwg.mxu0
    %2049 = vmatpush.msra.mxu0 0.0
    %2050 = vmatpush.msra.mxu0 0.0
    %2051 = vmatpush.msra.mxu0 0.0
    %2052 = vmatpush.msra.mxu0 0.0
    %2053 = vmatpush.msra.mxu0 0.0
    %2054 = vmatpush.msra.mxu0 0.0
    %2055 = vmatpush.msra.mxu0 0.0
    %2056 = vmatpush.msra.mxu0 0.0
    %2057 = vmatpush.msra.mxu0 0.0
    %2058 = vmatpush.msra.mxu0 0.0
    %2059 = vmatpush.msra.mxu0 0.0
    %2060 = vmatpush.msra.mxu0 0.0
    %2061 = vmatpush.msra.mxu0 %v1716
    %2062 = vmatpush.msra.mxu0 %v1708
    %2063 = vmatpush.msra.mxu0 %v1700
    %2064 = vmatpush.msra.mxu0 %v1692
    %2065 = vmatmul.f32.gmra.mxu0 %v170
    %v2066 = vpop.f32.mrf.mxu0
    %v2067 = vadd.f32 %v1907, %v2066
    %2068 = vdwg.mxu0
    %v2069 = vld [vmem:[#allocation8 + $0x200] sm:$0xff]
    %v2070 = vld [vmem:[#allocation8 + $0x208] sm:$0xff]
    %v2071 = vld [vmem:[#allocation8 + $0x210] sm:$0xff]
    %v2072 = vld [vmem:[#allocation8 + $0x218] sm:$0xff]
    %v2073 = vld [vmem:[#allocation8 + $0x220] sm:$0xff]
    %v2074 = vld [vmem:[#allocation8 + $0x228] sm:$0xff]
    %v2075 = vld [vmem:[#allocation8 + $0x230] sm:$0xff]
    %v2076 = vld [vmem:[#allocation8 + $0x238] sm:$0xff]
    %v2077 = vld [vmem:[#allocation8 + $0x240] sm:$0xff]
    %v2078 = vld [vmem:[#allocation8 + $0x248] sm:$0xff]
    %v2079 = vld [vmem:[#allocation8 + $0x250] sm:$0xff]
    %v2080 = vld [vmem:[#allocation8 + $0x258] sm:$0xff]
    %v2081 = vld [vmem:[#allocation8 + $0x260] sm:$0xff]
    %v2082 = vld [vmem:[#allocation8 + $0x268] sm:$0xff]
    %v2083 = vld [vmem:[#allocation8 + $0x270] sm:$0xff]
    %v2084 = vld [vmem:[#allocation8 + $0x278] sm:$0xff]
    %v2085 = vld [vmem:[#allocation8 + $0x280] sm:$0xff]
    %v2086 = vld [vmem:[#allocation8 + $0x288] sm:$0xff]
    %v2087 = vld [vmem:[#allocation8 + $0x290] sm:$0xff]
    %v2088 = vld [vmem:[#allocation8 + $0x298] sm:$0xff]
    %v2089 = vld [vmem:[#allocation8 + $0x2a0] sm:$0xff]
    %v2090 = vld [vmem:[#allocation8 + $0x2a8] sm:$0xff]
    %v2091 = vld [vmem:[#allocation8 + $0x2b0] sm:$0xff]
    %v2092 = vld [vmem:[#allocation8 + $0x2b8] sm:$0xff]
    %v2093 = vld [vmem:[#allocation8 + $0x2c0] sm:$0xff]
    %v2094 = vld [vmem:[#allocation8 + $0x2c8] sm:$0xff]
    %v2095 = vld [vmem:[#allocation8 + $0x2d0] sm:$0xff]
    %v2096 = vld [vmem:[#allocation8 + $0x2d8] sm:$0xff]
    %v2097 = vld [vmem:[#allocation8 + $0x2e0] sm:$0xff]
    %v2098 = vld [vmem:[#allocation8 + $0x2e8] sm:$0xff]
    %v2099 = vld [vmem:[#allocation8 + $0x2f0] sm:$0xff]
    %v2100 = vld [vmem:[#allocation8 + $0x2f8] sm:$0xff]
    %v2101 = vrot.slane %v116, 2
    %v2102 = vsel %vm168, %v2101, 0
    %2104 = vmatpush.msra.mxu0 0.0
    %2105 = vmatpush.msra.mxu0 0.0
    %2106 = vmatpush.msra.mxu0 0.0
    %2107 = vmatpush.msra.mxu0 0.0
    %2108 = vmatpush.msra.mxu0 0.0
    %2109 = vmatpush.msra.mxu0 0.0
    %2110 = vmatpush.msra.mxu0 0.0
    %2111 = vmatpush.msra.mxu0 0.0
    %2112 = vmatpush.msra.mxu0 0.0
    %2113 = vmatpush.msra.mxu0 0.0
    %2114 = vmatpush.msra.mxu0 0.0
    %2115 = vmatpush.msra.mxu0 0.0
    %2116 = vmatpush.msra.mxu0 %v2093
    %2117 = vmatpush.msra.mxu0 %v2085
    %2118 = vmatpush.msra.mxu0 %v2077
    %2119 = vmatpush.msra.mxu0 %v2069
    %2120 = vmatmul.f32.gmra.mxu0 %v2102
    %v2121 = vpop.f32.mrf.mxu0
    %v2122 = vadd.f32 0.0, %v2121
    %2123 = vdwg.mxu0
    %2124 = vmatpush.msra.mxu0 0.0
    %2125 = vmatpush.msra.mxu0 0.0
    %2126 = vmatpush.msra.mxu0 0.0
    %2127 = vmatpush.msra.mxu0 0.0
    %2128 = vmatpush.msra.mxu0 0.0
    %2129 = vmatpush.msra.mxu0 0.0
    %2130 = vmatpush.msra.mxu0 0.0
    %2131 = vmatpush.msra.mxu0 0.0
    %2132 = vmatpush.msra.mxu0 0.0
    %2133 = vmatpush.msra.mxu0 0.0
    %2134 = vmatpush.msra.mxu0 0.0
    %2135 = vmatpush.msra.mxu0 0.0
    %2136 = vmatpush.msra.mxu0 %v2094
    %2137 = vmatpush.msra.mxu0 %v2086
    %2138 = vmatpush.msra.mxu0 %v2078
    %2139 = vmatpush.msra.mxu0 %v2070
    %2140 = vmatmul.f32.gmra.mxu0 %v2102
    %v2141 = vpop.f32.mrf.mxu0
    %v2142 = vadd.f32 0.0, %v2141
    %2143 = vdwg.mxu0
    %2144 = vmatpush.msra.mxu0 0.0
    %2145 = vmatpush.msra.mxu0 0.0
    %2146 = vmatpush.msra.mxu0 0.0
    %2147 = vmatpush.msra.mxu0 0.0
    %2148 = vmatpush.msra.mxu0 0.0
    %2149 = vmatpush.msra.mxu0 0.0
    %2150 = vmatpush.msra.mxu0 0.0
    %2151 = vmatpush.msra.mxu0 0.0
    %2152 = vmatpush.msra.mxu0 0.0
    %2153 = vmatpush.msra.mxu0 0.0
    %2154 = vmatpush.msra.mxu0 0.0
    %2155 = vmatpush.msra.mxu0 0.0
    %2156 = vmatpush.msra.mxu0 %v2095
    %2157 = vmatpush.msra.mxu0 %v2087
    %2158 = vmatpush.msra.mxu0 %v2079
    %2159 = vmatpush.msra.mxu0 %v2071
    %2160 = vmatmul.f32.gmra.mxu0 %v2102
    %v2161 = vpop.f32.mrf.mxu0
    %v2162 = vadd.f32 0.0, %v2161
    %2163 = vdwg.mxu0
    %2164 = vmatpush.msra.mxu0 0.0
    %2165 = vmatpush.msra.mxu0 0.0
    %2166 = vmatpush.msra.mxu0 0.0
    %2167 = vmatpush.msra.mxu0 0.0
    %2168 = vmatpush.msra.mxu0 0.0
    %2169 = vmatpush.msra.mxu0 0.0
    %2170 = vmatpush.msra.mxu0 0.0
    %2171 = vmatpush.msra.mxu0 0.0
    %2172 = vmatpush.msra.mxu0 0.0
    %2173 = vmatpush.msra.mxu0 0.0
    %2174 = vmatpush.msra.mxu0 0.0
    %2175 = vmatpush.msra.mxu0 0.0
    %2176 = vmatpush.msra.mxu0 %v2096
    %2177 = vmatpush.msra.mxu0 %v2088
    %2178 = vmatpush.msra.mxu0 %v2080
    %2179 = vmatpush.msra.mxu0 %v2072
    %2180 = vmatmul.f32.gmra.mxu0 %v2102
    %v2181 = vpop.f32.mrf.mxu0
    %v2182 = vadd.f32 0.0, %v2181
    %2183 = vdwg.mxu0
    %2184 = vmatpush.msra.mxu0 0.0
    %2185 = vmatpush.msra.mxu0 0.0
    %2186 = vmatpush.msra.mxu0 0.0
    %2187 = vmatpush.msra.mxu0 0.0
    %2188 = vmatpush.msra.mxu0 0.0
    %2189 = vmatpush.msra.mxu0 0.0
    %2190 = vmatpush.msra.mxu0 0.0
    %2191 = vmatpush.msra.mxu0 0.0
    %2192 = vmatpush.msra.mxu0 0.0
    %2193 = vmatpush.msra.mxu0 0.0
    %2194 = vmatpush.msra.mxu0 0.0
    %2195 = vmatpush.msra.mxu0 0.0
    %2196 = vmatpush.msra.mxu0 %v2097
    %2197 = vmatpush.msra.mxu0 %v2089
    %2198 = vmatpush.msra.mxu0 %v2081
    %2199 = vmatpush.msra.mxu0 %v2073
    %2200 = vmatmul.f32.gmra.mxu0 %v2102
    %v2201 = vpop.f32.mrf.mxu0
    %v2202 = vadd.f32 0.0, %v2201
    %2203 = vdwg.mxu0
    %2204 = vmatpush.msra.mxu0 0.0
    %2205 = vmatpush.msra.mxu0 0.0
    %2206 = vmatpush.msra.mxu0 0.0
    %2207 = vmatpush.msra.mxu0 0.0
    %2208 = vmatpush.msra.mxu0 0.0
    %2209 = vmatpush.msra.mxu0 0.0
    %2210 = vmatpush.msra.mxu0 0.0
    %2211 = vmatpush.msra.mxu0 0.0
    %2212 = vmatpush.msra.mxu0 0.0
    %2213 = vmatpush.msra.mxu0 0.0
    %2214 = vmatpush.msra.mxu0 0.0
    %2215 = vmatpush.msra.mxu0 0.0
    %2216 = vmatpush.msra.mxu0 %v2098
    %2217 = vmatpush.msra.mxu0 %v2090
    %2218 = vmatpush.msra.mxu0 %v2082
    %2219 = vmatpush.msra.mxu0 %v2074
    %2220 = vmatmul.f32.gmra.mxu0 %v2102
    %v2221 = vpop.f32.mrf.mxu0
    %v2222 = vadd.f32 0.0, %v2221
    %2223 = vdwg.mxu0
    %2224 = vmatpush.msra.mxu0 0.0
    %2225 = vmatpush.msra.mxu0 0.0
    %2226 = vmatpush.msra.mxu0 0.0
    %2227 = vmatpush.msra.mxu0 0.0
    %2228 = vmatpush.msra.mxu0 0.0
    %2229 = vmatpush.msra.mxu0 0.0
    %2230 = vmatpush.msra.mxu0 0.0
    %2231 = vmatpush.msra.mxu0 0.0
    %2232 = vmatpush.msra.mxu0 0.0
    %2233 = vmatpush.msra.mxu0 0.0
    %2234 = vmatpush.msra.mxu0 0.0
    %2235 = vmatpush.msra.mxu0 0.0
    %2236 = vmatpush.msra.mxu0 %v2099
    %2237 = vmatpush.msra.mxu0 %v2091
    %2238 = vmatpush.msra.mxu0 %v2083
    %2239 = vmatpush.msra.mxu0 %v2075
    %2240 = vmatmul.f32.gmra.mxu0 %v2102
    %v2241 = vpop.f32.mrf.mxu0
    %v2242 = vadd.f32 0.0, %v2241
    %2243 = vdwg.mxu0
    %2244 = vmatpush.msra.mxu0 0.0
    %2245 = vmatpush.msra.mxu0 0.0
    %2246 = vmatpush.msra.mxu0 0.0
    %2247 = vmatpush.msra.mxu0 0.0
    %2248 = vmatpush.msra.mxu0 0.0
    %2249 = vmatpush.msra.mxu0 0.0
    %2250 = vmatpush.msra.mxu0 0.0
    %2251 = vmatpush.msra.mxu0 0.0
    %2252 = vmatpush.msra.mxu0 0.0
    %2253 = vmatpush.msra.mxu0 0.0
    %2254 = vmatpush.msra.mxu0 0.0
    %2255 = vmatpush.msra.mxu0 0.0
    %2256 = vmatpush.msra.mxu0 %v2100
    %2257 = vmatpush.msra.mxu0 %v2092
    %2258 = vmatpush.msra.mxu0 %v2084
    %2259 = vmatpush.msra.mxu0 %v2076
    %2260 = vmatmul.f32.gmra.mxu0 %v2102
    %v2261 = vpop.f32.mrf.mxu0
    %v2262 = vadd.f32 0.0, %v2261
    %2263 = vdwg.mxu0
    %v2264 = vadd.f32 %v1927, %v2122
    %v2265 = vadd.f32 %v1947, %v2142
    %v2266 = vadd.f32 %v1967, %v2162
    %v2267 = vadd.f32 %v1987, %v2182
    %v2268 = vadd.f32 %v2007, %v2202
    %v2269 = vadd.f32 %v2027, %v2222
    %v2270 = vadd.f32 %v2047, %v2242
    %v2271 = vadd.f32 %v2067, %v2262
    %v2273 = vperm.slane %v1684, 0
    %v2274 = vperm.slane %v1684, 1
    %v2275 = vperm.slane %v1684, 2
    %v2276 = vperm.slane %v1684, 3
    %v2277 = vperm.slane %v1684, 4
    %v2278 = vperm.slane %v1684, 5
    %v2279 = vperm.slane %v1684, 6
    %v2280 = vperm.slane %v1684, 7
    %v2289 = vadd.f32 %v2264, %v2273
    %v2290 = vadd.f32 %v2265, %v2274
    %v2291 = vadd.f32 %v2266, %v2275
    %v2292 = vadd.f32 %v2267, %v2276
    %v2293 = vadd.f32 %v2268, %v2277
    %v2294 = vadd.f32 %v2269, %v2278
    %v2295 = vadd.f32 %v2270, %v2279
    %v2296 = vadd.f32 %v2271, %v2280
    %v2297 = vtanh.pop %v2289
    %v2298 = vtanh.pop %v2290
    %v2299 = vtanh.pop %v2291
    %v2300 = vtanh.pop %v2292
    %v2301 = vtanh.pop %v2293
    %v2302 = vtanh.pop %v2294
    %v2303 = vtanh.pop %v2295
    %v2304 = vtanh.pop %v2296
    %vm2305 = vcmask 1045504
    %v2306 = vsel %vm2305, %v2297, -inf
    %v2307 = vrot.slane %v2306, 4
    %v2308 = vmax.f32 %v2306, %v2307
    %v2309 = vrot.slane %v2308, 2
    %v2310 = vmax.f32 %v2308, %v2309
    %v2311 = vrot.slane %v2310, 1
    %v2312 = vmax.f32 %v2310, %v2311
    %v2313 = vsel %vm2305, %v2298, -inf
    %v2314 = vrot.slane %v2313, 4
    %v2315 = vmax.f32 %v2313, %v2314
    %v2316 = vrot.slane %v2315, 2
    %v2317 = vmax.f32 %v2315, %v2316
    %v2318 = vrot.slane %v2317, 1
    %v2319 = vmax.f32 %v2317, %v2318
    %v2320 = vsel %vm2305, %v2299, -inf
    %v2321 = vrot.slane %v2320, 4
    %v2322 = vmax.f32 %v2320, %v2321
    %v2323 = vrot.slane %v2322, 2
    %v2324 = vmax.f32 %v2322, %v2323
    %v2325 = vrot.slane %v2324, 1
    %v2326 = vmax.f32 %v2324, %v2325
    %v2327 = vsel %vm2305, %v2300, -inf
    %v2328 = vrot.slane %v2327, 4
    %v2329 = vmax.f32 %v2327, %v2328
    %v2330 = vrot.slane %v2329, 2
    %v2331 = vmax.f32 %v2329, %v2330
    %v2332 = vrot.slane %v2331, 1
    %v2333 = vmax.f32 %v2331, %v2332
    %v2334 = vsel %vm2305, %v2301, -inf
    %v2335 = vrot.slane %v2334, 4
    %v2336 = vmax.f32 %v2334, %v2335
    %v2337 = vrot.slane %v2336, 2
    %v2338 = vmax.f32 %v2336, %v2337
    %v2339 = vrot.slane %v2338, 1
    %v2340 = vmax.f32 %v2338, %v2339
    %v2341 = vsel %vm2305, %v2302, -inf
    %v2342 = vrot.slane %v2341, 4
    %v2343 = vmax.f32 %v2341, %v2342
    %v2344 = vrot.slane %v2343, 2
    %v2345 = vmax.f32 %v2343, %v2344
    %v2346 = vrot.slane %v2345, 1
    %v2347 = vmax.f32 %v2345, %v2346
    %v2348 = vsel %vm2305, %v2303, -inf
    %v2349 = vrot.slane %v2348, 4
    %v2350 = vmax.f32 %v2348, %v2349
    %v2351 = vrot.slane %v2350, 2
    %v2352 = vmax.f32 %v2350, %v2351
    %v2353 = vrot.slane %v2352, 1
    %v2354 = vmax.f32 %v2352, %v2353
    %v2355 = vsel %vm2305, %v2304, -inf
    %v2356 = vrot.slane %v2355, 4
    %v2357 = vmax.f32 %v2355, %v2356
    %v2358 = vrot.slane %v2357, 2
    %v2359 = vmax.f32 %v2357, %v2358
    %v2360 = vrot.slane %v2359, 1
    %v2361 = vmax.f32 %v2359, %v2360
    %v2370 = vrot.slane %v2319, 7
    %v2371 = vrot.slane %v2326, 6
    %v2372 = vrot.slane %v2333, 5
    %v2373 = vrot.slane %v2340, 4
    %v2374 = vrot.slane %v2347, 3
    %v2375 = vrot.slane %v2354, 2
    %v2376 = vrot.slane %v2361, 1
    %v2377 = vsel %vm403, %v2312, %v2370
    %v2378 = vsel %vm405, %v2371, %v2372
    %v2379 = vsel %vm407, %v2377, %v2378
    %v2380 = vsel %vm409, %v2373, %v2374
    %v2381 = vsel %vm411, %v2375, %v2376
    %v2382 = vsel %vm413, %v2380, %v2381
    %v2383 = vsel %vm415, %v2379, %v2382
    %s2385 = scalar_lea.vmem [#allocation13], 2
    %2386 = vst [vmem:[%s2385] ss:$4 sm:$0xff] %v2383
    %v2387 = vld [vmem:[#allocation8] sm:$0xff]
    %v2388 = vld [vmem:[#allocation8 + $0x8] sm:$0xff]
    %v2389 = vld [vmem:[#allocation8 + $0x10] sm:$0xff]
    %v2390 = vld [vmem:[#allocation8 + $0x18] sm:$0xff]
    %v2391 = vld [vmem:[#allocation8 + $0x20] sm:$0xff]
    %v2392 = vld [vmem:[#allocation8 + $0x28] sm:$0xff]
    %v2393 = vld [vmem:[#allocation8 + $0x30] sm:$0xff]
    %v2394 = vld [vmem:[#allocation8 + $0x38] sm:$0xff]
    %v2395 = vld [vmem:[#allocation8 + $0x40] sm:$0xff]
    %v2396 = vld [vmem:[#allocation8 + $0x48] sm:$0xff]
    %v2397 = vld [vmem:[#allocation8 + $0x50] sm:$0xff]
    %v2398 = vld [vmem:[#allocation8 + $0x58] sm:$0xff]
    %v2399 = vld [vmem:[#allocation8 + $0x60] sm:$0xff]
    %v2400 = vld [vmem:[#allocation8 + $0x68] sm:$0xff]
    %v2401 = vld [vmem:[#allocation8 + $0x70] sm:$0xff]
    %v2402 = vld [vmem:[#allocation8 + $0x78] sm:$0xff]
    %v2403 = vld [vmem:[#allocation8 + $0x80] sm:$0xff]
    %v2404 = vld [vmem:[#allocation8 + $0x88] sm:$0xff]
    %v2405 = vld [vmem:[#allocation8 + $0x90] sm:$0xff]
    %v2406 = vld [vmem:[#allocation8 + $0x98] sm:$0xff]
    %v2407 = vld [vmem:[#allocation8 + $0xa0] sm:$0xff]
    %v2408 = vld [vmem:[#allocation8 + $0xa8] sm:$0xff]
    %v2409 = vld [vmem:[#allocation8 + $0xb0] sm:$0xff]
    %v2410 = vld [vmem:[#allocation8 + $0xb8] sm:$0xff]
    %v2411 = vld [vmem:[#allocation8 + $0xc0] sm:$0xff]
    %v2412 = vld [vmem:[#allocation8 + $0xc8] sm:$0xff]
    %v2413 = vld [vmem:[#allocation8 + $0xd0] sm:$0xff]
    %v2414 = vld [vmem:[#allocation8 + $0xd8] sm:$0xff]
    %v2415 = vld [vmem:[#allocation8 + $0xe0] sm:$0xff]
    %v2416 = vld [vmem:[#allocation8 + $0xe8] sm:$0xff]
    %v2417 = vld [vmem:[#allocation8 + $0xf0] sm:$0xff]
    %v2418 = vld [vmem:[#allocation8 + $0xf8] sm:$0xff]
    %v2419 = vld [vmem:[#allocation8 + $0x100] sm:$0xff]
    %v2420 = vld [vmem:[#allocation8 + $0x108] sm:$0xff]
    %v2421 = vld [vmem:[#allocation8 + $0x110] sm:$0xff]
    %v2422 = vld [vmem:[#allocation8 + $0x118] sm:$0xff]
    %v2423 = vld [vmem:[#allocation8 + $0x120] sm:$0xff]
    %v2424 = vld [vmem:[#allocation8 + $0x128] sm:$0xff]
    %v2425 = vld [vmem:[#allocation8 + $0x130] sm:$0xff]
    %v2426 = vld [vmem:[#allocation8 + $0x138] sm:$0xff]
    %v2427 = vld [vmem:[#allocation8 + $0x140] sm:$0xff]
    %v2428 = vld [vmem:[#allocation8 + $0x148] sm:$0xff]
    %v2429 = vld [vmem:[#allocation8 + $0x150] sm:$0xff]
    %v2430 = vld [vmem:[#allocation8 + $0x158] sm:$0xff]
    %v2431 = vld [vmem:[#allocation8 + $0x160] sm:$0xff]
    %v2432 = vld [vmem:[#allocation8 + $0x168] sm:$0xff]
    %v2433 = vld [vmem:[#allocation8 + $0x170] sm:$0xff]
    %v2434 = vld [vmem:[#allocation8 + $0x178] sm:$0xff]
    %v2435 = vld [vmem:[#allocation8 + $0x180] sm:$0xff]
    %v2436 = vld [vmem:[#allocation8 + $0x188] sm:$0xff]
    %v2437 = vld [vmem:[#allocation8 + $0x190] sm:$0xff]
    %v2438 = vld [vmem:[#allocation8 + $0x198] sm:$0xff]
    %v2439 = vld [vmem:[#allocation8 + $0x1a0] sm:$0xff]
    %v2440 = vld [vmem:[#allocation8 + $0x1a8] sm:$0xff]
    %v2441 = vld [vmem:[#allocation8 + $0x1b0] sm:$0xff]
    %v2442 = vld [vmem:[#allocation8 + $0x1b8] sm:$0xff]
    %v2443 = vld [vmem:[#allocation8 + $0x1c0] sm:$0xff]
    %v2444 = vld [vmem:[#allocation8 + $0x1c8] sm:$0xff]
    %v2445 = vld [vmem:[#allocation8 + $0x1d0] sm:$0xff]
    %v2446 = vld [vmem:[#allocation8 + $0x1d8] sm:$0xff]
    %v2447 = vld [vmem:[#allocation8 + $0x1e0] sm:$0xff]
    %v2448 = vld [vmem:[#allocation8 + $0x1e8] sm:$0xff]
    %v2449 = vld [vmem:[#allocation8 + $0x1f0] sm:$0xff]
    %v2450 = vld [vmem:[#allocation8 + $0x1f8] sm:$0xff]
    %2451 = vmatpush.msra.mxu0 0.0
    %2452 = vmatpush.msra.mxu0 0.0
    %2453 = vmatpush.msra.mxu0 0.0
    %2454 = vmatpush.msra.mxu0 0.0
    %2455 = vmatpush.msra.mxu0 0.0
    %2456 = vmatpush.msra.mxu0 0.0
    %2457 = vmatpush.msra.mxu0 0.0
    %2458 = vmatpush.msra.mxu0 0.0
    %2459 = vmatpush.msra.mxu0 0.0
    %2460 = vmatpush.msra.mxu0 0.0
    %2461 = vmatpush.msra.mxu0 0.0
    %2462 = vmatpush.msra.mxu0 0.0
    %2463 = vmatpush.msra.mxu0 %v2443
    %2464 = vmatpush.msra.mxu0 %v2435
    %2465 = vmatpush.msra.mxu0 %v2427
    %2466 = vmatpush.msra.mxu0 %v2419
    %2467 = vmatmul.f32.gmra.mxu0 %v1264
    %v2468 = vpop.f32.mrf.mxu0
    %v2469 = vadd.f32 0.0, %v2468
    %2470 = vdwg.mxu0
    %2471 = vmatpush.msra.mxu0 0.0
    %2472 = vmatpush.msra.mxu0 0.0
    %2473 = vmatpush.msra.mxu0 0.0
    %2474 = vmatpush.msra.mxu0 0.0
    %2475 = vmatpush.msra.mxu0 0.0
    %2476 = vmatpush.msra.mxu0 0.0
    %2477 = vmatpush.msra.mxu0 0.0
    %2478 = vmatpush.msra.mxu0 0.0
    %2479 = vmatpush.msra.mxu0 0.0
    %2480 = vmatpush.msra.mxu0 0.0
    %2481 = vmatpush.msra.mxu0 0.0
    %2482 = vmatpush.msra.mxu0 0.0
    %2483 = vmatpush.msra.mxu0 %v2444
    %2484 = vmatpush.msra.mxu0 %v2436
    %2485 = vmatpush.msra.mxu0 %v2428
    %2486 = vmatpush.msra.mxu0 %v2420
    %2487 = vmatmul.f32.gmra.mxu0 %v1264
    %v2488 = vpop.f32.mrf.mxu0
    %v2489 = vadd.f32 0.0, %v2488
    %2490 = vdwg.mxu0
    %2491 = vmatpush.msra.mxu0 0.0
    %2492 = vmatpush.msra.mxu0 0.0
    %2493 = vmatpush.msra.mxu0 0.0
    %2494 = vmatpush.msra.mxu0 0.0
    %2495 = vmatpush.msra.mxu0 0.0
    %2496 = vmatpush.msra.mxu0 0.0
    %2497 = vmatpush.msra.mxu0 0.0
    %2498 = vmatpush.msra.mxu0 0.0
    %2499 = vmatpush.msra.mxu0 0.0
    %2500 = vmatpush.msra.mxu0 0.0
    %2501 = vmatpush.msra.mxu0 0.0
    %2502 = vmatpush.msra.mxu0 0.0
    %2503 = vmatpush.msra.mxu0 %v2445
    %2504 = vmatpush.msra.mxu0 %v2437
    %2505 = vmatpush.msra.mxu0 %v2429
    %2506 = vmatpush.msra.mxu0 %v2421
    %2507 = vmatmul.f32.gmra.mxu0 %v1264
    %v2508 = vpop.f32.mrf.mxu0
    %v2509 = vadd.f32 0.0, %v2508
    %2510 = vdwg.mxu0
    %2511 = vmatpush.msra.mxu0 0.0
    %2512 = vmatpush.msra.mxu0 0.0
    %2513 = vmatpush.msra.mxu0 0.0
    %2514 = vmatpush.msra.mxu0 0.0
    %2515 = vmatpush.msra.mxu0 0.0
    %2516 = vmatpush.msra.mxu0 0.0
    %2517 = vmatpush.msra.mxu0 0.0
    %2518 = vmatpush.msra.mxu0 0.0
    %2519 = vmatpush.msra.mxu0 0.0
    %2520 = vmatpush.msra.mxu0 0.0
    %2521 = vmatpush.msra.mxu0 0.0
    %2522 = vmatpush.msra.mxu0 0.0
    %2523 = vmatpush.msra.mxu0 %v2446
    %2524 = vmatpush.msra.mxu0 %v2438
    %2525 = vmatpush.msra.mxu0 %v2430
    %2526 = vmatpush.msra.mxu0 %v2422
    %2527 = vmatmul.f32.gmra.mxu0 %v1264
    %v2528 = vpop.f32.mrf.mxu0
    %v2529 = vadd.f32 0.0, %v2528
    %2530 = vdwg.mxu0
    %2531 = vmatpush.msra.mxu0 0.0
    %2532 = vmatpush.msra.mxu0 0.0
    %2533 = vmatpush.msra.mxu0 0.0
    %2534 = vmatpush.msra.mxu0 0.0
    %2535 = vmatpush.msra.mxu0 0.0
    %2536 = vmatpush.msra.mxu0 0.0
    %2537 = vmatpush.msra.mxu0 0.0
    %2538 = vmatpush.msra.mxu0 0.0
    %2539 = vmatpush.msra.mxu0 0.0
    %2540 = vmatpush.msra.mxu0 0.0
    %2541 = vmatpush.msra.mxu0 0.0
    %2542 = vmatpush.msra.mxu0 0.0
    %2543 = vmatpush.msra.mxu0 %v2447
    %2544 = vmatpush.msra.mxu0 %v2439
    %2545 = vmatpush.msra.mxu0 %v2431
    %2546 = vmatpush.msra.mxu0 %v2423
    %2547 = vmatmul.f32.gmra.mxu0 %v1264
    %v2548 = vpop.f32.mrf.mxu0
    %v2549 = vadd.f32 0.0, %v2548
    %2550 = vdwg.mxu0
    %2551 = vmatpush.msra.mxu0 0.0
    %2552 = vmatpush.msra.mxu0 0.0
    %2553 = vmatpush.msra.mxu0 0.0
    %2554 = vmatpush.msra.mxu0 0.0
    %2555 = vmatpush.msra.mxu0 0.0
    %2556 = vmatpush.msra.mxu0 0.0
    %2557 = vmatpush.msra.mxu0 0.0
    %2558 = vmatpush.msra.mxu0 0.0
    %2559 = vmatpush.msra.mxu0 0.0
    %2560 = vmatpush.msra.mxu0 0.0
    %2561 = vmatpush.msra.mxu0 0.0
    %2562 = vmatpush.msra.mxu0 0.0
    %2563 = vmatpush.msra.mxu0 %v2448
    %2564 = vmatpush.msra.mxu0 %v2440
    %2565 = vmatpush.msra.mxu0 %v2432
    %2566 = vmatpush.msra.mxu0 %v2424
    %2567 = vmatmul.f32.gmra.mxu0 %v1264
    %v2568 = vpop.f32.mrf.mxu0
    %v2569 = vadd.f32 0.0, %v2568
    %2570 = vdwg.mxu0
    %2571 = vmatpush.msra.mxu0 0.0
    %2572 = vmatpush.msra.mxu0 0.0
    %2573 = vmatpush.msra.mxu0 0.0
    %2574 = vmatpush.msra.mxu0 0.0
    %2575 = vmatpush.msra.mxu0 0.0
    %2576 = vmatpush.msra.mxu0 0.0
    %2577 = vmatpush.msra.mxu0 0.0
    %2578 = vmatpush.msra.mxu0 0.0
    %2579 = vmatpush.msra.mxu0 0.0
    %2580 = vmatpush.msra.mxu0 0.0
    %2581 = vmatpush.msra.mxu0 0.0
    %2582 = vmatpush.msra.mxu0 0.0
    %2583 = vmatpush.msra.mxu0 %v2449
    %2584 = vmatpush.msra.mxu0 %v2441
    %2585 = vmatpush.msra.mxu0 %v2433
    %2586 = vmatpush.msra.mxu0 %v2425
    %2587 = vmatmul.f32.gmra.mxu0 %v1264
    %v2588 = vpop.f32.mrf.mxu0
    %v2589 = vadd.f32 0.0, %v2588
    %2590 = vdwg.mxu0
    %2591 = vmatpush.msra.mxu0 0.0
    %2592 = vmatpush.msra.mxu0 0.0
    %2593 = vmatpush.msra.mxu0 0.0
    %2594 = vmatpush.msra.mxu0 0.0
    %2595 = vmatpush.msra.mxu0 0.0
    %2596 = vmatpush.msra.mxu0 0.0
    %2597 = vmatpush.msra.mxu0 0.0
    %2598 = vmatpush.msra.mxu0 0.0
    %2599 = vmatpush.msra.mxu0 0.0
    %2600 = vmatpush.msra.mxu0 0.0
    %2601 = vmatpush.msra.mxu0 0.0
    %2602 = vmatpush.msra.mxu0 0.0
    %2603 = vmatpush.msra.mxu0 %v2450
    %2604 = vmatpush.msra.mxu0 %v2442
    %2605 = vmatpush.msra.mxu0 %v2434
    %2606 = vmatpush.msra.mxu0 %v2426
    %2607 = vmatmul.f32.gmra.mxu0 %v1264
    %v2608 = vpop.f32.mrf.mxu0
    %v2609 = vadd.f32 0.0, %v2608
    %2610 = vdwg.mxu0
    %2611 = vmatpush.msra.mxu0 0.0
    %2612 = vmatpush.msra.mxu0 0.0
    %2613 = vmatpush.msra.mxu0 0.0
    %2614 = vmatpush.msra.mxu0 0.0
    %2615 = vmatpush.msra.mxu0 0.0
    %2616 = vmatpush.msra.mxu0 0.0
    %2617 = vmatpush.msra.mxu0 0.0
    %2618 = vmatpush.msra.mxu0 0.0
    %2619 = vmatpush.msra.mxu0 0.0
    %2620 = vmatpush.msra.mxu0 0.0
    %2621 = vmatpush.msra.mxu0 0.0
    %2622 = vmatpush.msra.mxu0 0.0
    %2623 = vmatpush.msra.mxu0 %v2411
    %2624 = vmatpush.msra.mxu0 %v2403
    %2625 = vmatpush.msra.mxu0 %v2395
    %2626 = vmatpush.msra.mxu0 %v2387
    %2627 = vmatmul.f32.gmra.mxu0 %v452
    %v2628 = vpop.f32.mrf.mxu0
    %v2629 = vadd.f32 %v2469, %v2628
    %2630 = vdwg.mxu0
    %2631 = vmatpush.msra.mxu0 0.0
    %2632 = vmatpush.msra.mxu0 0.0
    %2633 = vmatpush.msra.mxu0 0.0
    %2634 = vmatpush.msra.mxu0 0.0
    %2635 = vmatpush.msra.mxu0 0.0
    %2636 = vmatpush.msra.mxu0 0.0
    %2637 = vmatpush.msra.mxu0 0.0
    %2638 = vmatpush.msra.mxu0 0.0
    %2639 = vmatpush.msra.mxu0 0.0
    %2640 = vmatpush.msra.mxu0 0.0
    %2641 = vmatpush.msra.mxu0 0.0
    %2642 = vmatpush.msra.mxu0 0.0
    %2643 = vmatpush.msra.mxu0 %v2412
    %2644 = vmatpush.msra.mxu0 %v2404
    %2645 = vmatpush.msra.mxu0 %v2396
    %2646 = vmatpush.msra.mxu0 %v2388
    %2647 = vmatmul.f32.gmra.mxu0 %v452
    %v2648 = vpop.f32.mrf.mxu0
    %v2649 = vadd.f32 %v2489, %v2648
    %2650 = vdwg.mxu0
    %2651 = vmatpush.msra.mxu0 0.0
    %2652 = vmatpush.msra.mxu0 0.0
    %2653 = vmatpush.msra.mxu0 0.0
    %2654 = vmatpush.msra.mxu0 0.0
    %2655 = vmatpush.msra.mxu0 0.0
    %2656 = vmatpush.msra.mxu0 0.0
    %2657 = vmatpush.msra.mxu0 0.0
    %2658 = vmatpush.msra.mxu0 0.0
    %2659 = vmatpush.msra.mxu0 0.0
    %2660 = vmatpush.msra.mxu0 0.0
    %2661 = vmatpush.msra.mxu0 0.0
    %2662 = vmatpush.msra.mxu0 0.0
    %2663 = vmatpush.msra.mxu0 %v2413
    %2664 = vmatpush.msra.mxu0 %v2405
    %2665 = vmatpush.msra.mxu0 %v2397
    %2666 = vmatpush.msra.mxu0 %v2389
    %2667 = vmatmul.f32.gmra.mxu0 %v452
    %v2668 = vpop.f32.mrf.mxu0
    %v2669 = vadd.f32 %v2509, %v2668
    %2670 = vdwg.mxu0
    %2671 = vmatpush.msra.mxu0 0.0
    %2672 = vmatpush.msra.mxu0 0.0
    %2673 = vmatpush.msra.mxu0 0.0
    %2674 = vmatpush.msra.mxu0 0.0
    %2675 = vmatpush.msra.mxu0 0.0
    %2676 = vmatpush.msra.mxu0 0.0
    %2677 = vmatpush.msra.mxu0 0.0
    %2678 = vmatpush.msra.mxu0 0.0
    %2679 = vmatpush.msra.mxu0 0.0
    %2680 = vmatpush.msra.mxu0 0.0
    %2681 = vmatpush.msra.mxu0 0.0
    %2682 = vmatpush.msra.mxu0 0.0
    %2683 = vmatpush.msra.mxu0 %v2414
    %2684 = vmatpush.msra.mxu0 %v2406
    %2685 = vmatpush.msra.mxu0 %v2398
    %2686 = vmatpush.msra.mxu0 %v2390
    %2687 = vmatmul.f32.gmra.mxu0 %v452
    %v2688 = vpop.f32.mrf.mxu0
    %v2689 = vadd.f32 %v2529, %v2688
    %2690 = vdwg.mxu0
    %2691 = vmatpush.msra.mxu0 0.0
    %2692 = vmatpush.msra.mxu0 0.0
    %2693 = vmatpush.msra.mxu0 0.0
    %2694 = vmatpush.msra.mxu0 0.0
    %2695 = vmatpush.msra.mxu0 0.0
    %2696 = vmatpush.msra.mxu0 0.0
    %2697 = vmatpush.msra.mxu0 0.0
    %2698 = vmatpush.msra.mxu0 0.0
    %2699 = vmatpush.msra.mxu0 0.0
    %2700 = vmatpush.msra.mxu0 0.0
    %2701 = vmatpush.msra.mxu0 0.0
    %2702 = vmatpush.msra.mxu0 0.0
    %2703 = vmatpush.msra.mxu0 %v2415
    %2704 = vmatpush.msra.mxu0 %v2407
    %2705 = vmatpush.msra.mxu0 %v2399
    %2706 = vmatpush.msra.mxu0 %v2391
    %2707 = vmatmul.f32.gmra.mxu0 %v452
    %v2708 = vpop.f32.mrf.mxu0
    %v2709 = vadd.f32 %v2549, %v2708
    %2710 = vdwg.mxu0
    %2711 = vmatpush.msra.mxu0 0.0
    %2712 = vmatpush.msra.mxu0 0.0
    %2713 = vmatpush.msra.mxu0 0.0
    %2714 = vmatpush.msra.mxu0 0.0
    %2715 = vmatpush.msra.mxu0 0.0
    %2716 = vmatpush.msra.mxu0 0.0
    %2717 = vmatpush.msra.mxu0 0.0
    %2718 = vmatpush.msra.mxu0 0.0
    %2719 = vmatpush.msra.mxu0 0.0
    %2720 = vmatpush.msra.mxu0 0.0
    %2721 = vmatpush.msra.mxu0 0.0
    %2722 = vmatpush.msra.mxu0 0.0
    %2723 = vmatpush.msra.mxu0 %v2416
    %2724 = vmatpush.msra.mxu0 %v2408
    %2725 = vmatpush.msra.mxu0 %v2400
    %2726 = vmatpush.msra.mxu0 %v2392
    %2727 = vmatmul.f32.gmra.mxu0 %v452
    %v2728 = vpop.f32.mrf.mxu0
    %v2729 = vadd.f32 %v2569, %v2728
    %2730 = vdwg.mxu0
    %2731 = vmatpush.msra.mxu0 0.0
    %2732 = vmatpush.msra.mxu0 0.0
    %2733 = vmatpush.msra.mxu0 0.0
    %2734 = vmatpush.msra.mxu0 0.0
    %2735 = vmatpush.msra.mxu0 0.0
    %2736 = vmatpush.msra.mxu0 0.0
    %2737 = vmatpush.msra.mxu0 0.0
    %2738 = vmatpush.msra.mxu0 0.0
    %2739 = vmatpush.msra.mxu0 0.0
    %2740 = vmatpush.msra.mxu0 0.0
    %2741 = vmatpush.msra.mxu0 0.0
    %2742 = vmatpush.msra.mxu0 0.0
    %2743 = vmatpush.msra.mxu0 %v2417
    %2744 = vmatpush.msra.mxu0 %v2409
    %2745 = vmatpush.msra.mxu0 %v2401
    %2746 = vmatpush.msra.mxu0 %v2393
    %2747 = vmatmul.f32.gmra.mxu0 %v452
    %v2748 = vpop.f32.mrf.mxu0
    %v2749 = vadd.f32 %v2589, %v2748
    %2750 = vdwg.mxu0
    %2751 = vmatpush.msra.mxu0 0.0
    %2752 = vmatpush.msra.mxu0 0.0
    %2753 = vmatpush.msra.mxu0 0.0
    %2754 = vmatpush.msra.mxu0 0.0
    %2755 = vmatpush.msra.mxu0 0.0
    %2756 = vmatpush.msra.mxu0 0.0
    %2757 = vmatpush.msra.mxu0 0.0
    %2758 = vmatpush.msra.mxu0 0.0
    %2759 = vmatpush.msra.mxu0 0.0
    %2760 = vmatpush.msra.mxu0 0.0
    %2761 = vmatpush.msra.mxu0 0.0
    %2762 = vmatpush.msra.mxu0 0.0
    %2763 = vmatpush.msra.mxu0 %v2418
    %2764 = vmatpush.msra.mxu0 %v2410
    %2765 = vmatpush.msra.mxu0 %v2402
    %2766 = vmatpush.msra.mxu0 %v2394
    %2767 = vmatmul.f32.gmra.mxu0 %v452
    %v2768 = vpop.f32.mrf.mxu0
    %v2769 = vadd.f32 %v2609, %v2768
    %2770 = vdwg.mxu0
    %v2771 = vld [vmem:[#allocation8 + $0x200] sm:$0xff]
    %v2772 = vld [vmem:[#allocation8 + $0x208] sm:$0xff]
    %v2773 = vld [vmem:[#allocation8 + $0x210] sm:$0xff]
    %v2774 = vld [vmem:[#allocation8 + $0x218] sm:$0xff]
    %v2775 = vld [vmem:[#allocation8 + $0x220] sm:$0xff]
    %v2776 = vld [vmem:[#allocation8 + $0x228] sm:$0xff]
    %v2777 = vld [vmem:[#allocation8 + $0x230] sm:$0xff]
    %v2778 = vld [vmem:[#allocation8 + $0x238] sm:$0xff]
    %v2779 = vld [vmem:[#allocation8 + $0x240] sm:$0xff]
    %v2780 = vld [vmem:[#allocation8 + $0x248] sm:$0xff]
    %v2781 = vld [vmem:[#allocation8 + $0x250] sm:$0xff]
    %v2782 = vld [vmem:[#allocation8 + $0x258] sm:$0xff]
    %v2783 = vld [vmem:[#allocation8 + $0x260] sm:$0xff]
    %v2784 = vld [vmem:[#allocation8 + $0x268] sm:$0xff]
    %v2785 = vld [vmem:[#allocation8 + $0x270] sm:$0xff]
    %v2786 = vld [vmem:[#allocation8 + $0x278] sm:$0xff]
    %v2787 = vld [vmem:[#allocation8 + $0x280] sm:$0xff]
    %v2788 = vld [vmem:[#allocation8 + $0x288] sm:$0xff]
    %v2789 = vld [vmem:[#allocation8 + $0x290] sm:$0xff]
    %v2790 = vld [vmem:[#allocation8 + $0x298] sm:$0xff]
    %v2791 = vld [vmem:[#allocation8 + $0x2a0] sm:$0xff]
    %v2792 = vld [vmem:[#allocation8 + $0x2a8] sm:$0xff]
    %v2793 = vld [vmem:[#allocation8 + $0x2b0] sm:$0xff]
    %v2794 = vld [vmem:[#allocation8 + $0x2b8] sm:$0xff]
    %v2795 = vld [vmem:[#allocation8 + $0x2c0] sm:$0xff]
    %v2796 = vld [vmem:[#allocation8 + $0x2c8] sm:$0xff]
    %v2797 = vld [vmem:[#allocation8 + $0x2d0] sm:$0xff]
    %v2798 = vld [vmem:[#allocation8 + $0x2d8] sm:$0xff]
    %v2799 = vld [vmem:[#allocation8 + $0x2e0] sm:$0xff]
    %v2800 = vld [vmem:[#allocation8 + $0x2e8] sm:$0xff]
    %v2801 = vld [vmem:[#allocation8 + $0x2f0] sm:$0xff]
    %v2802 = vld [vmem:[#allocation8 + $0x2f8] sm:$0xff]
    %v2803 = vrot.slane %v117, 2
    %v2804 = vsel %vm168, %v2803, 0
    %2806 = vmatpush.msra.mxu0 0.0
    %2807 = vmatpush.msra.mxu0 0.0
    %2808 = vmatpush.msra.mxu0 0.0
    %2809 = vmatpush.msra.mxu0 0.0
    %2810 = vmatpush.msra.mxu0 0.0
    %2811 = vmatpush.msra.mxu0 0.0
    %2812 = vmatpush.msra.mxu0 0.0
    %2813 = vmatpush.msra.mxu0 0.0
    %2814 = vmatpush.msra.mxu0 0.0
    %2815 = vmatpush.msra.mxu0 0.0
    %2816 = vmatpush.msra.mxu0 0.0
    %2817 = vmatpush.msra.mxu0 0.0
    %2818 = vmatpush.msra.mxu0 %v2795
    %2819 = vmatpush.msra.mxu0 %v2787
    %2820 = vmatpush.msra.mxu0 %v2779
    %2821 = vmatpush.msra.mxu0 %v2771
    %2822 = vmatmul.f32.gmra.mxu0 %v2804
    %v2823 = vpop.f32.mrf.mxu0
    %v2824 = vadd.f32 0.0, %v2823
    %2825 = vdwg.mxu0
    %2826 = vmatpush.msra.mxu0 0.0
    %2827 = vmatpush.msra.mxu0 0.0
    %2828 = vmatpush.msra.mxu0 0.0
    %2829 = vmatpush.msra.mxu0 0.0
    %2830 = vmatpush.msra.mxu0 0.0
    %2831 = vmatpush.msra.mxu0 0.0
    %2832 = vmatpush.msra.mxu0 0.0
    %2833 = vmatpush.msra.mxu0 0.0
    %2834 = vmatpush.msra.mxu0 0.0
    %2835 = vmatpush.msra.mxu0 0.0
    %2836 = vmatpush.msra.mxu0 0.0
    %2837 = vmatpush.msra.mxu0 0.0
    %2838 = vmatpush.msra.mxu0 %v2796
    %2839 = vmatpush.msra.mxu0 %v2788
    %2840 = vmatpush.msra.mxu0 %v2780
    %2841 = vmatpush.msra.mxu0 %v2772
    %2842 = vmatmul.f32.gmra.mxu0 %v2804
    %v2843 = vpop.f32.mrf.mxu0
    %v2844 = vadd.f32 0.0, %v2843
    %2845 = vdwg.mxu0
    %2846 = vmatpush.msra.mxu0 0.0
    %2847 = vmatpush.msra.mxu0 0.0
    %2848 = vmatpush.msra.mxu0 0.0
    %2849 = vmatpush.msra.mxu0 0.0
    %2850 = vmatpush.msra.mxu0 0.0
    %2851 = vmatpush.msra.mxu0 0.0
    %2852 = vmatpush.msra.mxu0 0.0
    %2853 = vmatpush.msra.mxu0 0.0
    %2854 = vmatpush.msra.mxu0 0.0
    %2855 = vmatpush.msra.mxu0 0.0
    %2856 = vmatpush.msra.mxu0 0.0
    %2857 = vmatpush.msra.mxu0 0.0
    %2858 = vmatpush.msra.mxu0 %v2797
    %2859 = vmatpush.msra.mxu0 %v2789
    %2860 = vmatpush.msra.mxu0 %v2781
    %2861 = vmatpush.msra.mxu0 %v2773
    %2862 = vmatmul.f32.gmra.mxu0 %v2804
    %v2863 = vpop.f32.mrf.mxu0
    %v2864 = vadd.f32 0.0, %v2863
    %2865 = vdwg.mxu0
    %2866 = vmatpush.msra.mxu0 0.0
    %2867 = vmatpush.msra.mxu0 0.0
    %2868 = vmatpush.msra.mxu0 0.0
    %2869 = vmatpush.msra.mxu0 0.0
    %2870 = vmatpush.msra.mxu0 0.0
    %2871 = vmatpush.msra.mxu0 0.0
    %2872 = vmatpush.msra.mxu0 0.0
    %2873 = vmatpush.msra.mxu0 0.0
    %2874 = vmatpush.msra.mxu0 0.0
    %2875 = vmatpush.msra.mxu0 0.0
    %2876 = vmatpush.msra.mxu0 0.0
    %2877 = vmatpush.msra.mxu0 0.0
    %2878 = vmatpush.msra.mxu0 %v2798
    %2879 = vmatpush.msra.mxu0 %v2790
    %2880 = vmatpush.msra.mxu0 %v2782
    %2881 = vmatpush.msra.mxu0 %v2774
    %2882 = vmatmul.f32.gmra.mxu0 %v2804
    %v2883 = vpop.f32.mrf.mxu0
    %v2884 = vadd.f32 0.0, %v2883
    %2885 = vdwg.mxu0
    %2886 = vmatpush.msra.mxu0 0.0
    %2887 = vmatpush.msra.mxu0 0.0
    %2888 = vmatpush.msra.mxu0 0.0
    %2889 = vmatpush.msra.mxu0 0.0
    %2890 = vmatpush.msra.mxu0 0.0
    %2891 = vmatpush.msra.mxu0 0.0
    %2892 = vmatpush.msra.mxu0 0.0
    %2893 = vmatpush.msra.mxu0 0.0
    %2894 = vmatpush.msra.mxu0 0.0
    %2895 = vmatpush.msra.mxu0 0.0
    %2896 = vmatpush.msra.mxu0 0.0
    %2897 = vmatpush.msra.mxu0 0.0
    %2898 = vmatpush.msra.mxu0 %v2799
    %2899 = vmatpush.msra.mxu0 %v2791
    %2900 = vmatpush.msra.mxu0 %v2783
    %2901 = vmatpush.msra.mxu0 %v2775
    %2902 = vmatmul.f32.gmra.mxu0 %v2804
    %v2903 = vpop.f32.mrf.mxu0
    %v2904 = vadd.f32 0.0, %v2903
    %2905 = vdwg.mxu0
    %2906 = vmatpush.msra.mxu0 0.0
    %2907 = vmatpush.msra.mxu0 0.0
    %2908 = vmatpush.msra.mxu0 0.0
    %2909 = vmatpush.msra.mxu0 0.0
    %2910 = vmatpush.msra.mxu0 0.0
    %2911 = vmatpush.msra.mxu0 0.0
    %2912 = vmatpush.msra.mxu0 0.0
    %2913 = vmatpush.msra.mxu0 0.0
    %2914 = vmatpush.msra.mxu0 0.0
    %2915 = vmatpush.msra.mxu0 0.0
    %2916 = vmatpush.msra.mxu0 0.0
    %2917 = vmatpush.msra.mxu0 0.0
    %2918 = vmatpush.msra.mxu0 %v2800
    %2919 = vmatpush.msra.mxu0 %v2792
    %2920 = vmatpush.msra.mxu0 %v2784
    %2921 = vmatpush.msra.mxu0 %v2776
    %2922 = vmatmul.f32.gmra.mxu0 %v2804
    %v2923 = vpop.f32.mrf.mxu0
    %v2924 = vadd.f32 0.0, %v2923
    %2925 = vdwg.mxu0
    %2926 = vmatpush.msra.mxu0 0.0
    %2927 = vmatpush.msra.mxu0 0.0
    %2928 = vmatpush.msra.mxu0 0.0
    %2929 = vmatpush.msra.mxu0 0.0
    %2930 = vmatpush.msra.mxu0 0.0
    %2931 = vmatpush.msra.mxu0 0.0
    %2932 = vmatpush.msra.mxu0 0.0
    %2933 = vmatpush.msra.mxu0 0.0
    %2934 = vmatpush.msra.mxu0 0.0
    %2935 = vmatpush.msra.mxu0 0.0
    %2936 = vmatpush.msra.mxu0 0.0
    %2937 = vmatpush.msra.mxu0 0.0
    %2938 = vmatpush.msra.mxu0 %v2801
    %2939 = vmatpush.msra.mxu0 %v2793
    %2940 = vmatpush.msra.mxu0 %v2785
    %2941 = vmatpush.msra.mxu0 %v2777
    %2942 = vmatmul.f32.gmra.mxu0 %v2804
    %v2943 = vpop.f32.mrf.mxu0
    %v2944 = vadd.f32 0.0, %v2943
    %2945 = vdwg.mxu0
    %2946 = vmatpush.msra.mxu0 0.0
    %2947 = vmatpush.msra.mxu0 0.0
    %2948 = vmatpush.msra.mxu0 0.0
    %2949 = vmatpush.msra.mxu0 0.0
    %2950 = vmatpush.msra.mxu0 0.0
    %2951 = vmatpush.msra.mxu0 0.0
    %2952 = vmatpush.msra.mxu0 0.0
    %2953 = vmatpush.msra.mxu0 0.0
    %2954 = vmatpush.msra.mxu0 0.0
    %2955 = vmatpush.msra.mxu0 0.0
    %2956 = vmatpush.msra.mxu0 0.0
    %2957 = vmatpush.msra.mxu0 0.0
    %2958 = vmatpush.msra.mxu0 %v2802
    %2959 = vmatpush.msra.mxu0 %v2794
    %2960 = vmatpush.msra.mxu0 %v2786
    %2961 = vmatpush.msra.mxu0 %v2778
    %2962 = vmatmul.f32.gmra.mxu0 %v2804
    %v2963 = vpop.f32.mrf.mxu0
    %v2964 = vadd.f32 0.0, %v2963
    %2965 = vdwg.mxu0
    %v2966 = vadd.f32 %v2629, %v2824
    %v2967 = vadd.f32 %v2649, %v2844
    %v2968 = vadd.f32 %v2669, %v2864
    %v2969 = vadd.f32 %v2689, %v2884
    %v2970 = vadd.f32 %v2709, %v2904
    %v2971 = vadd.f32 %v2729, %v2924
    %v2972 = vadd.f32 %v2749, %v2944
    %v2973 = vadd.f32 %v2769, %v2964
    %v2974 = vadd.f32 %v2966, %v2273
    %v2975 = vadd.f32 %v2967, %v2274
    %v2976 = vadd.f32 %v2968, %v2275
    %v2977 = vadd.f32 %v2969, %v2276
    %v2978 = vadd.f32 %v2970, %v2277
    %v2979 = vadd.f32 %v2971, %v2278
    %v2980 = vadd.f32 %v2972, %v2279
    %v2981 = vadd.f32 %v2973, %v2280
    %v2982 = vtanh.pop %v2974
    %v2983 = vtanh.pop %v2975
    %v2984 = vtanh.pop %v2976
    %v2985 = vtanh.pop %v2977
    %v2986 = vtanh.pop %v2978
    %v2987 = vtanh.pop %v2979
    %v2988 = vtanh.pop %v2980
    %v2989 = vtanh.pop %v2981
    %v2990 = vsel %vm2305, %v2982, -inf
    %v2991 = vrot.slane %v2990, 4
    %v2992 = vmax.f32 %v2990, %v2991
    %v2993 = vrot.slane %v2992, 2
    %v2994 = vmax.f32 %v2992, %v2993
    %v2995 = vrot.slane %v2994, 1
    %v2996 = vmax.f32 %v2994, %v2995
    %v2997 = vsel %vm2305, %v2983, -inf
    %v2998 = vrot.slane %v2997, 4
    %v2999 = vmax.f32 %v2997, %v2998
    %v3000 = vrot.slane %v2999, 2
    %v3001 = vmax.f32 %v2999, %v3000
    %v3002 = vrot.slane %v3001, 1
    %v3003 = vmax.f32 %v3001, %v3002
    %v3004 = vsel %vm2305, %v2984, -inf
    %v3005 = vrot.slane %v3004, 4
    %v3006 = vmax.f32 %v3004, %v3005
    %v3007 = vrot.slane %v3006, 2
    %v3008 = vmax.f32 %v3006, %v3007
    %v3009 = vrot.slane %v3008, 1
    %v3010 = vmax.f32 %v3008, %v3009
    %v3011 = vsel %vm2305, %v2985, -inf
    %v3012 = vrot.slane %v3011, 4
    %v3013 = vmax.f32 %v3011, %v3012
    %v3014 = vrot.slane %v3013, 2
    %v3015 = vmax.f32 %v3013, %v3014
    %v3016 = vrot.slane %v3015, 1
    %v3017 = vmax.f32 %v3015, %v3016
    %v3018 = vsel %vm2305, %v2986, -inf
    %v3019 = vrot.slane %v3018, 4
    %v3020 = vmax.f32 %v3018, %v3019
    %v3021 = vrot.slane %v3020, 2
    %v3022 = vmax.f32 %v3020, %v3021
    %v3023 = vrot.slane %v3022, 1
    %v3024 = vmax.f32 %v3022, %v3023
    %v3025 = vsel %vm2305, %v2987, -inf
    %v3026 = vrot.slane %v3025, 4
    %v3027 = vmax.f32 %v3025, %v3026
    %v3028 = vrot.slane %v3027, 2
    %v3029 = vmax.f32 %v3027, %v3028
    %v3030 = vrot.slane %v3029, 1
    %v3031 = vmax.f32 %v3029, %v3030
    %v3032 = vsel %vm2305, %v2988, -inf
    %v3033 = vrot.slane %v3032, 4
    %v3034 = vmax.f32 %v3032, %v3033
    %v3035 = vrot.slane %v3034, 2
    %v3036 = vmax.f32 %v3034, %v3035
    %v3037 = vrot.slane %v3036, 1
    %v3038 = vmax.f32 %v3036, %v3037
    %v3039 = vsel %vm2305, %v2989, -inf
    %v3040 = vrot.slane %v3039, 4
    %v3041 = vmax.f32 %v3039, %v3040
    %v3042 = vrot.slane %v3041, 2
    %v3043 = vmax.f32 %v3041, %v3042
    %v3044 = vrot.slane %v3043, 1
    %v3045 = vmax.f32 %v3043, %v3044
    %v3054 = vrot.slane %v3003, 7
    %v3055 = vrot.slane %v3010, 6
    %v3056 = vrot.slane %v3017, 5
    %v3057 = vrot.slane %v3024, 4
    %v3058 = vrot.slane %v3031, 3
    %v3059 = vrot.slane %v3038, 2
    %v3060 = vrot.slane %v3045, 1
    %v3061 = vsel %vm403, %v2996, %v3054
    %v3062 = vsel %vm405, %v3055, %v3056
    %v3063 = vsel %vm407, %v3061, %v3062
    %v3064 = vsel %vm409, %v3057, %v3058
    %v3065 = vsel %vm411, %v3059, %v3060
    %v3066 = vsel %vm413, %v3064, %v3065
    %v3067 = vsel %vm415, %v3063, %v3066
    %s3069 = scalar_lea.vmem %s693, 2 [#allocation13]
    %3070 = vst [vmem:[%s3069] ss:$4 sm:$0xff] %v3067
    %s3071 = scalar_lea.vmem [#allocation11], 3
    %v3072 = vld [vmem:[%s3071] ss:$4 sm:$0xff]
    %v3073 = vld [vmem:[#allocation10] sm:$0xff]
    %v3074 = vld [vmem:[#allocation10 + $0x8] sm:$0xff]
    %v3075 = vld [vmem:[#allocation10 + $0x10] sm:$0xff]
    %v3076 = vld [vmem:[#allocation10 + $0x18] sm:$0xff]
    %v3077 = vld [vmem:[#allocation10 + $0x20] sm:$0xff]
    %v3078 = vld [vmem:[#allocation10 + $0x28] sm:$0xff]
    %v3079 = vld [vmem:[#allocation10 + $0x30] sm:$0xff]
    %v3080 = vld [vmem:[#allocation10 + $0x38] sm:$0xff]
    %v3081 = vld [vmem:[#allocation10 + $0x40] sm:$0xff]
    %v3082 = vld [vmem:[#allocation10 + $0x48] sm:$0xff]
    %v3083 = vld [vmem:[#allocation10 + $0x50] sm:$0xff]
    %v3084 = vld [vmem:[#allocation10 + $0x58] sm:$0xff]
    %v3085 = vld [vmem:[#allocation10 + $0x60] sm:$0xff]
    %v3086 = vld [vmem:[#allocation10 + $0x68] sm:$0xff]
    %v3087 = vld [vmem:[#allocation10 + $0x70] sm:$0xff]
    %v3088 = vld [vmem:[#allocation10 + $0x78] sm:$0xff]
    %v3089 = vld [vmem:[#allocation10 + $0x80] sm:$0xff]
    %v3090 = vld [vmem:[#allocation10 + $0x88] sm:$0xff]
    %v3091 = vld [vmem:[#allocation10 + $0x90] sm:$0xff]
    %v3092 = vld [vmem:[#allocation10 + $0x98] sm:$0xff]
    %v3093 = vld [vmem:[#allocation10 + $0xa0] sm:$0xff]
    %v3094 = vld [vmem:[#allocation10 + $0xa8] sm:$0xff]
    %v3095 = vld [vmem:[#allocation10 + $0xb0] sm:$0xff]
    %v3096 = vld [vmem:[#allocation10 + $0xb8] sm:$0xff]
    %v3097 = vld [vmem:[#allocation10 + $0xc0] sm:$0xff]
    %v3098 = vld [vmem:[#allocation10 + $0xc8] sm:$0xff]
    %v3099 = vld [vmem:[#allocation10 + $0xd0] sm:$0xff]
    %v3100 = vld [vmem:[#allocation10 + $0xd8] sm:$0xff]
    %v3101 = vld [vmem:[#allocation10 + $0xe0] sm:$0xff]
    %v3102 = vld [vmem:[#allocation10 + $0xe8] sm:$0xff]
    %v3103 = vld [vmem:[#allocation10 + $0xf0] sm:$0xff]
    %v3104 = vld [vmem:[#allocation10 + $0xf8] sm:$0xff]
    %v3105 = vld [vmem:[#allocation10 + $0x100] sm:$0xff]
    %v3106 = vld [vmem:[#allocation10 + $0x108] sm:$0xff]
    %v3107 = vld [vmem:[#allocation10 + $0x110] sm:$0xff]
    %v3108 = vld [vmem:[#allocation10 + $0x118] sm:$0xff]
    %v3109 = vld [vmem:[#allocation10 + $0x120] sm:$0xff]
    %v3110 = vld [vmem:[#allocation10 + $0x128] sm:$0xff]
    %v3111 = vld [vmem:[#allocation10 + $0x130] sm:$0xff]
    %v3112 = vld [vmem:[#allocation10 + $0x138] sm:$0xff]
    %v3113 = vld [vmem:[#allocation10 + $0x140] sm:$0xff]
    %v3114 = vld [vmem:[#allocation10 + $0x148] sm:$0xff]
    %v3115 = vld [vmem:[#allocation10 + $0x150] sm:$0xff]
    %v3116 = vld [vmem:[#allocation10 + $0x158] sm:$0xff]
    %v3117 = vld [vmem:[#allocation10 + $0x160] sm:$0xff]
    %v3118 = vld [vmem:[#allocation10 + $0x168] sm:$0xff]
    %v3119 = vld [vmem:[#allocation10 + $0x170] sm:$0xff]
    %v3120 = vld [vmem:[#allocation10 + $0x178] sm:$0xff]
    %v3121 = vld [vmem:[#allocation10 + $0x180] sm:$0xff]
    %v3122 = vld [vmem:[#allocation10 + $0x188] sm:$0xff]
    %v3123 = vld [vmem:[#allocation10 + $0x190] sm:$0xff]
    %v3124 = vld [vmem:[#allocation10 + $0x198] sm:$0xff]
    %v3125 = vld [vmem:[#allocation10 + $0x1a0] sm:$0xff]
    %v3126 = vld [vmem:[#allocation10 + $0x1a8] sm:$0xff]
    %v3127 = vld [vmem:[#allocation10 + $0x1b0] sm:$0xff]
    %v3128 = vld [vmem:[#allocation10 + $0x1b8] sm:$0xff]
    %v3129 = vld [vmem:[#allocation10 + $0x1c0] sm:$0xff]
    %v3130 = vld [vmem:[#allocation10 + $0x1c8] sm:$0xff]
    %v3131 = vld [vmem:[#allocation10 + $0x1d0] sm:$0xff]
    %v3132 = vld [vmem:[#allocation10 + $0x1d8] sm:$0xff]
    %v3133 = vld [vmem:[#allocation10 + $0x1e0] sm:$0xff]
    %v3134 = vld [vmem:[#allocation10 + $0x1e8] sm:$0xff]
    %v3135 = vld [vmem:[#allocation10 + $0x1f0] sm:$0xff]
    %v3136 = vld [vmem:[#allocation10 + $0x1f8] sm:$0xff]
    %3137 = vmatpush.msra.mxu0 0.0
    %3138 = vmatpush.msra.mxu0 0.0
    %3139 = vmatpush.msra.mxu0 0.0
    %3140 = vmatpush.msra.mxu0 0.0
    %3141 = vmatpush.msra.mxu0 0.0
    %3142 = vmatpush.msra.mxu0 0.0
    %3143 = vmatpush.msra.mxu0 0.0
    %3144 = vmatpush.msra.mxu0 0.0
    %3145 = vmatpush.msra.mxu0 0.0
    %3146 = vmatpush.msra.mxu0 0.0
    %3147 = vmatpush.msra.mxu0 0.0
    %3148 = vmatpush.msra.mxu0 0.0
    %3149 = vmatpush.msra.mxu0 %v3129
    %3150 = vmatpush.msra.mxu0 %v3121
    %3151 = vmatpush.msra.mxu0 %v3113
    %3152 = vmatpush.msra.mxu0 %v3105
    %3153 = vmatmul.f32.gmra.mxu0 %v762
    %v3154 = vpop.f32.mrf.mxu0
    %v3155 = vadd.f32 0.0, %v3154
    %3156 = vdwg.mxu0
    %3157 = vmatpush.msra.mxu0 0.0
    %3158 = vmatpush.msra.mxu0 0.0
    %3159 = vmatpush.msra.mxu0 0.0
    %3160 = vmatpush.msra.mxu0 0.0
    %3161 = vmatpush.msra.mxu0 0.0
    %3162 = vmatpush.msra.mxu0 0.0
    %3163 = vmatpush.msra.mxu0 0.0
    %3164 = vmatpush.msra.mxu0 0.0
    %3165 = vmatpush.msra.mxu0 0.0
    %3166 = vmatpush.msra.mxu0 0.0
    %3167 = vmatpush.msra.mxu0 0.0
    %3168 = vmatpush.msra.mxu0 0.0
    %3169 = vmatpush.msra.mxu0 %v3130
    %3170 = vmatpush.msra.mxu0 %v3122
    %3171 = vmatpush.msra.mxu0 %v3114
    %3172 = vmatpush.msra.mxu0 %v3106
    %3173 = vmatmul.f32.gmra.mxu0 %v762
    %v3174 = vpop.f32.mrf.mxu0
    %v3175 = vadd.f32 0.0, %v3174
    %3176 = vdwg.mxu0
    %3177 = vmatpush.msra.mxu0 0.0
    %3178 = vmatpush.msra.mxu0 0.0
    %3179 = vmatpush.msra.mxu0 0.0
    %3180 = vmatpush.msra.mxu0 0.0
    %3181 = vmatpush.msra.mxu0 0.0
    %3182 = vmatpush.msra.mxu0 0.0
    %3183 = vmatpush.msra.mxu0 0.0
    %3184 = vmatpush.msra.mxu0 0.0
    %3185 = vmatpush.msra.mxu0 0.0
    %3186 = vmatpush.msra.mxu0 0.0
    %3187 = vmatpush.msra.mxu0 0.0
    %3188 = vmatpush.msra.mxu0 0.0
    %3189 = vmatpush.msra.mxu0 %v3131
    %3190 = vmatpush.msra.mxu0 %v3123
    %3191 = vmatpush.msra.mxu0 %v3115
    %3192 = vmatpush.msra.mxu0 %v3107
    %3193 = vmatmul.f32.gmra.mxu0 %v762
    %v3194 = vpop.f32.mrf.mxu0
    %v3195 = vadd.f32 0.0, %v3194
    %3196 = vdwg.mxu0
    %3197 = vmatpush.msra.mxu0 0.0
    %3198 = vmatpush.msra.mxu0 0.0
    %3199 = vmatpush.msra.mxu0 0.0
    %3200 = vmatpush.msra.mxu0 0.0
    %3201 = vmatpush.msra.mxu0 0.0
    %3202 = vmatpush.msra.mxu0 0.0
    %3203 = vmatpush.msra.mxu0 0.0
    %3204 = vmatpush.msra.mxu0 0.0
    %3205 = vmatpush.msra.mxu0 0.0
    %3206 = vmatpush.msra.mxu0 0.0
    %3207 = vmatpush.msra.mxu0 0.0
    %3208 = vmatpush.msra.mxu0 0.0
    %3209 = vmatpush.msra.mxu0 %v3132
    %3210 = vmatpush.msra.mxu0 %v3124
    %3211 = vmatpush.msra.mxu0 %v3116
    %3212 = vmatpush.msra.mxu0 %v3108
    %3213 = vmatmul.f32.gmra.mxu0 %v762
    %v3214 = vpop.f32.mrf.mxu0
    %v3215 = vadd.f32 0.0, %v3214
    %3216 = vdwg.mxu0
    %3217 = vmatpush.msra.mxu0 0.0
    %3218 = vmatpush.msra.mxu0 0.0
    %3219 = vmatpush.msra.mxu0 0.0
    %3220 = vmatpush.msra.mxu0 0.0
    %3221 = vmatpush.msra.mxu0 0.0
    %3222 = vmatpush.msra.mxu0 0.0
    %3223 = vmatpush.msra.mxu0 0.0
    %3224 = vmatpush.msra.mxu0 0.0
    %3225 = vmatpush.msra.mxu0 0.0
    %3226 = vmatpush.msra.mxu0 0.0
    %3227 = vmatpush.msra.mxu0 0.0
    %3228 = vmatpush.msra.mxu0 0.0
    %3229 = vmatpush.msra.mxu0 %v3133
    %3230 = vmatpush.msra.mxu0 %v3125
    %3231 = vmatpush.msra.mxu0 %v3117
    %3232 = vmatpush.msra.mxu0 %v3109
    %3233 = vmatmul.f32.gmra.mxu0 %v762
    %v3234 = vpop.f32.mrf.mxu0
    %v3235 = vadd.f32 0.0, %v3234
    %3236 = vdwg.mxu0
    %3237 = vmatpush.msra.mxu0 0.0
    %3238 = vmatpush.msra.mxu0 0.0
    %3239 = vmatpush.msra.mxu0 0.0
    %3240 = vmatpush.msra.mxu0 0.0
    %3241 = vmatpush.msra.mxu0 0.0
    %3242 = vmatpush.msra.mxu0 0.0
    %3243 = vmatpush.msra.mxu0 0.0
    %3244 = vmatpush.msra.mxu0 0.0
    %3245 = vmatpush.msra.mxu0 0.0
    %3246 = vmatpush.msra.mxu0 0.0
    %3247 = vmatpush.msra.mxu0 0.0
    %3248 = vmatpush.msra.mxu0 0.0
    %3249 = vmatpush.msra.mxu0 %v3134
    %3250 = vmatpush.msra.mxu0 %v3126
    %3251 = vmatpush.msra.mxu0 %v3118
    %3252 = vmatpush.msra.mxu0 %v3110
    %3253 = vmatmul.f32.gmra.mxu0 %v762
    %v3254 = vpop.f32.mrf.mxu0
    %v3255 = vadd.f32 0.0, %v3254
    %3256 = vdwg.mxu0
    %3257 = vmatpush.msra.mxu0 0.0
    %3258 = vmatpush.msra.mxu0 0.0
    %3259 = vmatpush.msra.mxu0 0.0
    %3260 = vmatpush.msra.mxu0 0.0
    %3261 = vmatpush.msra.mxu0 0.0
    %3262 = vmatpush.msra.mxu0 0.0
    %3263 = vmatpush.msra.mxu0 0.0
    %3264 = vmatpush.msra.mxu0 0.0
    %3265 = vmatpush.msra.mxu0 0.0
    %3266 = vmatpush.msra.mxu0 0.0
    %3267 = vmatpush.msra.mxu0 0.0
    %3268 = vmatpush.msra.mxu0 0.0
    %3269 = vmatpush.msra.mxu0 %v3135
    %3270 = vmatpush.msra.mxu0 %v3127
    %3271 = vmatpush.msra.mxu0 %v3119
    %3272 = vmatpush.msra.mxu0 %v3111
    %3273 = vmatmul.f32.gmra.mxu0 %v762
    %v3274 = vpop.f32.mrf.mxu0
    %v3275 = vadd.f32 0.0, %v3274
    %3276 = vdwg.mxu0
    %3277 = vmatpush.msra.mxu0 0.0
    %3278 = vmatpush.msra.mxu0 0.0
    %3279 = vmatpush.msra.mxu0 0.0
    %3280 = vmatpush.msra.mxu0 0.0
    %3281 = vmatpush.msra.mxu0 0.0
    %3282 = vmatpush.msra.mxu0 0.0
    %3283 = vmatpush.msra.mxu0 0.0
    %3284 = vmatpush.msra.mxu0 0.0
    %3285 = vmatpush.msra.mxu0 0.0
    %3286 = vmatpush.msra.mxu0 0.0
    %3287 = vmatpush.msra.mxu0 0.0
    %3288 = vmatpush.msra.mxu0 0.0
    %3289 = vmatpush.msra.mxu0 %v3136
    %3290 = vmatpush.msra.mxu0 %v3128
    %3291 = vmatpush.msra.mxu0 %v3120
    %3292 = vmatpush.msra.mxu0 %v3112
    %3293 = vmatmul.f32.gmra.mxu0 %v762
    %v3294 = vpop.f32.mrf.mxu0
    %v3295 = vadd.f32 0.0, %v3294
    %3296 = vdwg.mxu0
    %3297 = vmatpush.msra.mxu0 0.0
    %3298 = vmatpush.msra.mxu0 0.0
    %3299 = vmatpush.msra.mxu0 0.0
    %3300 = vmatpush.msra.mxu0 0.0
    %3301 = vmatpush.msra.mxu0 0.0
    %3302 = vmatpush.msra.mxu0 0.0
    %3303 = vmatpush.msra.mxu0 0.0
    %3304 = vmatpush.msra.mxu0 0.0
    %3305 = vmatpush.msra.mxu0 0.0
    %3306 = vmatpush.msra.mxu0 0.0
    %3307 = vmatpush.msra.mxu0 0.0
    %3308 = vmatpush.msra.mxu0 0.0
    %3309 = vmatpush.msra.mxu0 %v3097
    %3310 = vmatpush.msra.mxu0 %v3089
    %3311 = vmatpush.msra.mxu0 %v3081
    %3312 = vmatpush.msra.mxu0 %v3073
    %3313 = vmatmul.f32.gmra.mxu0 %v170
    %v3314 = vpop.f32.mrf.mxu0
    %v3315 = vadd.f32 %v3155, %v3314
    %3316 = vdwg.mxu0
    %3317 = vmatpush.msra.mxu0 0.0
    %3318 = vmatpush.msra.mxu0 0.0
    %3319 = vmatpush.msra.mxu0 0.0
    %3320 = vmatpush.msra.mxu0 0.0
    %3321 = vmatpush.msra.mxu0 0.0
    %3322 = vmatpush.msra.mxu0 0.0
    %3323 = vmatpush.msra.mxu0 0.0
    %3324 = vmatpush.msra.mxu0 0.0
    %3325 = vmatpush.msra.mxu0 0.0
    %3326 = vmatpush.msra.mxu0 0.0
    %3327 = vmatpush.msra.mxu0 0.0
    %3328 = vmatpush.msra.mxu0 0.0
    %3329 = vmatpush.msra.mxu0 %v3098
    %3330 = vmatpush.msra.mxu0 %v3090
    %3331 = vmatpush.msra.mxu0 %v3082
    %3332 = vmatpush.msra.mxu0 %v3074
    %3333 = vmatmul.f32.gmra.mxu0 %v170
    %v3334 = vpop.f32.mrf.mxu0
    %v3335 = vadd.f32 %v3175, %v3334
    %3336 = vdwg.mxu0
    %3337 = vmatpush.msra.mxu0 0.0
    %3338 = vmatpush.msra.mxu0 0.0
    %3339 = vmatpush.msra.mxu0 0.0
    %3340 = vmatpush.msra.mxu0 0.0
    %3341 = vmatpush.msra.mxu0 0.0
    %3342 = vmatpush.msra.mxu0 0.0
    %3343 = vmatpush.msra.mxu0 0.0
    %3344 = vmatpush.msra.mxu0 0.0
    %3345 = vmatpush.msra.mxu0 0.0
    %3346 = vmatpush.msra.mxu0 0.0
    %3347 = vmatpush.msra.mxu0 0.0
    %3348 = vmatpush.msra.mxu0 0.0
    %3349 = vmatpush.msra.mxu0 %v3099
    %3350 = vmatpush.msra.mxu0 %v3091
    %3351 = vmatpush.msra.mxu0 %v3083
    %3352 = vmatpush.msra.mxu0 %v3075
    %3353 = vmatmul.f32.gmra.mxu0 %v170
    %v3354 = vpop.f32.mrf.mxu0
    %v3355 = vadd.f32 %v3195, %v3354
    %3356 = vdwg.mxu0
    %3357 = vmatpush.msra.mxu0 0.0
    %3358 = vmatpush.msra.mxu0 0.0
    %3359 = vmatpush.msra.mxu0 0.0
    %3360 = vmatpush.msra.mxu0 0.0
    %3361 = vmatpush.msra.mxu0 0.0
    %3362 = vmatpush.msra.mxu0 0.0
    %3363 = vmatpush.msra.mxu0 0.0
    %3364 = vmatpush.msra.mxu0 0.0
    %3365 = vmatpush.msra.mxu0 0.0
    %3366 = vmatpush.msra.mxu0 0.0
    %3367 = vmatpush.msra.mxu0 0.0
    %3368 = vmatpush.msra.mxu0 0.0
    %3369 = vmatpush.msra.mxu0 %v3100
    %3370 = vmatpush.msra.mxu0 %v3092
    %3371 = vmatpush.msra.mxu0 %v3084
    %3372 = vmatpush.msra.mxu0 %v3076
    %3373 = vmatmul.f32.gmra.mxu0 %v170
    %v3374 = vpop.f32.mrf.mxu0
    %v3375 = vadd.f32 %v3215, %v3374
    %3376 = vdwg.mxu0
    %3377 = vmatpush.msra.mxu0 0.0
    %3378 = vmatpush.msra.mxu0 0.0
    %3379 = vmatpush.msra.mxu0 0.0
    %3380 = vmatpush.msra.mxu0 0.0
    %3381 = vmatpush.msra.mxu0 0.0
    %3382 = vmatpush.msra.mxu0 0.0
    %3383 = vmatpush.msra.mxu0 0.0
    %3384 = vmatpush.msra.mxu0 0.0
    %3385 = vmatpush.msra.mxu0 0.0
    %3386 = vmatpush.msra.mxu0 0.0
    %3387 = vmatpush.msra.mxu0 0.0
    %3388 = vmatpush.msra.mxu0 0.0
    %3389 = vmatpush.msra.mxu0 %v3101
    %3390 = vmatpush.msra.mxu0 %v3093
    %3391 = vmatpush.msra.mxu0 %v3085
    %3392 = vmatpush.msra.mxu0 %v3077
    %3393 = vmatmul.f32.gmra.mxu0 %v170
    %v3394 = vpop.f32.mrf.mxu0
    %v3395 = vadd.f32 %v3235, %v3394
    %3396 = vdwg.mxu0
    %3397 = vmatpush.msra.mxu0 0.0
    %3398 = vmatpush.msra.mxu0 0.0
    %3399 = vmatpush.msra.mxu0 0.0
    %3400 = vmatpush.msra.mxu0 0.0
    %3401 = vmatpush.msra.mxu0 0.0
    %3402 = vmatpush.msra.mxu0 0.0
    %3403 = vmatpush.msra.mxu0 0.0
    %3404 = vmatpush.msra.mxu0 0.0
    %3405 = vmatpush.msra.mxu0 0.0
    %3406 = vmatpush.msra.mxu0 0.0
    %3407 = vmatpush.msra.mxu0 0.0
    %3408 = vmatpush.msra.mxu0 0.0
    %3409 = vmatpush.msra.mxu0 %v3102
    %3410 = vmatpush.msra.mxu0 %v3094
    %3411 = vmatpush.msra.mxu0 %v3086
    %3412 = vmatpush.msra.mxu0 %v3078
    %3413 = vmatmul.f32.gmra.mxu0 %v170
    %v3414 = vpop.f32.mrf.mxu0
    %v3415 = vadd.f32 %v3255, %v3414
    %3416 = vdwg.mxu0
    %3417 = vmatpush.msra.mxu0 0.0
    %3418 = vmatpush.msra.mxu0 0.0
    %3419 = vmatpush.msra.mxu0 0.0
    %3420 = vmatpush.msra.mxu0 0.0
    %3421 = vmatpush.msra.mxu0 0.0
    %3422 = vmatpush.msra.mxu0 0.0
    %3423 = vmatpush.msra.mxu0 0.0
    %3424 = vmatpush.msra.mxu0 0.0
    %3425 = vmatpush.msra.mxu0 0.0
    %3426 = vmatpush.msra.mxu0 0.0
    %3427 = vmatpush.msra.mxu0 0.0
    %3428 = vmatpush.msra.mxu0 0.0
    %3429 = vmatpush.msra.mxu0 %v3103
    %3430 = vmatpush.msra.mxu0 %v3095
    %3431 = vmatpush.msra.mxu0 %v3087
    %3432 = vmatpush.msra.mxu0 %v3079
    %3433 = vmatmul.f32.gmra.mxu0 %v170
    %v3434 = vpop.f32.mrf.mxu0
    %v3435 = vadd.f32 %v3275, %v3434
    %3436 = vdwg.mxu0
    %3437 = vmatpush.msra.mxu0 0.0
    %3438 = vmatpush.msra.mxu0 0.0
    %3439 = vmatpush.msra.mxu0 0.0
    %3440 = vmatpush.msra.mxu0 0.0
    %3441 = vmatpush.msra.mxu0 0.0
    %3442 = vmatpush.msra.mxu0 0.0
    %3443 = vmatpush.msra.mxu0 0.0
    %3444 = vmatpush.msra.mxu0 0.0
    %3445 = vmatpush.msra.mxu0 0.0
    %3446 = vmatpush.msra.mxu0 0.0
    %3447 = vmatpush.msra.mxu0 0.0
    %3448 = vmatpush.msra.mxu0 0.0
    %3449 = vmatpush.msra.mxu0 %v3104
    %3450 = vmatpush.msra.mxu0 %v3096
    %3451 = vmatpush.msra.mxu0 %v3088
    %3452 = vmatpush.msra.mxu0 %v3080
    %3453 = vmatmul.f32.gmra.mxu0 %v170
    %v3454 = vpop.f32.mrf.mxu0
    %v3455 = vadd.f32 %v3295, %v3454
    %3456 = vdwg.mxu0
    %v3457 = vld [vmem:[#allocation10 + $0x200] sm:$0xff]
    %v3458 = vld [vmem:[#allocation10 + $0x208] sm:$0xff]
    %v3459 = vld [vmem:[#allocation10 + $0x210] sm:$0xff]
    %v3460 = vld [vmem:[#allocation10 + $0x218] sm:$0xff]
    %v3461 = vld [vmem:[#allocation10 + $0x220] sm:$0xff]
    %v3462 = vld [vmem:[#allocation10 + $0x228] sm:$0xff]
    %v3463 = vld [vmem:[#allocation10 + $0x230] sm:$0xff]
    %v3464 = vld [vmem:[#allocation10 + $0x238] sm:$0xff]
    %v3465 = vld [vmem:[#allocation10 + $0x240] sm:$0xff]
    %v3466 = vld [vmem:[#allocation10 + $0x248] sm:$0xff]
    %v3467 = vld [vmem:[#allocation10 + $0x250] sm:$0xff]
    %v3468 = vld [vmem:[#allocation10 + $0x258] sm:$0xff]
    %v3469 = vld [vmem:[#allocation10 + $0x260] sm:$0xff]
    %v3470 = vld [vmem:[#allocation10 + $0x268] sm:$0xff]
    %v3471 = vld [vmem:[#allocation10 + $0x270] sm:$0xff]
    %v3472 = vld [vmem:[#allocation10 + $0x278] sm:$0xff]
    %v3473 = vld [vmem:[#allocation10 + $0x280] sm:$0xff]
    %v3474 = vld [vmem:[#allocation10 + $0x288] sm:$0xff]
    %v3475 = vld [vmem:[#allocation10 + $0x290] sm:$0xff]
    %v3476 = vld [vmem:[#allocation10 + $0x298] sm:$0xff]
    %v3477 = vld [vmem:[#allocation10 + $0x2a0] sm:$0xff]
    %v3478 = vld [vmem:[#allocation10 + $0x2a8] sm:$0xff]
    %v3479 = vld [vmem:[#allocation10 + $0x2b0] sm:$0xff]
    %v3480 = vld [vmem:[#allocation10 + $0x2b8] sm:$0xff]
    %v3481 = vld [vmem:[#allocation10 + $0x2c0] sm:$0xff]
    %v3482 = vld [vmem:[#allocation10 + $0x2c8] sm:$0xff]
    %v3483 = vld [vmem:[#allocation10 + $0x2d0] sm:$0xff]
    %v3484 = vld [vmem:[#allocation10 + $0x2d8] sm:$0xff]
    %v3485 = vld [vmem:[#allocation10 + $0x2e0] sm:$0xff]
    %v3486 = vld [vmem:[#allocation10 + $0x2e8] sm:$0xff]
    %v3487 = vld [vmem:[#allocation10 + $0x2f0] sm:$0xff]
    %v3488 = vld [vmem:[#allocation10 + $0x2f8] sm:$0xff]
    %3489 = vmatpush.msra.mxu0 0.0
    %3490 = vmatpush.msra.mxu0 0.0
    %3491 = vmatpush.msra.mxu0 0.0
    %3492 = vmatpush.msra.mxu0 0.0
    %3493 = vmatpush.msra.mxu0 0.0
    %3494 = vmatpush.msra.mxu0 0.0
    %3495 = vmatpush.msra.mxu0 0.0
    %3496 = vmatpush.msra.mxu0 0.0
    %3497 = vmatpush.msra.mxu0 0.0
    %3498 = vmatpush.msra.mxu0 0.0
    %3499 = vmatpush.msra.mxu0 0.0
    %3500 = vmatpush.msra.mxu0 0.0
    %3501 = vmatpush.msra.mxu0 %v3481
    %3502 = vmatpush.msra.mxu0 %v3473
    %3503 = vmatpush.msra.mxu0 %v3465
    %3504 = vmatpush.msra.mxu0 %v3457
    %3505 = vmatmul.f32.gmra.mxu0 %v2102
    %v3506 = vpop.f32.mrf.mxu0
    %v3507 = vadd.f32 0.0, %v3506
    %3508 = vdwg.mxu0
    %3509 = vmatpush.msra.mxu0 0.0
    %3510 = vmatpush.msra.mxu0 0.0
    %3511 = vmatpush.msra.mxu0 0.0
    %3512 = vmatpush.msra.mxu0 0.0
    %3513 = vmatpush.msra.mxu0 0.0
    %3514 = vmatpush.msra.mxu0 0.0
    %3515 = vmatpush.msra.mxu0 0.0
    %3516 = vmatpush.msra.mxu0 0.0
    %3517 = vmatpush.msra.mxu0 0.0
    %3518 = vmatpush.msra.mxu0 0.0
    %3519 = vmatpush.msra.mxu0 0.0
    %3520 = vmatpush.msra.mxu0 0.0
    %3521 = vmatpush.msra.mxu0 %v3482
    %3522 = vmatpush.msra.mxu0 %v3474
    %3523 = vmatpush.msra.mxu0 %v3466
    %3524 = vmatpush.msra.mxu0 %v3458
    %3525 = vmatmul.f32.gmra.mxu0 %v2102
    %v3526 = vpop.f32.mrf.mxu0
    %v3527 = vadd.f32 0.0, %v3526
    %3528 = vdwg.mxu0
    %3529 = vmatpush.msra.mxu0 0.0
    %3530 = vmatpush.msra.mxu0 0.0
    %3531 = vmatpush.msra.mxu0 0.0
    %3532 = vmatpush.msra.mxu0 0.0
    %3533 = vmatpush.msra.mxu0 0.0
    %3534 = vmatpush.msra.mxu0 0.0
    %3535 = vmatpush.msra.mxu0 0.0
    %3536 = vmatpush.msra.mxu0 0.0
    %3537 = vmatpush.msra.mxu0 0.0
    %3538 = vmatpush.msra.mxu0 0.0
    %3539 = vmatpush.msra.mxu0 0.0
    %3540 = vmatpush.msra.mxu0 0.0
    %3541 = vmatpush.msra.mxu0 %v3483
    %3542 = vmatpush.msra.mxu0 %v3475
    %3543 = vmatpush.msra.mxu0 %v3467
    %3544 = vmatpush.msra.mxu0 %v3459
    %3545 = vmatmul.f32.gmra.mxu0 %v2102
    %v3546 = vpop.f32.mrf.mxu0
    %v3547 = vadd.f32 0.0, %v3546
    %3548 = vdwg.mxu0
    %3549 = vmatpush.msra.mxu0 0.0
    %3550 = vmatpush.msra.mxu0 0.0
    %3551 = vmatpush.msra.mxu0 0.0
    %3552 = vmatpush.msra.mxu0 0.0
    %3553 = vmatpush.msra.mxu0 0.0
    %3554 = vmatpush.msra.mxu0 0.0
    %3555 = vmatpush.msra.mxu0 0.0
    %3556 = vmatpush.msra.mxu0 0.0
    %3557 = vmatpush.msra.mxu0 0.0
    %3558 = vmatpush.msra.mxu0 0.0
    %3559 = vmatpush.msra.mxu0 0.0
    %3560 = vmatpush.msra.mxu0 0.0
    %3561 = vmatpush.msra.mxu0 %v3484
    %3562 = vmatpush.msra.mxu0 %v3476
    %3563 = vmatpush.msra.mxu0 %v3468
    %3564 = vmatpush.msra.mxu0 %v3460
    %3565 = vmatmul.f32.gmra.mxu0 %v2102
    %v3566 = vpop.f32.mrf.mxu0
    %v3567 = vadd.f32 0.0, %v3566
    %3568 = vdwg.mxu0
    %3569 = vmatpush.msra.mxu0 0.0
    %3570 = vmatpush.msra.mxu0 0.0
    %3571 = vmatpush.msra.mxu0 0.0
    %3572 = vmatpush.msra.mxu0 0.0
    %3573 = vmatpush.msra.mxu0 0.0
    %3574 = vmatpush.msra.mxu0 0.0
    %3575 = vmatpush.msra.mxu0 0.0
    %3576 = vmatpush.msra.mxu0 0.0
    %3577 = vmatpush.msra.mxu0 0.0
    %3578 = vmatpush.msra.mxu0 0.0
    %3579 = vmatpush.msra.mxu0 0.0
    %3580 = vmatpush.msra.mxu0 0.0
    %3581 = vmatpush.msra.mxu0 %v3485
    %3582 = vmatpush.msra.mxu0 %v3477
    %3583 = vmatpush.msra.mxu0 %v3469
    %3584 = vmatpush.msra.mxu0 %v3461
    %3585 = vmatmul.f32.gmra.mxu0 %v2102
    %v3586 = vpop.f32.mrf.mxu0
    %v3587 = vadd.f32 0.0, %v3586
    %3588 = vdwg.mxu0
    %3589 = vmatpush.msra.mxu0 0.0
    %3590 = vmatpush.msra.mxu0 0.0
    %3591 = vmatpush.msra.mxu0 0.0
    %3592 = vmatpush.msra.mxu0 0.0
    %3593 = vmatpush.msra.mxu0 0.0
    %3594 = vmatpush.msra.mxu0 0.0
    %3595 = vmatpush.msra.mxu0 0.0
    %3596 = vmatpush.msra.mxu0 0.0
    %3597 = vmatpush.msra.mxu0 0.0
    %3598 = vmatpush.msra.mxu0 0.0
    %3599 = vmatpush.msra.mxu0 0.0
    %3600 = vmatpush.msra.mxu0 0.0
    %3601 = vmatpush.msra.mxu0 %v3486
    %3602 = vmatpush.msra.mxu0 %v3478
    %3603 = vmatpush.msra.mxu0 %v3470
    %3604 = vmatpush.msra.mxu0 %v3462
    %3605 = vmatmul.f32.gmra.mxu0 %v2102
    %v3606 = vpop.f32.mrf.mxu0
    %v3607 = vadd.f32 0.0, %v3606
    %3608 = vdwg.mxu0
    %3609 = vmatpush.msra.mxu0 0.0
    %3610 = vmatpush.msra.mxu0 0.0
    %3611 = vmatpush.msra.mxu0 0.0
    %3612 = vmatpush.msra.mxu0 0.0
    %3613 = vmatpush.msra.mxu0 0.0
    %3614 = vmatpush.msra.mxu0 0.0
    %3615 = vmatpush.msra.mxu0 0.0
    %3616 = vmatpush.msra.mxu0 0.0
    %3617 = vmatpush.msra.mxu0 0.0
    %3618 = vmatpush.msra.mxu0 0.0
    %3619 = vmatpush.msra.mxu0 0.0
    %3620 = vmatpush.msra.mxu0 0.0
    %3621 = vmatpush.msra.mxu0 %v3487
    %3622 = vmatpush.msra.mxu0 %v3479
    %3623 = vmatpush.msra.mxu0 %v3471
    %3624 = vmatpush.msra.mxu0 %v3463
    %3625 = vmatmul.f32.gmra.mxu0 %v2102
    %v3626 = vpop.f32.mrf.mxu0
    %v3627 = vadd.f32 0.0, %v3626
    %3628 = vdwg.mxu0
    %3629 = vmatpush.msra.mxu0 0.0
    %3630 = vmatpush.msra.mxu0 0.0
    %3631 = vmatpush.msra.mxu0 0.0
    %3632 = vmatpush.msra.mxu0 0.0
    %3633 = vmatpush.msra.mxu0 0.0
    %3634 = vmatpush.msra.mxu0 0.0
    %3635 = vmatpush.msra.mxu0 0.0
    %3636 = vmatpush.msra.mxu0 0.0
    %3637 = vmatpush.msra.mxu0 0.0
    %3638 = vmatpush.msra.mxu0 0.0
    %3639 = vmatpush.msra.mxu0 0.0
    %3640 = vmatpush.msra.mxu0 0.0
    %3641 = vmatpush.msra.mxu0 %v3488
    %3642 = vmatpush.msra.mxu0 %v3480
    %3643 = vmatpush.msra.mxu0 %v3472
    %3644 = vmatpush.msra.mxu0 %v3464
    %3645 = vmatmul.f32.gmra.mxu0 %v2102
    %v3646 = vpop.f32.mrf.mxu0
    %v3647 = vadd.f32 0.0, %v3646
    %3648 = vdwg.mxu0
    %v3649 = vadd.f32 %v3315, %v3507
    %v3650 = vadd.f32 %v3335, %v3527
    %v3651 = vadd.f32 %v3355, %v3547
    %v3652 = vadd.f32 %v3375, %v3567
    %v3653 = vadd.f32 %v3395, %v3587
    %v3654 = vadd.f32 %v3415, %v3607
    %v3655 = vadd.f32 %v3435, %v3627
    %v3656 = vadd.f32 %v3455, %v3647
    %v3657 = vld [vmem:[#allocation10 + $0x300] sm:$0xff]
    %v3658 = vld [vmem:[#allocation10 + $0x308] sm:$0xff]
    %v3659 = vld [vmem:[#allocation10 + $0x310] sm:$0xff]
    %v3660 = vld [vmem:[#allocation10 + $0x318] sm:$0xff]
    %v3661 = vld [vmem:[#allocation10 + $0x320] sm:$0xff]
    %v3662 = vld [vmem:[#allocation10 + $0x328] sm:$0xff]
    %v3663 = vld [vmem:[#allocation10 + $0x330] sm:$0xff]
    %v3664 = vld [vmem:[#allocation10 + $0x338] sm:$0xff]
    %v3665 = vld [vmem:[#allocation10 + $0x340] sm:$0xff]
    %v3666 = vld [vmem:[#allocation10 + $0x348] sm:$0xff]
    %v3667 = vld [vmem:[#allocation10 + $0x350] sm:$0xff]
    %v3668 = vld [vmem:[#allocation10 + $0x358] sm:$0xff]
    %v3669 = vld [vmem:[#allocation10 + $0x360] sm:$0xff]
    %v3670 = vld [vmem:[#allocation10 + $0x368] sm:$0xff]
    %v3671 = vld [vmem:[#allocation10 + $0x370] sm:$0xff]
    %v3672 = vld [vmem:[#allocation10 + $0x378] sm:$0xff]
    %v3673 = vld [vmem:[#allocation10 + $0x380] sm:$0xff]
    %v3674 = vld [vmem:[#allocation10 + $0x388] sm:$0xff]
    %v3675 = vld [vmem:[#allocation10 + $0x390] sm:$0xff]
    %v3676 = vld [vmem:[#allocation10 + $0x398] sm:$0xff]
    %v3677 = vld [vmem:[#allocation10 + $0x3a0] sm:$0xff]
    %v3678 = vld [vmem:[#allocation10 + $0x3a8] sm:$0xff]
    %v3679 = vld [vmem:[#allocation10 + $0x3b0] sm:$0xff]
    %v3680 = vld [vmem:[#allocation10 + $0x3b8] sm:$0xff]
    %v3681 = vld [vmem:[#allocation10 + $0x3c0] sm:$0xff]
    %v3682 = vld [vmem:[#allocation10 + $0x3c8] sm:$0xff]
    %v3683 = vld [vmem:[#allocation10 + $0x3d0] sm:$0xff]
    %v3684 = vld [vmem:[#allocation10 + $0x3d8] sm:$0xff]
    %v3685 = vld [vmem:[#allocation10 + $0x3e0] sm:$0xff]
    %v3686 = vld [vmem:[#allocation10 + $0x3e8] sm:$0xff]
    %v3687 = vld [vmem:[#allocation10 + $0x3f0] sm:$0xff]
    %v3688 = vld [vmem:[#allocation10 + $0x3f8] sm:$0xff]
    %v3689 = vrot.slane %v116, 3
    %v3690 = vsel %vm168, %v3689, 0
    %3692 = vmatpush.msra.mxu0 0.0
    %3693 = vmatpush.msra.mxu0 0.0
    %3694 = vmatpush.msra.mxu0 0.0
    %3695 = vmatpush.msra.mxu0 0.0
    %3696 = vmatpush.msra.mxu0 0.0
    %3697 = vmatpush.msra.mxu0 0.0
    %3698 = vmatpush.msra.mxu0 0.0
    %3699 = vmatpush.msra.mxu0 0.0
    %3700 = vmatpush.msra.mxu0 0.0
    %3701 = vmatpush.msra.mxu0 0.0
    %3702 = vmatpush.msra.mxu0 0.0
    %3703 = vmatpush.msra.mxu0 0.0
    %3704 = vmatpush.msra.mxu0 %v3681
    %3705 = vmatpush.msra.mxu0 %v3673
    %3706 = vmatpush.msra.mxu0 %v3665
    %3707 = vmatpush.msra.mxu0 %v3657
    %3708 = vmatmul.f32.gmra.mxu0 %v3690
    %v3709 = vpop.f32.mrf.mxu0
    %v3710 = vadd.f32 0.0, %v3709
    %3711 = vdwg.mxu0
    %3712 = vmatpush.msra.mxu0 0.0
    %3713 = vmatpush.msra.mxu0 0.0
    %3714 = vmatpush.msra.mxu0 0.0
    %3715 = vmatpush.msra.mxu0 0.0
    %3716 = vmatpush.msra.mxu0 0.0
    %3717 = vmatpush.msra.mxu0 0.0
    %3718 = vmatpush.msra.mxu0 0.0
    %3719 = vmatpush.msra.mxu0 0.0
    %3720 = vmatpush.msra.mxu0 0.0
    %3721 = vmatpush.msra.mxu0 0.0
    %3722 = vmatpush.msra.mxu0 0.0
    %3723 = vmatpush.msra.mxu0 0.0
    %3724 = vmatpush.msra.mxu0 %v3682
    %3725 = vmatpush.msra.mxu0 %v3674
    %3726 = vmatpush.msra.mxu0 %v3666
    %3727 = vmatpush.msra.mxu0 %v3658
    %3728 = vmatmul.f32.gmra.mxu0 %v3690
    %v3729 = vpop.f32.mrf.mxu0
    %v3730 = vadd.f32 0.0, %v3729
    %3731 = vdwg.mxu0
    %3732 = vmatpush.msra.mxu0 0.0
    %3733 = vmatpush.msra.mxu0 0.0
    %3734 = vmatpush.msra.mxu0 0.0
    %3735 = vmatpush.msra.mxu0 0.0
    %3736 = vmatpush.msra.mxu0 0.0
    %3737 = vmatpush.msra.mxu0 0.0
    %3738 = vmatpush.msra.mxu0 0.0
    %3739 = vmatpush.msra.mxu0 0.0
    %3740 = vmatpush.msra.mxu0 0.0
    %3741 = vmatpush.msra.mxu0 0.0
    %3742 = vmatpush.msra.mxu0 0.0
    %3743 = vmatpush.msra.mxu0 0.0
    %3744 = vmatpush.msra.mxu0 %v3683
    %3745 = vmatpush.msra.mxu0 %v3675
    %3746 = vmatpush.msra.mxu0 %v3667
    %3747 = vmatpush.msra.mxu0 %v3659
    %3748 = vmatmul.f32.gmra.mxu0 %v3690
    %v3749 = vpop.f32.mrf.mxu0
    %v3750 = vadd.f32 0.0, %v3749
    %3751 = vdwg.mxu0
    %3752 = vmatpush.msra.mxu0 0.0
    %3753 = vmatpush.msra.mxu0 0.0
    %3754 = vmatpush.msra.mxu0 0.0
    %3755 = vmatpush.msra.mxu0 0.0
    %3756 = vmatpush.msra.mxu0 0.0
    %3757 = vmatpush.msra.mxu0 0.0
    %3758 = vmatpush.msra.mxu0 0.0
    %3759 = vmatpush.msra.mxu0 0.0
    %3760 = vmatpush.msra.mxu0 0.0
    %3761 = vmatpush.msra.mxu0 0.0
    %3762 = vmatpush.msra.mxu0 0.0
    %3763 = vmatpush.msra.mxu0 0.0
    %3764 = vmatpush.msra.mxu0 %v3684
    %3765 = vmatpush.msra.mxu0 %v3676
    %3766 = vmatpush.msra.mxu0 %v3668
    %3767 = vmatpush.msra.mxu0 %v3660
    %3768 = vmatmul.f32.gmra.mxu0 %v3690
    %v3769 = vpop.f32.mrf.mxu0
    %v3770 = vadd.f32 0.0, %v3769
    %3771 = vdwg.mxu0
    %3772 = vmatpush.msra.mxu0 0.0
    %3773 = vmatpush.msra.mxu0 0.0
    %3774 = vmatpush.msra.mxu0 0.0
    %3775 = vmatpush.msra.mxu0 0.0
    %3776 = vmatpush.msra.mxu0 0.0
    %3777 = vmatpush.msra.mxu0 0.0
    %3778 = vmatpush.msra.mxu0 0.0
    %3779 = vmatpush.msra.mxu0 0.0
    %3780 = vmatpush.msra.mxu0 0.0
    %3781 = vmatpush.msra.mxu0 0.0
    %3782 = vmatpush.msra.mxu0 0.0
    %3783 = vmatpush.msra.mxu0 0.0
    %3784 = vmatpush.msra.mxu0 %v3685
    %3785 = vmatpush.msra.mxu0 %v3677
    %3786 = vmatpush.msra.mxu0 %v3669
    %3787 = vmatpush.msra.mxu0 %v3661
    %3788 = vmatmul.f32.gmra.mxu0 %v3690
    %v3789 = vpop.f32.mrf.mxu0
    %v3790 = vadd.f32 0.0, %v3789
    %3791 = vdwg.mxu0
    %3792 = vmatpush.msra.mxu0 0.0
    %3793 = vmatpush.msra.mxu0 0.0
    %3794 = vmatpush.msra.mxu0 0.0
    %3795 = vmatpush.msra.mxu0 0.0
    %3796 = vmatpush.msra.mxu0 0.0
    %3797 = vmatpush.msra.mxu0 0.0
    %3798 = vmatpush.msra.mxu0 0.0
    %3799 = vmatpush.msra.mxu0 0.0
    %3800 = vmatpush.msra.mxu0 0.0
    %3801 = vmatpush.msra.mxu0 0.0
    %3802 = vmatpush.msra.mxu0 0.0
    %3803 = vmatpush.msra.mxu0 0.0
    %3804 = vmatpush.msra.mxu0 %v3686
    %3805 = vmatpush.msra.mxu0 %v3678
    %3806 = vmatpush.msra.mxu0 %v3670
    %3807 = vmatpush.msra.mxu0 %v3662
    %3808 = vmatmul.f32.gmra.mxu0 %v3690
    %v3809 = vpop.f32.mrf.mxu0
    %v3810 = vadd.f32 0.0, %v3809
    %3811 = vdwg.mxu0
    %3812 = vmatpush.msra.mxu0 0.0
    %3813 = vmatpush.msra.mxu0 0.0
    %3814 = vmatpush.msra.mxu0 0.0
    %3815 = vmatpush.msra.mxu0 0.0
    %3816 = vmatpush.msra.mxu0 0.0
    %3817 = vmatpush.msra.mxu0 0.0
    %3818 = vmatpush.msra.mxu0 0.0
    %3819 = vmatpush.msra.mxu0 0.0
    %3820 = vmatpush.msra.mxu0 0.0
    %3821 = vmatpush.msra.mxu0 0.0
    %3822 = vmatpush.msra.mxu0 0.0
    %3823 = vmatpush.msra.mxu0 0.0
    %3824 = vmatpush.msra.mxu0 %v3687
    %3825 = vmatpush.msra.mxu0 %v3679
    %3826 = vmatpush.msra.mxu0 %v3671
    %3827 = vmatpush.msra.mxu0 %v3663
    %3828 = vmatmul.f32.gmra.mxu0 %v3690
    %v3829 = vpop.f32.mrf.mxu0
    %v3830 = vadd.f32 0.0, %v3829
    %3831 = vdwg.mxu0
    %3832 = vmatpush.msra.mxu0 0.0
    %3833 = vmatpush.msra.mxu0 0.0
    %3834 = vmatpush.msra.mxu0 0.0
    %3835 = vmatpush.msra.mxu0 0.0
    %3836 = vmatpush.msra.mxu0 0.0
    %3837 = vmatpush.msra.mxu0 0.0
    %3838 = vmatpush.msra.mxu0 0.0
    %3839 = vmatpush.msra.mxu0 0.0
    %3840 = vmatpush.msra.mxu0 0.0
    %3841 = vmatpush.msra.mxu0 0.0
    %3842 = vmatpush.msra.mxu0 0.0
    %3843 = vmatpush.msra.mxu0 0.0
    %3844 = vmatpush.msra.mxu0 %v3688
    %3845 = vmatpush.msra.mxu0 %v3680
    %3846 = vmatpush.msra.mxu0 %v3672
    %3847 = vmatpush.msra.mxu0 %v3664
    %3848 = vmatmul.f32.gmra.mxu0 %v3690
    %v3849 = vpop.f32.mrf.mxu0
    %v3850 = vadd.f32 0.0, %v3849
    %3851 = vdwg.mxu0
    %v3852 = vadd.f32 %v3649, %v3710
    %v3853 = vadd.f32 %v3650, %v3730
    %v3854 = vadd.f32 %v3651, %v3750
    %v3855 = vadd.f32 %v3652, %v3770
    %v3856 = vadd.f32 %v3653, %v3790
    %v3857 = vadd.f32 %v3654, %v3810
    %v3858 = vadd.f32 %v3655, %v3830
    %v3859 = vadd.f32 %v3656, %v3850
    %v3861 = vperm.slane %v3072, 0
    %v3862 = vperm.slane %v3072, 1
    %v3863 = vperm.slane %v3072, 2
    %v3864 = vperm.slane %v3072, 3
    %v3865 = vperm.slane %v3072, 4
    %v3866 = vperm.slane %v3072, 5
    %v3867 = vperm.slane %v3072, 6
    %v3868 = vperm.slane %v3072, 7
    %v3877 = vadd.f32 %v3852, %v3861
    %v3878 = vadd.f32 %v3853, %v3862
    %v3879 = vadd.f32 %v3854, %v3863
    %v3880 = vadd.f32 %v3855, %v3864
    %v3881 = vadd.f32 %v3856, %v3865
    %v3882 = vadd.f32 %v3857, %v3866
    %v3883 = vadd.f32 %v3858, %v3867
    %v3884 = vadd.f32 %v3859, %v3868
    %v3885 = vtanh.pop %v3877
    %v3886 = vtanh.pop %v3878
    %v3887 = vtanh.pop %v3879
    %v3888 = vtanh.pop %v3880
    %v3889 = vtanh.pop %v3881
    %v3890 = vtanh.pop %v3882
    %v3891 = vtanh.pop %v3883
    %v3892 = vtanh.pop %v3884
    %vm3893 = vcmask 1044480
    %v3894 = vsel %vm3893, %v3885, -inf
    %v3895 = vrot.slane %v3894, 4
    %v3896 = vmax.f32 %v3894, %v3895
    %v3897 = vrot.slane %v3896, 2
    %v3898 = vmax.f32 %v3896, %v3897
    %v3899 = vrot.slane %v3898, 1
    %v3900 = vmax.f32 %v3898, %v3899
    %v3901 = vsel %vm3893, %v3886, -inf
    %v3902 = vrot.slane %v3901, 4
    %v3903 = vmax.f32 %v3901, %v3902
    %v3904 = vrot.slane %v3903, 2
    %v3905 = vmax.f32 %v3903, %v3904
    %v3906 = vrot.slane %v3905, 1
    %v3907 = vmax.f32 %v3905, %v3906
    %v3908 = vsel %vm3893, %v3887, -inf
    %v3909 = vrot.slane %v3908, 4
    %v3910 = vmax.f32 %v3908, %v3909
    %v3911 = vrot.slane %v3910, 2
    %v3912 = vmax.f32 %v3910, %v3911
    %v3913 = vrot.slane %v3912, 1
    %v3914 = vmax.f32 %v3912, %v3913
    %v3915 = vsel %vm3893, %v3888, -inf
    %v3916 = vrot.slane %v3915, 4
    %v3917 = vmax.f32 %v3915, %v3916
    %v3918 = vrot.slane %v3917, 2
    %v3919 = vmax.f32 %v3917, %v3918
    %v3920 = vrot.slane %v3919, 1
    %v3921 = vmax.f32 %v3919, %v3920
    %v3922 = vsel %vm3893, %v3889, -inf
    %v3923 = vrot.slane %v3922, 4
    %v3924 = vmax.f32 %v3922, %v3923
    %v3925 = vrot.slane %v3924, 2
    %v3926 = vmax.f32 %v3924, %v3925
    %v3927 = vrot.slane %v3926, 1
    %v3928 = vmax.f32 %v3926, %v3927
    %v3929 = vsel %vm3893, %v3890, -inf
    %v3930 = vrot.slane %v3929, 4
    %v3931 = vmax.f32 %v3929, %v3930
    %v3932 = vrot.slane %v3931, 2
    %v3933 = vmax.f32 %v3931, %v3932
    %v3934 = vrot.slane %v3933, 1
    %v3935 = vmax.f32 %v3933, %v3934
    %v3936 = vsel %vm3893, %v3891, -inf
    %v3937 = vrot.slane %v3936, 4
    %v3938 = vmax.f32 %v3936, %v3937
    %v3939 = vrot.slane %v3938, 2
    %v3940 = vmax.f32 %v3938, %v3939
    %v3941 = vrot.slane %v3940, 1
    %v3942 = vmax.f32 %v3940, %v3941
    %v3943 = vsel %vm3893, %v3892, -inf
    %v3944 = vrot.slane %v3943, 4
    %v3945 = vmax.f32 %v3943, %v3944
    %v3946 = vrot.slane %v3945, 2
    %v3947 = vmax.f32 %v3945, %v3946
    %v3948 = vrot.slane %v3947, 1
    %v3949 = vmax.f32 %v3947, %v3948
    %v3958 = vrot.slane %v3907, 7
    %v3959 = vrot.slane %v3914, 6
    %v3960 = vrot.slane %v3921, 5
    %v3961 = vrot.slane %v3928, 4
    %v3962 = vrot.slane %v3935, 3
    %v3963 = vrot.slane %v3942, 2
    %v3964 = vrot.slane %v3949, 1
    %v3965 = vsel %vm403, %v3900, %v3958
    %v3966 = vsel %vm405, %v3959, %v3960
    %v3967 = vsel %vm407, %v3965, %v3966
    %v3968 = vsel %vm409, %v3961, %v3962
    %v3969 = vsel %vm411, %v3963, %v3964
    %v3970 = vsel %vm413, %v3968, %v3969
    %v3971 = vsel %vm415, %v3967, %v3970
    %s3973 = scalar_lea.vmem [#allocation13], 3
    %3974 = vst [vmem:[%s3973] ss:$4 sm:$0xff] %v3971
    %v3975 = vld [vmem:[#allocation10] sm:$0xff]
    %v3976 = vld [vmem:[#allocation10 + $0x8] sm:$0xff]
    %v3977 = vld [vmem:[#allocation10 + $0x10] sm:$0xff]
    %v3978 = vld [vmem:[#allocation10 + $0x18] sm:$0xff]
    %v3979 = vld [vmem:[#allocation10 + $0x20] sm:$0xff]
    %v3980 = vld [vmem:[#allocation10 + $0x28] sm:$0xff]
    %v3981 = vld [vmem:[#allocation10 + $0x30] sm:$0xff]
    %v3982 = vld [vmem:[#allocation10 + $0x38] sm:$0xff]
    %v3983 = vld [vmem:[#allocation10 + $0x40] sm:$0xff]
    %v3984 = vld [vmem:[#allocation10 + $0x48] sm:$0xff]
    %v3985 = vld [vmem:[#allocation10 + $0x50] sm:$0xff]
    %v3986 = vld [vmem:[#allocation10 + $0x58] sm:$0xff]
    %v3987 = vld [vmem:[#allocation10 + $0x60] sm:$0xff]
    %v3988 = vld [vmem:[#allocation10 + $0x68] sm:$0xff]
    %v3989 = vld [vmem:[#allocation10 + $0x70] sm:$0xff]
    %v3990 = vld [vmem:[#allocation10 + $0x78] sm:$0xff]
    %v3991 = vld [vmem:[#allocation10 + $0x80] sm:$0xff]
    %v3992 = vld [vmem:[#allocation10 + $0x88] sm:$0xff]
    %v3993 = vld [vmem:[#allocation10 + $0x90] sm:$0xff]
    %v3994 = vld [vmem:[#allocation10 + $0x98] sm:$0xff]
    %v3995 = vld [vmem:[#allocation10 + $0xa0] sm:$0xff]
    %v3996 = vld [vmem:[#allocation10 + $0xa8] sm:$0xff]
    %v3997 = vld [vmem:[#allocation10 + $0xb0] sm:$0xff]
    %v3998 = vld [vmem:[#allocation10 + $0xb8] sm:$0xff]
    %v3999 = vld [vmem:[#allocation10 + $0xc0] sm:$0xff]
    %v4000 = vld [vmem:[#allocation10 + $0xc8] sm:$0xff]
    %v4001 = vld [vmem:[#allocation10 + $0xd0] sm:$0xff]
    %v4002 = vld [vmem:[#allocation10 + $0xd8] sm:$0xff]
    %v4003 = vld [vmem:[#allocation10 + $0xe0] sm:$0xff]
    %v4004 = vld [vmem:[#allocation10 + $0xe8] sm:$0xff]
    %v4005 = vld [vmem:[#allocation10 + $0xf0] sm:$0xff]
    %v4006 = vld [vmem:[#allocation10 + $0xf8] sm:$0xff]
    %v4007 = vld [vmem:[#allocation10 + $0x100] sm:$0xff]
    %v4008 = vld [vmem:[#allocation10 + $0x108] sm:$0xff]
    %v4009 = vld [vmem:[#allocation10 + $0x110] sm:$0xff]
    %v4010 = vld [vmem:[#allocation10 + $0x118] sm:$0xff]
    %v4011 = vld [vmem:[#allocation10 + $0x120] sm:$0xff]
    %v4012 = vld [vmem:[#allocation10 + $0x128] sm:$0xff]
    %v4013 = vld [vmem:[#allocation10 + $0x130] sm:$0xff]
    %v4014 = vld [vmem:[#allocation10 + $0x138] sm:$0xff]
    %v4015 = vld [vmem:[#allocation10 + $0x140] sm:$0xff]
    %v4016 = vld [vmem:[#allocation10 + $0x148] sm:$0xff]
    %v4017 = vld [vmem:[#allocation10 + $0x150] sm:$0xff]
    %v4018 = vld [vmem:[#allocation10 + $0x158] sm:$0xff]
    %v4019 = vld [vmem:[#allocation10 + $0x160] sm:$0xff]
    %v4020 = vld [vmem:[#allocation10 + $0x168] sm:$0xff]
    %v4021 = vld [vmem:[#allocation10 + $0x170] sm:$0xff]
    %v4022 = vld [vmem:[#allocation10 + $0x178] sm:$0xff]
    %v4023 = vld [vmem:[#allocation10 + $0x180] sm:$0xff]
    %v4024 = vld [vmem:[#allocation10 + $0x188] sm:$0xff]
    %v4025 = vld [vmem:[#allocation10 + $0x190] sm:$0xff]
    %v4026 = vld [vmem:[#allocation10 + $0x198] sm:$0xff]
    %v4027 = vld [vmem:[#allocation10 + $0x1a0] sm:$0xff]
    %v4028 = vld [vmem:[#allocation10 + $0x1a8] sm:$0xff]
    %v4029 = vld [vmem:[#allocation10 + $0x1b0] sm:$0xff]
    %v4030 = vld [vmem:[#allocation10 + $0x1b8] sm:$0xff]
    %v4031 = vld [vmem:[#allocation10 + $0x1c0] sm:$0xff]
    %v4032 = vld [vmem:[#allocation10 + $0x1c8] sm:$0xff]
    %v4033 = vld [vmem:[#allocation10 + $0x1d0] sm:$0xff]
    %v4034 = vld [vmem:[#allocation10 + $0x1d8] sm:$0xff]
    %v4035 = vld [vmem:[#allocation10 + $0x1e0] sm:$0xff]
    %v4036 = vld [vmem:[#allocation10 + $0x1e8] sm:$0xff]
    %v4037 = vld [vmem:[#allocation10 + $0x1f0] sm:$0xff]
    %v4038 = vld [vmem:[#allocation10 + $0x1f8] sm:$0xff]
    %4039 = vmatpush.msra.mxu0 0.0
    %4040 = vmatpush.msra.mxu0 0.0
    %4041 = vmatpush.msra.mxu0 0.0
    %4042 = vmatpush.msra.mxu0 0.0
    %4043 = vmatpush.msra.mxu0 0.0
    %4044 = vmatpush.msra.mxu0 0.0
    %4045 = vmatpush.msra.mxu0 0.0
    %4046 = vmatpush.msra.mxu0 0.0
    %4047 = vmatpush.msra.mxu0 0.0
    %4048 = vmatpush.msra.mxu0 0.0
    %4049 = vmatpush.msra.mxu0 0.0
    %4050 = vmatpush.msra.mxu0 0.0
    %4051 = vmatpush.msra.mxu0 %v4031
    %4052 = vmatpush.msra.mxu0 %v4023
    %4053 = vmatpush.msra.mxu0 %v4015
    %4054 = vmatpush.msra.mxu0 %v4007
    %4055 = vmatmul.f32.gmra.mxu0 %v1264
    %v4056 = vpop.f32.mrf.mxu0
    %v4057 = vadd.f32 0.0, %v4056
    %4058 = vdwg.mxu0
    %4059 = vmatpush.msra.mxu0 0.0
    %4060 = vmatpush.msra.mxu0 0.0
    %4061 = vmatpush.msra.mxu0 0.0
    %4062 = vmatpush.msra.mxu0 0.0
    %4063 = vmatpush.msra.mxu0 0.0
    %4064 = vmatpush.msra.mxu0 0.0
    %4065 = vmatpush.msra.mxu0 0.0
    %4066 = vmatpush.msra.mxu0 0.0
    %4067 = vmatpush.msra.mxu0 0.0
    %4068 = vmatpush.msra.mxu0 0.0
    %4069 = vmatpush.msra.mxu0 0.0
    %4070 = vmatpush.msra.mxu0 0.0
    %4071 = vmatpush.msra.mxu0 %v4032
    %4072 = vmatpush.msra.mxu0 %v4024
    %4073 = vmatpush.msra.mxu0 %v4016
    %4074 = vmatpush.msra.mxu0 %v4008
    %4075 = vmatmul.f32.gmra.mxu0 %v1264
    %v4076 = vpop.f32.mrf.mxu0
    %v4077 = vadd.f32 0.0, %v4076
    %4078 = vdwg.mxu0
    %4079 = vmatpush.msra.mxu0 0.0
    %4080 = vmatpush.msra.mxu0 0.0
    %4081 = vmatpush.msra.mxu0 0.0
    %4082 = vmatpush.msra.mxu0 0.0
    %4083 = vmatpush.msra.mxu0 0.0
    %4084 = vmatpush.msra.mxu0 0.0
    %4085 = vmatpush.msra.mxu0 0.0
    %4086 = vmatpush.msra.mxu0 0.0
    %4087 = vmatpush.msra.mxu0 0.0
    %4088 = vmatpush.msra.mxu0 0.0
    %4089 = vmatpush.msra.mxu0 0.0
    %4090 = vmatpush.msra.mxu0 0.0
    %4091 = vmatpush.msra.mxu0 %v4033
    %4092 = vmatpush.msra.mxu0 %v4025
    %4093 = vmatpush.msra.mxu0 %v4017
    %4094 = vmatpush.msra.mxu0 %v4009
    %4095 = vmatmul.f32.gmra.mxu0 %v1264
    %v4096 = vpop.f32.mrf.mxu0
    %v4097 = vadd.f32 0.0, %v4096
    %4098 = vdwg.mxu0
    %4099 = vmatpush.msra.mxu0 0.0
    %4100 = vmatpush.msra.mxu0 0.0
    %4101 = vmatpush.msra.mxu0 0.0
    %4102 = vmatpush.msra.mxu0 0.0
    %4103 = vmatpush.msra.mxu0 0.0
    %4104 = vmatpush.msra.mxu0 0.0
    %4105 = vmatpush.msra.mxu0 0.0
    %4106 = vmatpush.msra.mxu0 0.0
    %4107 = vmatpush.msra.mxu0 0.0
    %4108 = vmatpush.msra.mxu0 0.0
    %4109 = vmatpush.msra.mxu0 0.0
    %4110 = vmatpush.msra.mxu0 0.0
    %4111 = vmatpush.msra.mxu0 %v4034
    %4112 = vmatpush.msra.mxu0 %v4026
    %4113 = vmatpush.msra.mxu0 %v4018
    %4114 = vmatpush.msra.mxu0 %v4010
    %4115 = vmatmul.f32.gmra.mxu0 %v1264
    %v4116 = vpop.f32.mrf.mxu0
    %v4117 = vadd.f32 0.0, %v4116
    %4118 = vdwg.mxu0
    %4119 = vmatpush.msra.mxu0 0.0
    %4120 = vmatpush.msra.mxu0 0.0
    %4121 = vmatpush.msra.mxu0 0.0
    %4122 = vmatpush.msra.mxu0 0.0
    %4123 = vmatpush.msra.mxu0 0.0
    %4124 = vmatpush.msra.mxu0 0.0
    %4125 = vmatpush.msra.mxu0 0.0
    %4126 = vmatpush.msra.mxu0 0.0
    %4127 = vmatpush.msra.mxu0 0.0
    %4128 = vmatpush.msra.mxu0 0.0
    %4129 = vmatpush.msra.mxu0 0.0
    %4130 = vmatpush.msra.mxu0 0.0
    %4131 = vmatpush.msra.mxu0 %v4035
    %4132 = vmatpush.msra.mxu0 %v4027
    %4133 = vmatpush.msra.mxu0 %v4019
    %4134 = vmatpush.msra.mxu0 %v4011
    %4135 = vmatmul.f32.gmra.mxu0 %v1264
    %v4136 = vpop.f32.mrf.mxu0
    %v4137 = vadd.f32 0.0, %v4136
    %4138 = vdwg.mxu0
    %4139 = vmatpush.msra.mxu0 0.0
    %4140 = vmatpush.msra.mxu0 0.0
    %4141 = vmatpush.msra.mxu0 0.0
    %4142 = vmatpush.msra.mxu0 0.0
    %4143 = vmatpush.msra.mxu0 0.0
    %4144 = vmatpush.msra.mxu0 0.0
    %4145 = vmatpush.msra.mxu0 0.0
    %4146 = vmatpush.msra.mxu0 0.0
    %4147 = vmatpush.msra.mxu0 0.0
    %4148 = vmatpush.msra.mxu0 0.0
    %4149 = vmatpush.msra.mxu0 0.0
    %4150 = vmatpush.msra.mxu0 0.0
    %4151 = vmatpush.msra.mxu0 %v4036
    %4152 = vmatpush.msra.mxu0 %v4028
    %4153 = vmatpush.msra.mxu0 %v4020
    %4154 = vmatpush.msra.mxu0 %v4012
    %4155 = vmatmul.f32.gmra.mxu0 %v1264
    %v4156 = vpop.f32.mrf.mxu0
    %v4157 = vadd.f32 0.0, %v4156
    %4158 = vdwg.mxu0
    %4159 = vmatpush.msra.mxu0 0.0
    %4160 = vmatpush.msra.mxu0 0.0
    %4161 = vmatpush.msra.mxu0 0.0
    %4162 = vmatpush.msra.mxu0 0.0
    %4163 = vmatpush.msra.mxu0 0.0
    %4164 = vmatpush.msra.mxu0 0.0
    %4165 = vmatpush.msra.mxu0 0.0
    %4166 = vmatpush.msra.mxu0 0.0
    %4167 = vmatpush.msra.mxu0 0.0
    %4168 = vmatpush.msra.mxu0 0.0
    %4169 = vmatpush.msra.mxu0 0.0
    %4170 = vmatpush.msra.mxu0 0.0
    %4171 = vmatpush.msra.mxu0 %v4037
    %4172 = vmatpush.msra.mxu0 %v4029
    %4173 = vmatpush.msra.mxu0 %v4021
    %4174 = vmatpush.msra.mxu0 %v4013
    %4175 = vmatmul.f32.gmra.mxu0 %v1264
    %v4176 = vpop.f32.mrf.mxu0
    %v4177 = vadd.f32 0.0, %v4176
    %4178 = vdwg.mxu0
    %4179 = vmatpush.msra.mxu0 0.0
    %4180 = vmatpush.msra.mxu0 0.0
    %4181 = vmatpush.msra.mxu0 0.0
    %4182 = vmatpush.msra.mxu0 0.0
    %4183 = vmatpush.msra.mxu0 0.0
    %4184 = vmatpush.msra.mxu0 0.0
    %4185 = vmatpush.msra.mxu0 0.0
    %4186 = vmatpush.msra.mxu0 0.0
    %4187 = vmatpush.msra.mxu0 0.0
    %4188 = vmatpush.msra.mxu0 0.0
    %4189 = vmatpush.msra.mxu0 0.0
    %4190 = vmatpush.msra.mxu0 0.0
    %4191 = vmatpush.msra.mxu0 %v4038
    %4192 = vmatpush.msra.mxu0 %v4030
    %4193 = vmatpush.msra.mxu0 %v4022
    %4194 = vmatpush.msra.mxu0 %v4014
    %4195 = vmatmul.f32.gmra.mxu0 %v1264
    %v4196 = vpop.f32.mrf.mxu0
    %v4197 = vadd.f32 0.0, %v4196
    %4198 = vdwg.mxu0
    %4199 = vmatpush.msra.mxu0 0.0
    %4200 = vmatpush.msra.mxu0 0.0
    %4201 = vmatpush.msra.mxu0 0.0
    %4202 = vmatpush.msra.mxu0 0.0
    %4203 = vmatpush.msra.mxu0 0.0
    %4204 = vmatpush.msra.mxu0 0.0
    %4205 = vmatpush.msra.mxu0 0.0
    %4206 = vmatpush.msra.mxu0 0.0
    %4207 = vmatpush.msra.mxu0 0.0
    %4208 = vmatpush.msra.mxu0 0.0
    %4209 = vmatpush.msra.mxu0 0.0
    %4210 = vmatpush.msra.mxu0 0.0
    %4211 = vmatpush.msra.mxu0 %v3999
    %4212 = vmatpush.msra.mxu0 %v3991
    %4213 = vmatpush.msra.mxu0 %v3983
    %4214 = vmatpush.msra.mxu0 %v3975
    %4215 = vmatmul.f32.gmra.mxu0 %v452
    %v4216 = vpop.f32.mrf.mxu0
    %v4217 = vadd.f32 %v4057, %v4216
    %4218 = vdwg.mxu0
    %4219 = vmatpush.msra.mxu0 0.0
    %4220 = vmatpush.msra.mxu0 0.0
    %4221 = vmatpush.msra.mxu0 0.0
    %4222 = vmatpush.msra.mxu0 0.0
    %4223 = vmatpush.msra.mxu0 0.0
    %4224 = vmatpush.msra.mxu0 0.0
    %4225 = vmatpush.msra.mxu0 0.0
    %4226 = vmatpush.msra.mxu0 0.0
    %4227 = vmatpush.msra.mxu0 0.0
    %4228 = vmatpush.msra.mxu0 0.0
    %4229 = vmatpush.msra.mxu0 0.0
    %4230 = vmatpush.msra.mxu0 0.0
    %4231 = vmatpush.msra.mxu0 %v4000
    %4232 = vmatpush.msra.mxu0 %v3992
    %4233 = vmatpush.msra.mxu0 %v3984
    %4234 = vmatpush.msra.mxu0 %v3976
    %4235 = vmatmul.f32.gmra.mxu0 %v452
    %v4236 = vpop.f32.mrf.mxu0
    %v4237 = vadd.f32 %v4077, %v4236
    %4238 = vdwg.mxu0
    %4239 = vmatpush.msra.mxu0 0.0
    %4240 = vmatpush.msra.mxu0 0.0
    %4241 = vmatpush.msra.mxu0 0.0
    %4242 = vmatpush.msra.mxu0 0.0
    %4243 = vmatpush.msra.mxu0 0.0
    %4244 = vmatpush.msra.mxu0 0.0
    %4245 = vmatpush.msra.mxu0 0.0
    %4246 = vmatpush.msra.mxu0 0.0
    %4247 = vmatpush.msra.mxu0 0.0
    %4248 = vmatpush.msra.mxu0 0.0
    %4249 = vmatpush.msra.mxu0 0.0
    %4250 = vmatpush.msra.mxu0 0.0
    %4251 = vmatpush.msra.mxu0 %v4001
    %4252 = vmatpush.msra.mxu0 %v3993
    %4253 = vmatpush.msra.mxu0 %v3985
    %4254 = vmatpush.msra.mxu0 %v3977
    %4255 = vmatmul.f32.gmra.mxu0 %v452
    %v4256 = vpop.f32.mrf.mxu0
    %v4257 = vadd.f32 %v4097, %v4256
    %4258 = vdwg.mxu0
    %4259 = vmatpush.msra.mxu0 0.0
    %4260 = vmatpush.msra.mxu0 0.0
    %4261 = vmatpush.msra.mxu0 0.0
    %4262 = vmatpush.msra.mxu0 0.0
    %4263 = vmatpush.msra.mxu0 0.0
    %4264 = vmatpush.msra.mxu0 0.0
    %4265 = vmatpush.msra.mxu0 0.0
    %4266 = vmatpush.msra.mxu0 0.0
    %4267 = vmatpush.msra.mxu0 0.0
    %4268 = vmatpush.msra.mxu0 0.0
    %4269 = vmatpush.msra.mxu0 0.0
    %4270 = vmatpush.msra.mxu0 0.0
    %4271 = vmatpush.msra.mxu0 %v4002
    %4272 = vmatpush.msra.mxu0 %v3994
    %4273 = vmatpush.msra.mxu0 %v3986
    %4274 = vmatpush.msra.mxu0 %v3978
    %4275 = vmatmul.f32.gmra.mxu0 %v452
    %v4276 = vpop.f32.mrf.mxu0
    %v4277 = vadd.f32 %v4117, %v4276
    %4278 = vdwg.mxu0
    %4279 = vmatpush.msra.mxu0 0.0
    %4280 = vmatpush.msra.mxu0 0.0
    %4281 = vmatpush.msra.mxu0 0.0
    %4282 = vmatpush.msra.mxu0 0.0
    %4283 = vmatpush.msra.mxu0 0.0
    %4284 = vmatpush.msra.mxu0 0.0
    %4285 = vmatpush.msra.mxu0 0.0
    %4286 = vmatpush.msra.mxu0 0.0
    %4287 = vmatpush.msra.mxu0 0.0
    %4288 = vmatpush.msra.mxu0 0.0
    %4289 = vmatpush.msra.mxu0 0.0
    %4290 = vmatpush.msra.mxu0 0.0
    %4291 = vmatpush.msra.mxu0 %v4003
    %4292 = vmatpush.msra.mxu0 %v3995
    %4293 = vmatpush.msra.mxu0 %v3987
    %4294 = vmatpush.msra.mxu0 %v3979
    %4295 = vmatmul.f32.gmra.mxu0 %v452
    %v4296 = vpop.f32.mrf.mxu0
    %v4297 = vadd.f32 %v4137, %v4296
    %4298 = vdwg.mxu0
    %4299 = vmatpush.msra.mxu0 0.0
    %4300 = vmatpush.msra.mxu0 0.0
    %4301 = vmatpush.msra.mxu0 0.0
    %4302 = vmatpush.msra.mxu0 0.0
    %4303 = vmatpush.msra.mxu0 0.0
    %4304 = vmatpush.msra.mxu0 0.0
    %4305 = vmatpush.msra.mxu0 0.0
    %4306 = vmatpush.msra.mxu0 0.0
    %4307 = vmatpush.msra.mxu0 0.0
    %4308 = vmatpush.msra.mxu0 0.0
    %4309 = vmatpush.msra.mxu0 0.0
    %4310 = vmatpush.msra.mxu0 0.0
    %4311 = vmatpush.msra.mxu0 %v4004
    %4312 = vmatpush.msra.mxu0 %v3996
    %4313 = vmatpush.msra.mxu0 %v3988
    %4314 = vmatpush.msra.mxu0 %v3980
    %4315 = vmatmul.f32.gmra.mxu0 %v452
    %v4316 = vpop.f32.mrf.mxu0
    %v4317 = vadd.f32 %v4157, %v4316
    %4318 = vdwg.mxu0
    %4319 = vmatpush.msra.mxu0 0.0
    %4320 = vmatpush.msra.mxu0 0.0
    %4321 = vmatpush.msra.mxu0 0.0
    %4322 = vmatpush.msra.mxu0 0.0
    %4323 = vmatpush.msra.mxu0 0.0
    %4324 = vmatpush.msra.mxu0 0.0
    %4325 = vmatpush.msra.mxu0 0.0
    %4326 = vmatpush.msra.mxu0 0.0
    %4327 = vmatpush.msra.mxu0 0.0
    %4328 = vmatpush.msra.mxu0 0.0
    %4329 = vmatpush.msra.mxu0 0.0
    %4330 = vmatpush.msra.mxu0 0.0
    %4331 = vmatpush.msra.mxu0 %v4005
    %4332 = vmatpush.msra.mxu0 %v3997
    %4333 = vmatpush.msra.mxu0 %v3989
    %4334 = vmatpush.msra.mxu0 %v3981
    %4335 = vmatmul.f32.gmra.mxu0 %v452
    %v4336 = vpop.f32.mrf.mxu0
    %v4337 = vadd.f32 %v4177, %v4336
    %4338 = vdwg.mxu0
    %4339 = vmatpush.msra.mxu0 0.0
    %4340 = vmatpush.msra.mxu0 0.0
    %4341 = vmatpush.msra.mxu0 0.0
    %4342 = vmatpush.msra.mxu0 0.0
    %4343 = vmatpush.msra.mxu0 0.0
    %4344 = vmatpush.msra.mxu0 0.0
    %4345 = vmatpush.msra.mxu0 0.0
    %4346 = vmatpush.msra.mxu0 0.0
    %4347 = vmatpush.msra.mxu0 0.0
    %4348 = vmatpush.msra.mxu0 0.0
    %4349 = vmatpush.msra.mxu0 0.0
    %4350 = vmatpush.msra.mxu0 0.0
    %4351 = vmatpush.msra.mxu0 %v4006
    %4352 = vmatpush.msra.mxu0 %v3998
    %4353 = vmatpush.msra.mxu0 %v3990
    %4354 = vmatpush.msra.mxu0 %v3982
    %4355 = vmatmul.f32.gmra.mxu0 %v452
    %v4356 = vpop.f32.mrf.mxu0
    %v4357 = vadd.f32 %v4197, %v4356
    %4358 = vdwg.mxu0
    %v4359 = vld [vmem:[#allocation10 + $0x200] sm:$0xff]
    %v4360 = vld [vmem:[#allocation10 + $0x208] sm:$0xff]
    %v4361 = vld [vmem:[#allocation10 + $0x210] sm:$0xff]
    %v4362 = vld [vmem:[#allocation10 + $0x218] sm:$0xff]
    %v4363 = vld [vmem:[#allocation10 + $0x220] sm:$0xff]
    %v4364 = vld [vmem:[#allocation10 + $0x228] sm:$0xff]
    %v4365 = vld [vmem:[#allocation10 + $0x230] sm:$0xff]
    %v4366 = vld [vmem:[#allocation10 + $0x238] sm:$0xff]
    %v4367 = vld [vmem:[#allocation10 + $0x240] sm:$0xff]
    %v4368 = vld [vmem:[#allocation10 + $0x248] sm:$0xff]
    %v4369 = vld [vmem:[#allocation10 + $0x250] sm:$0xff]
    %v4370 = vld [vmem:[#allocation10 + $0x258] sm:$0xff]
    %v4371 = vld [vmem:[#allocation10 + $0x260] sm:$0xff]
    %v4372 = vld [vmem:[#allocation10 + $0x268] sm:$0xff]
    %v4373 = vld [vmem:[#allocation10 + $0x270] sm:$0xff]
    %v4374 = vld [vmem:[#allocation10 + $0x278] sm:$0xff]
    %v4375 = vld [vmem:[#allocation10 + $0x280] sm:$0xff]
    %v4376 = vld [vmem:[#allocation10 + $0x288] sm:$0xff]
    %v4377 = vld [vmem:[#allocation10 + $0x290] sm:$0xff]
    %v4378 = vld [vmem:[#allocation10 + $0x298] sm:$0xff]
    %v4379 = vld [vmem:[#allocation10 + $0x2a0] sm:$0xff]
    %v4380 = vld [vmem:[#allocation10 + $0x2a8] sm:$0xff]
    %v4381 = vld [vmem:[#allocation10 + $0x2b0] sm:$0xff]
    %v4382 = vld [vmem:[#allocation10 + $0x2b8] sm:$0xff]
    %v4383 = vld [vmem:[#allocation10 + $0x2c0] sm:$0xff]
    %v4384 = vld [vmem:[#allocation10 + $0x2c8] sm:$0xff]
    %v4385 = vld [vmem:[#allocation10 + $0x2d0] sm:$0xff]
    %v4386 = vld [vmem:[#allocation10 + $0x2d8] sm:$0xff]
    %v4387 = vld [vmem:[#allocation10 + $0x2e0] sm:$0xff]
    %v4388 = vld [vmem:[#allocation10 + $0x2e8] sm:$0xff]
    %v4389 = vld [vmem:[#allocation10 + $0x2f0] sm:$0xff]
    %v4390 = vld [vmem:[#allocation10 + $0x2f8] sm:$0xff]
    %4391 = vmatpush.msra.mxu0 0.0
    %4392 = vmatpush.msra.mxu0 0.0
    %4393 = vmatpush.msra.mxu0 0.0
    %4394 = vmatpush.msra.mxu0 0.0
    %4395 = vmatpush.msra.mxu0 0.0
    %4396 = vmatpush.msra.mxu0 0.0
    %4397 = vmatpush.msra.mxu0 0.0
    %4398 = vmatpush.msra.mxu0 0.0
    %4399 = vmatpush.msra.mxu0 0.0
    %4400 = vmatpush.msra.mxu0 0.0
    %4401 = vmatpush.msra.mxu0 0.0
    %4402 = vmatpush.msra.mxu0 0.0
    %4403 = vmatpush.msra.mxu0 %v4383
    %4404 = vmatpush.msra.mxu0 %v4375
    %4405 = vmatpush.msra.mxu0 %v4367
    %4406 = vmatpush.msra.mxu0 %v4359
    %4407 = vmatmul.f32.gmra.mxu0 %v2804
    %v4408 = vpop.f32.mrf.mxu0
    %v4409 = vadd.f32 0.0, %v4408
    %4410 = vdwg.mxu0
    %4411 = vmatpush.msra.mxu0 0.0
    %4412 = vmatpush.msra.mxu0 0.0
    %4413 = vmatpush.msra.mxu0 0.0
    %4414 = vmatpush.msra.mxu0 0.0
    %4415 = vmatpush.msra.mxu0 0.0
    %4416 = vmatpush.msra.mxu0 0.0
    %4417 = vmatpush.msra.mxu0 0.0
    %4418 = vmatpush.msra.mxu0 0.0
    %4419 = vmatpush.msra.mxu0 0.0
    %4420 = vmatpush.msra.mxu0 0.0
    %4421 = vmatpush.msra.mxu0 0.0
    %4422 = vmatpush.msra.mxu0 0.0
    %4423 = vmatpush.msra.mxu0 %v4384
    %4424 = vmatpush.msra.mxu0 %v4376
    %4425 = vmatpush.msra.mxu0 %v4368
    %4426 = vmatpush.msra.mxu0 %v4360
    %4427 = vmatmul.f32.gmra.mxu0 %v2804
    %v4428 = vpop.f32.mrf.mxu0
    %v4429 = vadd.f32 0.0, %v4428
    %4430 = vdwg.mxu0
    %4431 = vmatpush.msra.mxu0 0.0
    %4432 = vmatpush.msra.mxu0 0.0
    %4433 = vmatpush.msra.mxu0 0.0
    %4434 = vmatpush.msra.mxu0 0.0
    %4435 = vmatpush.msra.mxu0 0.0
    %4436 = vmatpush.msra.mxu0 0.0
    %4437 = vmatpush.msra.mxu0 0.0
    %4438 = vmatpush.msra.mxu0 0.0
    %4439 = vmatpush.msra.mxu0 0.0
    %4440 = vmatpush.msra.mxu0 0.0
    %4441 = vmatpush.msra.mxu0 0.0
    %4442 = vmatpush.msra.mxu0 0.0
    %4443 = vmatpush.msra.mxu0 %v4385
    %4444 = vmatpush.msra.mxu0 %v4377
    %4445 = vmatpush.msra.mxu0 %v4369
    %4446 = vmatpush.msra.mxu0 %v4361
    %4447 = vmatmul.f32.gmra.mxu0 %v2804
    %v4448 = vpop.f32.mrf.mxu0
    %v4449 = vadd.f32 0.0, %v4448
    %4450 = vdwg.mxu0
    %4451 = vmatpush.msra.mxu0 0.0
    %4452 = vmatpush.msra.mxu0 0.0
    %4453 = vmatpush.msra.mxu0 0.0
    %4454 = vmatpush.msra.mxu0 0.0
    %4455 = vmatpush.msra.mxu0 0.0
    %4456 = vmatpush.msra.mxu0 0.0
    %4457 = vmatpush.msra.mxu0 0.0
    %4458 = vmatpush.msra.mxu0 0.0
    %4459 = vmatpush.msra.mxu0 0.0
    %4460 = vmatpush.msra.mxu0 0.0
    %4461 = vmatpush.msra.mxu0 0.0
    %4462 = vmatpush.msra.mxu0 0.0
    %4463 = vmatpush.msra.mxu0 %v4386
    %4464 = vmatpush.msra.mxu0 %v4378
    %4465 = vmatpush.msra.mxu0 %v4370
    %4466 = vmatpush.msra.mxu0 %v4362
    %4467 = vmatmul.f32.gmra.mxu0 %v2804
    %v4468 = vpop.f32.mrf.mxu0
    %v4469 = vadd.f32 0.0, %v4468
    %4470 = vdwg.mxu0
    %4471 = vmatpush.msra.mxu0 0.0
    %4472 = vmatpush.msra.mxu0 0.0
    %4473 = vmatpush.msra.mxu0 0.0
    %4474 = vmatpush.msra.mxu0 0.0
    %4475 = vmatpush.msra.mxu0 0.0
    %4476 = vmatpush.msra.mxu0 0.0
    %4477 = vmatpush.msra.mxu0 0.0
    %4478 = vmatpush.msra.mxu0 0.0
    %4479 = vmatpush.msra.mxu0 0.0
    %4480 = vmatpush.msra.mxu0 0.0
    %4481 = vmatpush.msra.mxu0 0.0
    %4482 = vmatpush.msra.mxu0 0.0
    %4483 = vmatpush.msra.mxu0 %v4387
    %4484 = vmatpush.msra.mxu0 %v4379
    %4485 = vmatpush.msra.mxu0 %v4371
    %4486 = vmatpush.msra.mxu0 %v4363
    %4487 = vmatmul.f32.gmra.mxu0 %v2804
    %v4488 = vpop.f32.mrf.mxu0
    %v4489 = vadd.f32 0.0, %v4488
    %4490 = vdwg.mxu0
    %4491 = vmatpush.msra.mxu0 0.0
    %4492 = vmatpush.msra.mxu0 0.0
    %4493 = vmatpush.msra.mxu0 0.0
    %4494 = vmatpush.msra.mxu0 0.0
    %4495 = vmatpush.msra.mxu0 0.0
    %4496 = vmatpush.msra.mxu0 0.0
    %4497 = vmatpush.msra.mxu0 0.0
    %4498 = vmatpush.msra.mxu0 0.0
    %4499 = vmatpush.msra.mxu0 0.0
    %4500 = vmatpush.msra.mxu0 0.0
    %4501 = vmatpush.msra.mxu0 0.0
    %4502 = vmatpush.msra.mxu0 0.0
    %4503 = vmatpush.msra.mxu0 %v4388
    %4504 = vmatpush.msra.mxu0 %v4380
    %4505 = vmatpush.msra.mxu0 %v4372
    %4506 = vmatpush.msra.mxu0 %v4364
    %4507 = vmatmul.f32.gmra.mxu0 %v2804
    %v4508 = vpop.f32.mrf.mxu0
    %v4509 = vadd.f32 0.0, %v4508
    %4510 = vdwg.mxu0
    %4511 = vmatpush.msra.mxu0 0.0
    %4512 = vmatpush.msra.mxu0 0.0
    %4513 = vmatpush.msra.mxu0 0.0
    %4514 = vmatpush.msra.mxu0 0.0
    %4515 = vmatpush.msra.mxu0 0.0
    %4516 = vmatpush.msra.mxu0 0.0
    %4517 = vmatpush.msra.mxu0 0.0
    %4518 = vmatpush.msra.mxu0 0.0
    %4519 = vmatpush.msra.mxu0 0.0
    %4520 = vmatpush.msra.mxu0 0.0
    %4521 = vmatpush.msra.mxu0 0.0
    %4522 = vmatpush.msra.mxu0 0.0
    %4523 = vmatpush.msra.mxu0 %v4389
    %4524 = vmatpush.msra.mxu0 %v4381
    %4525 = vmatpush.msra.mxu0 %v4373
    %4526 = vmatpush.msra.mxu0 %v4365
    %4527 = vmatmul.f32.gmra.mxu0 %v2804
    %v4528 = vpop.f32.mrf.mxu0
    %v4529 = vadd.f32 0.0, %v4528
    %4530 = vdwg.mxu0
    %4531 = vmatpush.msra.mxu0 0.0
    %4532 = vmatpush.msra.mxu0 0.0
    %4533 = vmatpush.msra.mxu0 0.0
    %4534 = vmatpush.msra.mxu0 0.0
    %4535 = vmatpush.msra.mxu0 0.0
    %4536 = vmatpush.msra.mxu0 0.0
    %4537 = vmatpush.msra.mxu0 0.0
    %4538 = vmatpush.msra.mxu0 0.0
    %4539 = vmatpush.msra.mxu0 0.0
    %4540 = vmatpush.msra.mxu0 0.0
    %4541 = vmatpush.msra.mxu0 0.0
    %4542 = vmatpush.msra.mxu0 0.0
    %4543 = vmatpush.msra.mxu0 %v4390
    %4544 = vmatpush.msra.mxu0 %v4382
    %4545 = vmatpush.msra.mxu0 %v4374
    %4546 = vmatpush.msra.mxu0 %v4366
    %4547 = vmatmul.f32.gmra.mxu0 %v2804
    %v4548 = vpop.f32.mrf.mxu0
    %v4549 = vadd.f32 0.0, %v4548
    %4550 = vdwg.mxu0
    %v4551 = vadd.f32 %v4217, %v4409
    %v4552 = vadd.f32 %v4237, %v4429
    %v4553 = vadd.f32 %v4257, %v4449
    %v4554 = vadd.f32 %v4277, %v4469
    %v4555 = vadd.f32 %v4297, %v4489
    %v4556 = vadd.f32 %v4317, %v4509
    %v4557 = vadd.f32 %v4337, %v4529
    %v4558 = vadd.f32 %v4357, %v4549
    %v4559 = vld [vmem:[#allocation10 + $0x300] sm:$0xff]
    %v4560 = vld [vmem:[#allocation10 + $0x308] sm:$0xff]
    %v4561 = vld [vmem:[#allocation10 + $0x310] sm:$0xff]
    %v4562 = vld [vmem:[#allocation10 + $0x318] sm:$0xff]
    %v4563 = vld [vmem:[#allocation10 + $0x320] sm:$0xff]
    %v4564 = vld [vmem:[#allocation10 + $0x328] sm:$0xff]
    %v4565 = vld [vmem:[#allocation10 + $0x330] sm:$0xff]
    %v4566 = vld [vmem:[#allocation10 + $0x338] sm:$0xff]
    %v4567 = vld [vmem:[#allocation10 + $0x340] sm:$0xff]
    %v4568 = vld [vmem:[#allocation10 + $0x348] sm:$0xff]
    %v4569 = vld [vmem:[#allocation10 + $0x350] sm:$0xff]
    %v4570 = vld [vmem:[#allocation10 + $0x358] sm:$0xff]
    %v4571 = vld [vmem:[#allocation10 + $0x360] sm:$0xff]
    %v4572 = vld [vmem:[#allocation10 + $0x368] sm:$0xff]
    %v4573 = vld [vmem:[#allocation10 + $0x370] sm:$0xff]
    %v4574 = vld [vmem:[#allocation10 + $0x378] sm:$0xff]
    %v4575 = vld [vmem:[#allocation10 + $0x380] sm:$0xff]
    %v4576 = vld [vmem:[#allocation10 + $0x388] sm:$0xff]
    %v4577 = vld [vmem:[#allocation10 + $0x390] sm:$0xff]
    %v4578 = vld [vmem:[#allocation10 + $0x398] sm:$0xff]
    %v4579 = vld [vmem:[#allocation10 + $0x3a0] sm:$0xff]
    %v4580 = vld [vmem:[#allocation10 + $0x3a8] sm:$0xff]
    %v4581 = vld [vmem:[#allocation10 + $0x3b0] sm:$0xff]
    %v4582 = vld [vmem:[#allocation10 + $0x3b8] sm:$0xff]
    %v4583 = vld [vmem:[#allocation10 + $0x3c0] sm:$0xff]
    %v4584 = vld [vmem:[#allocation10 + $0x3c8] sm:$0xff]
    %v4585 = vld [vmem:[#allocation10 + $0x3d0] sm:$0xff]
    %v4586 = vld [vmem:[#allocation10 + $0x3d8] sm:$0xff]
    %v4587 = vld [vmem:[#allocation10 + $0x3e0] sm:$0xff]
    %v4588 = vld [vmem:[#allocation10 + $0x3e8] sm:$0xff]
    %v4589 = vld [vmem:[#allocation10 + $0x3f0] sm:$0xff]
    %v4590 = vld [vmem:[#allocation10 + $0x3f8] sm:$0xff]
    %v4591 = vrot.slane %v117, 3
    %v4592 = vsel %vm168, %v4591, 0
    %4594 = vmatpush.msra.mxu0 0.0
    %4595 = vmatpush.msra.mxu0 0.0
    %4596 = vmatpush.msra.mxu0 0.0
    %4597 = vmatpush.msra.mxu0 0.0
    %4598 = vmatpush.msra.mxu0 0.0
    %4599 = vmatpush.msra.mxu0 0.0
    %4600 = vmatpush.msra.mxu0 0.0
    %4601 = vmatpush.msra.mxu0 0.0
    %4602 = vmatpush.msra.mxu0 0.0
    %4603 = vmatpush.msra.mxu0 0.0
    %4604 = vmatpush.msra.mxu0 0.0
    %4605 = vmatpush.msra.mxu0 0.0
    %4606 = vmatpush.msra.mxu0 %v4583
    %4607 = vmatpush.msra.mxu0 %v4575
    %4608 = vmatpush.msra.mxu0 %v4567
    %4609 = vmatpush.msra.mxu0 %v4559
    %4610 = vmatmul.f32.gmra.mxu0 %v4592
    %v4611 = vpop.f32.mrf.mxu0
    %v4612 = vadd.f32 0.0, %v4611
    %4613 = vdwg.mxu0
    %4614 = vmatpush.msra.mxu0 0.0
    %4615 = vmatpush.msra.mxu0 0.0
    %4616 = vmatpush.msra.mxu0 0.0
    %4617 = vmatpush.msra.mxu0 0.0
    %4618 = vmatpush.msra.mxu0 0.0
    %4619 = vmatpush.msra.mxu0 0.0
    %4620 = vmatpush.msra.mxu0 0.0
    %4621 = vmatpush.msra.mxu0 0.0
    %4622 = vmatpush.msra.mxu0 0.0
    %4623 = vmatpush.msra.mxu0 0.0
    %4624 = vmatpush.msra.mxu0 0.0
    %4625 = vmatpush.msra.mxu0 0.0
    %4626 = vmatpush.msra.mxu0 %v4584
    %4627 = vmatpush.msra.mxu0 %v4576
    %4628 = vmatpush.msra.mxu0 %v4568
    %4629 = vmatpush.msra.mxu0 %v4560
    %4630 = vmatmul.f32.gmra.mxu0 %v4592
    %v4631 = vpop.f32.mrf.mxu0
    %v4632 = vadd.f32 0.0, %v4631
    %4633 = vdwg.mxu0
    %4634 = vmatpush.msra.mxu0 0.0
    %4635 = vmatpush.msra.mxu0 0.0
    %4636 = vmatpush.msra.mxu0 0.0
    %4637 = vmatpush.msra.mxu0 0.0
    %4638 = vmatpush.msra.mxu0 0.0
    %4639 = vmatpush.msra.mxu0 0.0
    %4640 = vmatpush.msra.mxu0 0.0
    %4641 = vmatpush.msra.mxu0 0.0
    %4642 = vmatpush.msra.mxu0 0.0
    %4643 = vmatpush.msra.mxu0 0.0
    %4644 = vmatpush.msra.mxu0 0.0
    %4645 = vmatpush.msra.mxu0 0.0
    %4646 = vmatpush.msra.mxu0 %v4585
    %4647 = vmatpush.msra.mxu0 %v4577
    %4648 = vmatpush.msra.mxu0 %v4569
    %4649 = vmatpush.msra.mxu0 %v4561
    %4650 = vmatmul.f32.gmra.mxu0 %v4592
    %v4651 = vpop.f32.mrf.mxu0
    %v4652 = vadd.f32 0.0, %v4651
    %4653 = vdwg.mxu0
    %4654 = vmatpush.msra.mxu0 0.0
    %4655 = vmatpush.msra.mxu0 0.0
    %4656 = vmatpush.msra.mxu0 0.0
    %4657 = vmatpush.msra.mxu0 0.0
    %4658 = vmatpush.msra.mxu0 0.0
    %4659 = vmatpush.msra.mxu0 0.0
    %4660 = vmatpush.msra.mxu0 0.0
    %4661 = vmatpush.msra.mxu0 0.0
    %4662 = vmatpush.msra.mxu0 0.0
    %4663 = vmatpush.msra.mxu0 0.0
    %4664 = vmatpush.msra.mxu0 0.0
    %4665 = vmatpush.msra.mxu0 0.0
    %4666 = vmatpush.msra.mxu0 %v4586
    %4667 = vmatpush.msra.mxu0 %v4578
    %4668 = vmatpush.msra.mxu0 %v4570
    %4669 = vmatpush.msra.mxu0 %v4562
    %4670 = vmatmul.f32.gmra.mxu0 %v4592
    %v4671 = vpop.f32.mrf.mxu0
    %v4672 = vadd.f32 0.0, %v4671
    %4673 = vdwg.mxu0
    %4674 = vmatpush.msra.mxu0 0.0
    %4675 = vmatpush.msra.mxu0 0.0
    %4676 = vmatpush.msra.mxu0 0.0
    %4677 = vmatpush.msra.mxu0 0.0
    %4678 = vmatpush.msra.mxu0 0.0
    %4679 = vmatpush.msra.mxu0 0.0
    %4680 = vmatpush.msra.mxu0 0.0
    %4681 = vmatpush.msra.mxu0 0.0
    %4682 = vmatpush.msra.mxu0 0.0
    %4683 = vmatpush.msra.mxu0 0.0
    %4684 = vmatpush.msra.mxu0 0.0
    %4685 = vmatpush.msra.mxu0 0.0
    %4686 = vmatpush.msra.mxu0 %v4587
    %4687 = vmatpush.msra.mxu0 %v4579
    %4688 = vmatpush.msra.mxu0 %v4571
    %4689 = vmatpush.msra.mxu0 %v4563
    %4690 = vmatmul.f32.gmra.mxu0 %v4592
    %v4691 = vpop.f32.mrf.mxu0
    %v4692 = vadd.f32 0.0, %v4691
    %4693 = vdwg.mxu0
    %4694 = vmatpush.msra.mxu0 0.0
    %4695 = vmatpush.msra.mxu0 0.0
    %4696 = vmatpush.msra.mxu0 0.0
    %4697 = vmatpush.msra.mxu0 0.0
    %4698 = vmatpush.msra.mxu0 0.0
    %4699 = vmatpush.msra.mxu0 0.0
    %4700 = vmatpush.msra.mxu0 0.0
    %4701 = vmatpush.msra.mxu0 0.0
    %4702 = vmatpush.msra.mxu0 0.0
    %4703 = vmatpush.msra.mxu0 0.0
    %4704 = vmatpush.msra.mxu0 0.0
    %4705 = vmatpush.msra.mxu0 0.0
    %4706 = vmatpush.msra.mxu0 %v4588
    %4707 = vmatpush.msra.mxu0 %v4580
    %4708 = vmatpush.msra.mxu0 %v4572
    %4709 = vmatpush.msra.mxu0 %v4564
    %4710 = vmatmul.f32.gmra.mxu0 %v4592
    %v4711 = vpop.f32.mrf.mxu0
    %v4712 = vadd.f32 0.0, %v4711
    %4713 = vdwg.mxu0
    %4714 = vmatpush.msra.mxu0 0.0
    %4715 = vmatpush.msra.mxu0 0.0
    %4716 = vmatpush.msra.mxu0 0.0
    %4717 = vmatpush.msra.mxu0 0.0
    %4718 = vmatpush.msra.mxu0 0.0
    %4719 = vmatpush.msra.mxu0 0.0
    %4720 = vmatpush.msra.mxu0 0.0
    %4721 = vmatpush.msra.mxu0 0.0
    %4722 = vmatpush.msra.mxu0 0.0
    %4723 = vmatpush.msra.mxu0 0.0
    %4724 = vmatpush.msra.mxu0 0.0
    %4725 = vmatpush.msra.mxu0 0.0
    %4726 = vmatpush.msra.mxu0 %v4589
    %4727 = vmatpush.msra.mxu0 %v4581
    %4728 = vmatpush.msra.mxu0 %v4573
    %4729 = vmatpush.msra.mxu0 %v4565
    %4730 = vmatmul.f32.gmra.mxu0 %v4592
    %v4731 = vpop.f32.mrf.mxu0
    %v4732 = vadd.f32 0.0, %v4731
    %4733 = vdwg.mxu0
    %4734 = vmatpush.msra.mxu0 0.0
    %4735 = vmatpush.msra.mxu0 0.0
    %4736 = vmatpush.msra.mxu0 0.0
    %4737 = vmatpush.msra.mxu0 0.0
    %4738 = vmatpush.msra.mxu0 0.0
    %4739 = vmatpush.msra.mxu0 0.0
    %4740 = vmatpush.msra.mxu0 0.0
    %4741 = vmatpush.msra.mxu0 0.0
    %4742 = vmatpush.msra.mxu0 0.0
    %4743 = vmatpush.msra.mxu0 0.0
    %4744 = vmatpush.msra.mxu0 0.0
    %4745 = vmatpush.msra.mxu0 0.0
    %4746 = vmatpush.msra.mxu0 %v4590
    %4747 = vmatpush.msra.mxu0 %v4582
    %4748 = vmatpush.msra.mxu0 %v4574
    %4749 = vmatpush.msra.mxu0 %v4566
    %4750 = vmatmul.f32.gmra.mxu0 %v4592
    %v4751 = vpop.f32.mrf.mxu0
    %v4752 = vadd.f32 0.0, %v4751
    %4753 = vdwg.mxu0
    %v4754 = vadd.f32 %v4551, %v4612
    %v4755 = vadd.f32 %v4552, %v4632
    %v4756 = vadd.f32 %v4553, %v4652
    %v4757 = vadd.f32 %v4554, %v4672
    %v4758 = vadd.f32 %v4555, %v4692
    %v4759 = vadd.f32 %v4556, %v4712
    %v4760 = vadd.f32 %v4557, %v4732
    %v4761 = vadd.f32 %v4558, %v4752
    %v4762 = vadd.f32 %v4754, %v3861
    %v4763 = vadd.f32 %v4755, %v3862
    %v4764 = vadd.f32 %v4756, %v3863
    %v4765 = vadd.f32 %v4757, %v3864
    %v4766 = vadd.f32 %v4758, %v3865
    %v4767 = vadd.f32 %v4759, %v3866
    %v4768 = vadd.f32 %v4760, %v3867
    %v4769 = vadd.f32 %v4761, %v3868
    %v4770 = vtanh.pop %v4762
    %v4771 = vtanh.pop %v4763
    %v4772 = vtanh.pop %v4764
    %v4773 = vtanh.pop %v4765
    %v4774 = vtanh.pop %v4766
    %v4775 = vtanh.pop %v4767
    %v4776 = vtanh.pop %v4768
    %v4777 = vtanh.pop %v4769
    %v4778 = vsel %vm3893, %v4770, -inf
    %v4779 = vrot.slane %v4778, 4
    %v4780 = vmax.f32 %v4778, %v4779
    %v4781 = vrot.slane %v4780, 2
    %v4782 = vmax.f32 %v4780, %v4781
    %v4783 = vrot.slane %v4782, 1
    %v4784 = vmax.f32 %v4782, %v4783
    %v4785 = vsel %vm3893, %v4771, -inf
    %v4786 = vrot.slane %v4785, 4
    %v4787 = vmax.f32 %v4785, %v4786
    %v4788 = vrot.slane %v4787, 2
    %v4789 = vmax.f32 %v4787, %v4788
    %v4790 = vrot.slane %v4789, 1
    %v4791 = vmax.f32 %v4789, %v4790
    %v4792 = vsel %vm3893, %v4772, -inf
    %v4793 = vrot.slane %v4792, 4
    %v4794 = vmax.f32 %v4792, %v4793
    %v4795 = vrot.slane %v4794, 2
    %v4796 = vmax.f32 %v4794, %v4795
    %v4797 = vrot.slane %v4796, 1
    %v4798 = vmax.f32 %v4796, %v4797
    %v4799 = vsel %vm3893, %v4773, -inf
    %v4800 = vrot.slane %v4799, 4
    %v4801 = vmax.f32 %v4799, %v4800
    %v4802 = vrot.slane %v4801, 2
    %v4803 = vmax.f32 %v4801, %v4802
    %v4804 = vrot.slane %v4803, 1
    %v4805 = vmax.f32 %v4803, %v4804
    %v4806 = vsel %vm3893, %v4774, -inf
    %v4807 = vrot.slane %v4806, 4
    %v4808 = vmax.f32 %v4806, %v4807
    %v4809 = vrot.slane %v4808, 2
    %v4810 = vmax.f32 %v4808, %v4809
    %v4811 = vrot.slane %v4810, 1
    %v4812 = vmax.f32 %v4810, %v4811
    %v4813 = vsel %vm3893, %v4775, -inf
    %v4814 = vrot.slane %v4813, 4
    %v4815 = vmax.f32 %v4813, %v4814
    %v4816 = vrot.slane %v4815, 2
    %v4817 = vmax.f32 %v4815, %v4816
    %v4818 = vrot.slane %v4817, 1
    %v4819 = vmax.f32 %v4817, %v4818
    %v4820 = vsel %vm3893, %v4776, -inf
    %v4821 = vrot.slane %v4820, 4
    %v4822 = vmax.f32 %v4820, %v4821
    %v4823 = vrot.slane %v4822, 2
    %v4824 = vmax.f32 %v4822, %v4823
    %v4825 = vrot.slane %v4824, 1
    %v4826 = vmax.f32 %v4824, %v4825
    %v4827 = vsel %vm3893, %v4777, -inf
    %v4828 = vrot.slane %v4827, 4
    %v4829 = vmax.f32 %v4827, %v4828
    %v4830 = vrot.slane %v4829, 2
    %v4831 = vmax.f32 %v4829, %v4830
    %v4832 = vrot.slane %v4831, 1
    %v4833 = vmax.f32 %v4831, %v4832
    %v4842 = vrot.slane %v4791, 7
    %v4843 = vrot.slane %v4798, 6
    %v4844 = vrot.slane %v4805, 5
    %v4845 = vrot.slane %v4812, 4
    %v4846 = vrot.slane %v4819, 3
    %v4847 = vrot.slane %v4826, 2
    %v4848 = vrot.slane %v4833, 1
    %v4849 = vsel %vm403, %v4784, %v4842
    %v4850 = vsel %vm405, %v4843, %v4844
    %v4851 = vsel %vm407, %v4849, %v4850
    %v4852 = vsel %vm409, %v4845, %v4846
    %v4853 = vsel %vm411, %v4847, %v4848
    %v4854 = vsel %vm413, %v4852, %v4853
    %v4855 = vsel %vm415, %v4851, %v4854
    %s4857 = scalar_lea.vmem %s693, 3 [#allocation13]
    %4858 = vst [vmem:[%s4857] ss:$4 sm:$0xff] %v4855
    // Predicated region
    $region50: #{tpu_custom_call.1} parent=1 // pred_check
      _
    $region51: #{tpu_custom_call.1} parent=1 // pred_check_branch
      %4860 = sbr.rel (0) target = $region53
    $region52: #{tpu_custom_call.1} parent=1 // pred_region
      %4862 = vsyncadd [#allocation4], 0
      %s4863 = sshll.u32 [#allocation13], 4
      %s4864 = int_to_ptr.vmem [resolvable:$true] %s4863
      %s4865 = sshll.u32 %s6, 4
      %s4866 = int_to_ptr.hbm [resolvable:$true] %s4865
      %4871 = dma.vmem_to_hbm [thread:$0]  %s4864, 1024, %s4866, [#allocation4], 512, 512, 32
    $region53: #{tpu_custom_call.1} parent=1 // pred_fallthru
      _
    // Predicated region
    $region54: #{tpu_custom_call.1} parent=1 // pred_check
      _
    $region55: #{tpu_custom_call.1} parent=1 // pred_check_branch
      %4873 = sbr.rel (0) target = $region57
    $region56: #{tpu_custom_call.1} parent=1 // pred_region
      %4875 = dma.done [#allocation4], 1024
    $region57: #{tpu_custom_call.1} parent=1 // pred_fallthru
      _
    %4876 = vsyncpa [#allocation3], 1
    %4877 = vsyncpa [#allocation6], 1
    %4878 = vsyncpa [#allocation9], 1
    %4879 = vsyncpa [#allocation12], 1
    %4880 = vsyncpa [#allocation4], 1

</llo_original>
